<compile_context>
chip_gen: v6e
topology: v6e:2x2x1
jax: 0.10.0
libtpu: 0.0.40
codegen_flags: <defaults>
</compile_context>

<pallas_src>
import functools

import jax
import jax.numpy as jnp
from jax import lax
from jax.experimental import pallas as pl
from jax.experimental.pallas import tpu as pltpu


_LANE = 128


def _resnet_euler_kernel(x_ref, kopen_ref, bopen_ref, K_ref, b_ref,
                         kclose_ref, bclose_ref, o_ref, *,
                         num_square_layers, negate_residual):
    # x_ref: (d_in, TN)    kopen_ref: (d_layer, d_in)   bopen_ref: (d_layer, 1)
    # K_ref: (L, d_layer, d_layer)   b_ref: (L, d_layer, 1)
    # kclose_ref: (d_out, d_layer)   bclose_ref: (d_out, 1)
    # o_ref: (d_out, TN)
    x = x_ref[...]
    if x.dtype != kopen_ref.dtype:        # static check; no-op when X pre-cast
        x = x.astype(kopen_ref.dtype)

    # Opening layer: y = relu(K_open @ X + b_open), f32 accumulation.
    y = jnp.dot(kopen_ref[...], x, preferred_element_type=jnp.float32)
    y = jnp.maximum(y + bopen_ref[...], 0.0)

    def residual_layer(j, y):
        # |dt| is pre-folded into K_ref/b_ref (relu positive-homogeneity):
        #   y + dt*relu(K z + b) == y +/- relu(|dt| K z + |dt| b)
        z = jnp.dot(K_ref[j], y.astype(K_ref.dtype),
                    preferred_element_type=jnp.float32)
        r = jnp.maximum(z + b_ref[j], 0.0)
        return y - r if negate_residual else y + r

    if num_square_layers <= 32:
        # Typical L: fully unroll so the LLO scheduler sees everything.
        for j in range(num_square_layers):
            y = residual_layer(j, y)
    else:
        y = lax.fori_loop(0, num_square_layers, residual_layer, y, unroll=2)

    # Closing layer: y_out = K_close @ y + b_close
    out = jnp.dot(kclose_ref[...], y.astype(kclose_ref.dtype),
                  preferred_element_type=jnp.float32)
    o_ref[...] = (out + bclose_ref[...]).astype(o_ref.dtype)


def prepare_resnet_euler_params(K_open, b_open, K, b, K_close, b_close, dt,
                                *, use_bf16=True):
    """One-time parameter prep (call at parameter-load time, NOT per forward).

    - Transposes the square-layer stack to (L, d_layer, d_layer) so the layer
      index is the leading (sliced) axis.
    - Folds |dt| into the square-layer weights/biases (relu positive
      homogeneity); the sign of dt becomes a static add/subtract flag.
    - Casts matmul weights to bf16 (MXU-native) while keeping biases f32.

    dt must be a static Python number (it is coerced with float()).
    """
    dt = float(dt)
    K_t = jnp.transpose(K, (2, 0, 1)).astype(jnp.float32)    # (L, dl, dl)
    b_t = jnp.transpose(b, (2, 0, 1)).astype(jnp.float32)    # (L, dl, 1)
    a = abs(dt)
    K_t = K_t * a
    b_t = b_t * a

    w_dtype = jnp.bfloat16 if use_bf16 else jnp.float32
    return dict(
        K_open=jnp.asarray(K_open, w_dtype),
        b_open=jnp.asarray(b_open, jnp.float32),
        K=K_t.astype(w_dtype),
        b=b_t,
        K_close=jnp.asarray(K_close, w_dtype),
        b_close=jnp.asarray(b_close, jnp.float32),
        negate_residual=(dt < 0.0),
    )


def _num_tensorcores():
    """Best-effort TensorCore-per-chip count (megacore detection)."""
    try:
        dev = jax.devices()[0]
        n = getattr(dev, "num_cores", None)
        if isinstance(n, int) and n > 0:
            return n
        kind = str(getattr(dev, "device_kind", "")).lower()
        if "v7" in kind or "v4" in kind:
            return 2
    except Exception:
        pass
    return 1


def _round_up(x, m):
    return ((x + m - 1) // m) * m


def _choose_tile(N, *, d_in, d_layer, d_out, x_bytes, out_bytes,
                 target=4096, num_tensorcores=1, vmem_budget=8 << 20):
    """Pick the lane tile size TN (multiple of 128).

    Single-TC parts (v5e/v6e): one tile as large as possible (<= target) — no
    artificial splitting, every extra grid step is pure ~0.35 us overhead.
    Megacore parts (v7x/v4): an even number of balanced grid steps so the
    "parallel" axis shards evenly across both TensorCores.
    The target is additionally capped so the resident VMEM footprint
    (double-buffered X/out tiles + ~4 f32 activation temporaries) stays small.
    """
    bytes_per_col = (2 * d_in * x_bytes + 2 * d_out * out_bytes
                     + 4 * d_layer * 4)
    cap = max(_LANE, (vmem_budget // max(1, bytes_per_col)) // _LANE * _LANE)
    target = max(_LANE, min(target, cap))

    if num_tensorcores <= 1 or N <= _LANE:
        return min(target, _round_up(N, _LANE))

    steps = max(2, pl.cdiv(N, target))
    steps = _round_up(steps, 2)                       # even -> balanced cores
    return max(_LANE, min(target, _round_up(pl.cdiv(N, steps), _LANE)))


def resnet_euler_forward(X, params, *, tn=None, cast_x_to_weight_dtype=True):
    """X: (d_in, N). params: output of prepare_resnet_euler_params.
    Returns (d_out, N) in X's original dtype."""
    d_in, N = X.shape
    K_open = params["K_open"]
    b_open = params["b_open"]
    K = params["K"]
    b = params["b"]
    K_close = params["K_close"]
    b_close = params["b_close"]
    d_layer = K_open.shape[0]
    d_out = K_close.shape[0]
    num_square_layers = K.shape[0]

    out_dtype = X.dtype
    w_dtype = K_open.dtype
    # Halve X HBM traffic on the bf16 path. Best when the caller already keeps
    # X in bf16 (or the convert fuses into X's producer).
    if (cast_x_to_weight_dtype and w_dtype == jnp.bfloat16
            and X.dtype != w_dtype):
        X = X.astype(w_dtype)

    x_bytes = X.dtype.itemsize
    out_bytes = jnp.dtype(out_dtype).itemsize

    if tn is None:
        tn = _choose_tile(N, d_in=d_in, d_layer=d_layer, d_out=d_out,
                          x_bytes=x_bytes, out_bytes=out_bytes,
                          num_tensorcores=_num_tensorcores())

    # Ragged N: no jnp.pad copy — Pallas masks the partial last block. Columns
    # are fully independent, so garbage lanes never reach stored lanes.
    grid = (pl.cdiv(N, tn),)

    kernel = functools.partial(
        _resnet_euler_kernel,
        num_square_layers=num_square_layers,
        negate_residual=params["negate_residual"])

    def _full(a):
        nd = a.ndim
        return pl.BlockSpec(a.shape, lambda *args, _nd=nd: (0,) * _nd)

    weight_bytes = sum(int(a.size) * a.dtype.itemsize
                       for a in (K_open, b_open, K, b, K_close, b_close))
    # Double-buffered I/O tiles + ~4 f32 activation temporaries + weights
    # (weights are double-buffered too but are only a few KiB, so the default
    # buffering is kept rather than risking exotic pipeline modes).
    tile_bytes = (2 * d_in * tn * x_bytes + 2 * d_out * tn * out_bytes
                  + 4 * d_layer * tn * 4 + 2 * weight_bytes)
    vmem_limit = int(min(48 << 20, max(32 << 20, 2 * tile_bytes)))

    flops = 2 * N * (d_layer * d_in
                     + num_square_layers * d_layer * d_layer
                     + d_out * d_layer)
    bytes_accessed = d_in * N * x_bytes + d_out * N * out_bytes + weight_bytes
    cost = pl.CostEstimate(flops=int(flops), transcendentals=0,
                           bytes_accessed=int(bytes_accessed))

    return pl.pallas_call(
        kernel,
        out_shape=jax.ShapeDtypeStruct((d_out, N), out_dtype),
        grid_spec=pltpu.PrefetchScalarGridSpec(
            num_scalar_prefetch=0,
            grid=grid,
            in_specs=[
                pl.BlockSpec((d_in, tn), lambda i: (0, i)),   # X tile
                _full(K_open),                                # K_open
                _full(b_open),                                # b_open
                _full(K),                                     # K stack (L,dl,dl)
                _full(b),                                     # b stack (L,dl,1)
                _full(K_close),                               # K_close
                _full(b_close),                               # b_close
            ],
            out_specs=pl.BlockSpec((d_out, tn), lambda i: (0, i)),
        ),
        compiler_params=pltpu.CompilerParams(
            dimension_semantics=("parallel",),
            vmem_limit_bytes=vmem_limit),
        cost_estimate=cost,
    )(X, K_open, b_open, K, b, K_close, b_close)


def resnet_euler_reference(X, K_open, b_open, K, b, K_close, b_close, dt):
    """Pure-JAX reference matching the PyTorch forward exactly (f32)."""
    y = jax.nn.relu(K_open @ X + b_open)
    for j in range(K.shape[2]):
        y = y + dt * jax.nn.relu(K[:, :, j] @ y + b[:, :, j])
    return K_close @ y + b_close


# TODO(synk): regularization() and set_params() are host-side/training
# utilities, not part of the forward pass; they are intentionally not lowered
# to Pallas.


if __name__ == "__main__":
    # Small, module-consistent shapes.
    d_in = 8
    d_layer = 32
    d_out = 4
    num_square_layers = 3
    dt = 0.1
    sigma = 1e-3
    N = 2048

    key = jax.random.PRNGKey(0)
    k_ko, k_K, k_b, k_kc, k_x = jax.random.split(key, 5)

    # Deterministic parameter init mirroring the PyTorch __init__ shapes.
    K_open = jax.random.normal(k_ko, (d_layer, d_in), jnp.float32) * sigma
    b_open = jnp.ones((d_layer, 1), jnp.float32) * sigma
    K = jax.random.normal(k_K, (d_layer, d_layer, num_square_layers),
                          jnp.float32) * sigma
    b = jax.random.normal(k_b, (d_layer, 1, num_square_layers),
                          jnp.float32) * sigma
    K_close = jax.random.normal(k_kc, (d_out, d_layer), jnp.float32) * sigma
    b_close = jnp.ones((d_out, 1), jnp.float32) * sigma

    X = jax.random.normal(k_x, (d_in, N), jnp.float32)
    y_ref = resnet_euler_reference(X, K_open, b_open, K, b, K_close, b_close,
                                   dt)

    # ---- f32 MXU path: strict structural check ---------------------------
    params_f32 = prepare_resnet_euler_params(
        K_open, b_open, K, b, K_close, b_close, dt, use_bf16=False)
    y_f32 = jax.block_until_ready(resnet_euler_forward(X, params_f32))
    assert y_f32.shape == (d_out, N)
    assert y_f32.dtype == X.dtype
    assert jnp.allclose(y_f32, y_ref, atol=1e-5, rtol=1e-5)

    # ---- bf16 MXU path (production default): relaxed tolerance -----------
    params_bf16 = prepare_resnet_euler_params(
        K_open, b_open, K, b, K_close, b_close, dt, use_bf16=True)
    y_bf16 = jax.block_until_ready(resnet_euler_forward(X, params_bf16))
    assert y_bf16.shape == (d_out, N)
    scale = jnp.max(jnp.abs(y_ref))
    assert jnp.max(jnp.abs(y_bf16 - y_ref)) <= 2e-2 * scale + 1e-7

    # ---- ragged N (partial last block, no padding copies) ----------------
    Nr = 300
    Xr = X[:, :Nr]
    y_r = jax.block_until_ready(resnet_euler_forward(Xr, params_f32))
    assert y_r.shape == (d_out, Nr)
    assert jnp.allclose(y_r, y_ref[:, :Nr], atol=1e-5, rtol=1e-5)

    # ---- negative dt path (|dt| folded, residual subtracted in-kernel) ---
    dt_neg = -0.05
    y_ref_neg = resnet_euler_reference(X, K_open, b_open, K, b, K_close,
                                       b_close, dt_neg)
    params_neg = prepare_resnet_euler_params(
        K_open, b_open, K, b, K_close, b_close, dt_neg, use_bf16=False)
    y_neg = jax.block_until_ready(resnet_euler_forward(X, params_neg))
    assert jnp.allclose(y_neg, y_ref_neg, atol=1e-5, rtol=1e-5)

    print("KERNEL_OK")
</pallas_src>

<mosaic_0001>
module attributes {stable_mosaic.version = 11 : i64} {
  func.func @_resnet_euler_kernel(%arg0: i32, %arg1: memref<8x2048xf32, #tpu.memory_space<vmem>>, %arg2: memref<32x8xf32, #tpu.memory_space<vmem>>, %arg3: memref<32x1xf32, #tpu.memory_space<vmem>>, %arg4: memref<3x32x32xf32, #tpu.memory_space<vmem>>, %arg5: memref<3x32x1xf32, #tpu.memory_space<vmem>>, %arg6: memref<4x32xf32, #tpu.memory_space<vmem>>, %arg7: memref<4x1xf32, #tpu.memory_space<vmem>>, %arg8: memref<4x2048xf32, #tpu.memory_space<vmem>>) attributes {dimension_semantics = [#tpu.dimension_semantics<parallel>], iteration_bounds = array<i64: 1>, scalar_prefetch = 0 : i64, scratch_operands = 0 : i64, tpu.core_type = #tpu.core_type<tc>, window_params = [{transform_indices = @transform_0, window_bounds = array<i64: 8, 2048>}, {pipeline_mode = #tpu.pipeline_mode<synchronous>, transform_indices = @transform_1, window_bounds = array<i64: 32, 8>}, {pipeline_mode = #tpu.pipeline_mode<synchronous>, transform_indices = @transform_2, window_bounds = array<i64: 32, 1>}, {pipeline_mode = #tpu.pipeline_mode<synchronous>, transform_indices = @transform_3, window_bounds = array<i64: 3, 32, 32>}, {pipeline_mode = #tpu.pipeline_mode<synchronous>, transform_indices = @transform_4, window_bounds = array<i64: 3, 32, 1>}, {pipeline_mode = #tpu.pipeline_mode<synchronous>, transform_indices = @transform_5, window_bounds = array<i64: 4, 32>}, {pipeline_mode = #tpu.pipeline_mode<synchronous>, transform_indices = @transform_6, window_bounds = array<i64: 4, 1>}, {transform_indices = @transform_7, window_bounds = array<i64: 4, 2048>}]} {
    %c0 = arith.constant 0 : index
    %c0_0 = arith.constant 0 : index
    %0 = vector.load %arg1[%c0, %c0_0] : memref<8x2048xf32, #tpu.memory_space<vmem>>, vector<8x2048xf32>
    %c0_1 = arith.constant 0 : index
    %c0_2 = arith.constant 0 : index
    %1 = vector.load %arg2[%c0_1, %c0_2] : memref<32x8xf32, #tpu.memory_space<vmem>>, vector<32x8xf32>
    %cst = arith.constant dense<0.000000e+00> : vector<32x2048xf32>
    %2 = tpu.matmul %1, %0, %cst {dimension_numbers = #tpu.dot_dimension_numbers<[1], [0], [0], [1], [0, 0, 1, 1], [], []>} : vector<32x8xf32>, vector<8x2048xf32>, vector<32x2048xf32> -> vector<32x2048xf32>
    %c0_3 = arith.constant 0 : index
    %c0_4 = arith.constant 0 : index
    %3 = vector.load %arg3[%c0_3, %c0_4] : memref<32x1xf32, #tpu.memory_space<vmem>>, vector<32x1xf32>
    %4 = vector.broadcast %3 : vector<32x1xf32> to vector<32x2048xf32>
    %5 = arith.addf %2, %4 : vector<32x2048xf32>
    %cst_5 = arith.constant 0.000000e+00 : f32
    %6 = vector.broadcast %cst_5 : f32 to vector<32x2048xf32>
    %7 = arith.maximumf %5, %6 : vector<32x2048xf32>
    %c0_6 = arith.constant 0 : index
    %c0_7 = arith.constant 0 : index
    %c0_8 = arith.constant 0 : index
    %8 = vector.load %arg4[%c0_6, %c0_7, %c0_8] : memref<3x32x32xf32, #tpu.memory_space<vmem>>, vector<1x32x32xf32>
    %9 = vector.shape_cast %8 : vector<1x32x32xf32> to vector<32x32xf32>
    %cst_9 = arith.constant dense<0.000000e+00> : vector<32x2048xf32>
    %10 = tpu.matmul %9, %7, %cst_9 {dimension_numbers = #tpu.dot_dimension_numbers<[1], [0], [0], [1], [0, 0, 1, 1], [], []>} : vector<32x32xf32>, vector<32x2048xf32>, vector<32x2048xf32> -> vector<32x2048xf32>
    %c0_10 = arith.constant 0 : index
    %c0_11 = arith.constant 0 : index
    %c0_12 = arith.constant 0 : index
    %11 = vector.load %arg5[%c0_10, %c0_11, %c0_12] : memref<3x32x1xf32, #tpu.memory_space<vmem>>, vector<1x32x1xf32>
    %12 = vector.shape_cast %11 : vector<1x32x1xf32> to vector<32x1xf32>
    %13 = vector.broadcast %12 : vector<32x1xf32> to vector<32x2048xf32>
    %14 = arith.addf %10, %13 : vector<32x2048xf32>
    %cst_13 = arith.constant 0.000000e+00 : f32
    %15 = vector.broadcast %cst_13 : f32 to vector<32x2048xf32>
    %16 = arith.maximumf %14, %15 : vector<32x2048xf32>
    %17 = arith.addf %7, %16 : vector<32x2048xf32>
    %c1 = arith.constant 1 : index
    %c0_14 = arith.constant 0 : index
    %c0_15 = arith.constant 0 : index
    %18 = vector.load %arg4[%c1, %c0_14, %c0_15] : memref<3x32x32xf32, #tpu.memory_space<vmem>>, vector<1x32x32xf32>
    %19 = vector.shape_cast %18 : vector<1x32x32xf32> to vector<32x32xf32>
    %cst_16 = arith.constant dense<0.000000e+00> : vector<32x2048xf32>
    %20 = tpu.matmul %19, %17, %cst_16 {dimension_numbers = #tpu.dot_dimension_numbers<[1], [0], [0], [1], [0, 0, 1, 1], [], []>} : vector<32x32xf32>, vector<32x2048xf32>, vector<32x2048xf32> -> vector<32x2048xf32>
    %c1_17 = arith.constant 1 : index
    %c0_18 = arith.constant 0 : index
    %c0_19 = arith.constant 0 : index
    %21 = vector.load %arg5[%c1_17, %c0_18, %c0_19] : memref<3x32x1xf32, #tpu.memory_space<vmem>>, vector<1x32x1xf32>
    %22 = vector.shape_cast %21 : vector<1x32x1xf32> to vector<32x1xf32>
    %23 = vector.broadcast %22 : vector<32x1xf32> to vector<32x2048xf32>
    %24 = arith.addf %20, %23 : vector<32x2048xf32>
    %cst_20 = arith.constant 0.000000e+00 : f32
    %25 = vector.broadcast %cst_20 : f32 to vector<32x2048xf32>
    %26 = arith.maximumf %24, %25 : vector<32x2048xf32>
    %27 = arith.addf %17, %26 : vector<32x2048xf32>
    %c2 = arith.constant 2 : index
    %c0_21 = arith.constant 0 : index
    %c0_22 = arith.constant 0 : index
    %28 = vector.load %arg4[%c2, %c0_21, %c0_22] : memref<3x32x32xf32, #tpu.memory_space<vmem>>, vector<1x32x32xf32>
    %29 = vector.shape_cast %28 : vector<1x32x32xf32> to vector<32x32xf32>
    %cst_23 = arith.constant dense<0.000000e+00> : vector<32x2048xf32>
    %30 = tpu.matmul %29, %27, %cst_23 {dimension_numbers = #tpu.dot_dimension_numbers<[1], [0], [0], [1], [0, 0, 1, 1], [], []>} : vector<32x32xf32>, vector<32x2048xf32>, vector<32x2048xf32> -> vector<32x2048xf32>
    %c2_24 = arith.constant 2 : index
    %c0_25 = arith.constant 0 : index
    %c0_26 = arith.constant 0 : index
    %31 = vector.load %arg5[%c2_24, %c0_25, %c0_26] : memref<3x32x1xf32, #tpu.memory_space<vmem>>, vector<1x32x1xf32>
    %32 = vector.shape_cast %31 : vector<1x32x1xf32> to vector<32x1xf32>
    %33 = vector.broadcast %32 : vector<32x1xf32> to vector<32x2048xf32>
    %34 = arith.addf %30, %33 : vector<32x2048xf32>
    %cst_27 = arith.constant 0.000000e+00 : f32
    %35 = vector.broadcast %cst_27 : f32 to vector<32x2048xf32>
    %36 = arith.maximumf %34, %35 : vector<32x2048xf32>
    %37 = arith.addf %27, %36 : vector<32x2048xf32>
    %c0_28 = arith.constant 0 : index
    %c0_29 = arith.constant 0 : index
    %38 = vector.load %arg6[%c0_28, %c0_29] : memref<4x32xf32, #tpu.memory_space<vmem>>, vector<4x32xf32>
    %cst_30 = arith.constant dense<0.000000e+00> : vector<4x2048xf32>
    %39 = tpu.matmul %38, %37, %cst_30 {dimension_numbers = #tpu.dot_dimension_numbers<[1], [0], [0], [1], [0, 0, 1, 1], [], []>} : vector<4x32xf32>, vector<32x2048xf32>, vector<4x2048xf32> -> vector<4x2048xf32>
    %c0_31 = arith.constant 0 : index
    %c0_32 = arith.constant 0 : index
    %40 = vector.load %arg7[%c0_31, %c0_32] : memref<4x1xf32, #tpu.memory_space<vmem>>, vector<4x1xf32>
    %41 = vector.broadcast %40 : vector<4x1xf32> to vector<4x2048xf32>
    %42 = arith.addf %39, %41 : vector<4x2048xf32>
    %c0_33 = arith.constant 0 : index
    %c0_34 = arith.constant 0 : index
    %43 = vector.load %arg8[%c0_33, %c0_34] : memref<4x2048xf32, #tpu.memory_space<vmem>>, vector<4x2048xf32>
    tpu.vector_store %arg8[%c0_33, %c0_34], %42 {strides = array<i32>} : memref<4x2048xf32, #tpu.memory_space<vmem>>, vector<4x2048xf32>,
    return
  }
  func.func @transform_0(%arg0: i32) -> (i32, i32) {
    %c0_i32 = arith.constant 0 : i32
    %c0_i32_0 = arith.constant 0 : i32
    return %c0_i32, %arg0 : i32, i32
  }
  func.func @transform_1(%arg0: i32) -> (i32, i32) {
    %c0_i32 = arith.constant 0 : i32
    %c0_i32_0 = arith.constant 0 : i32
    %c0_i32_1 = arith.constant 0 : i32
    return %c0_i32, %c0_i32_0 : i32, i32
  }
  func.func @transform_2(%arg0: i32) -> (i32, i32) {
    %c0_i32 = arith.constant 0 : i32
    %c0_i32_0 = arith.constant 0 : i32
    %c0_i32_1 = arith.constant 0 : i32
    return %c0_i32, %c0_i32_0 : i32, i32
  }
  func.func @transform_3(%arg0: i32) -> (i32, i32, i32) {
    %c0_i32 = arith.constant 0 : i32
    %c0_i32_0 = arith.constant 0 : i32
    %c0_i32_1 = arith.constant 0 : i32
    %c0_i32_2 = arith.constant 0 : i32
    return %c0_i32, %c0_i32_0, %c0_i32_1 : i32, i32, i32
  }
  func.func @transform_4(%arg0: i32) -> (i32, i32, i32) {
    %c0_i32 = arith.constant 0 : i32
    %c0_i32_0 = arith.constant 0 : i32
    %c0_i32_1 = arith.constant 0 : i32
    %c0_i32_2 = arith.constant 0 : i32
    return %c0_i32, %c0_i32_0, %c0_i32_1 : i32, i32, i32
  }
  func.func @transform_5(%arg0: i32) -> (i32, i32) {
    %c0_i32 = arith.constant 0 : i32
    %c0_i32_0 = arith.constant 0 : i32
    %c0_i32_1 = arith.constant 0 : i32
    return %c0_i32, %c0_i32_0 : i32, i32
  }
  func.func @transform_6(%arg0: i32) -> (i32, i32) {
    %c0_i32 = arith.constant 0 : i32
    %c0_i32_0 = arith.constant 0 : i32
    %c0_i32_1 = arith.constant 0 : i32
    return %c0_i32, %c0_i32_0 : i32, i32
  }
  func.func @transform_7(%arg0: i32) -> (i32, i32) {
    %c0_i32 = arith.constant 0 : i32
    %c0_i32_0 = arith.constant 0 : i32
    return %c0_i32, %arg0 : i32, i32
  }
}

</mosaic_0001>

<llo_original>
// kernel: tpu_custom_call.1
$region0: #{tpu_custom_call.1}
  #allocation0 [shape = 'u32[]', space=smem, size = 0x4, offset = 0x4, fixed_abs, tag = 'smem constant byte address 0x4 - core index']
  #allocation1 [shape = 'u32[144,128]{1,0:T(1,128)}', space=vmem, size = 0x12000, scoped, tag = 'internal scratch']
  %s0 = inlined_call_operand.vmem [shape: f32[8,2048], index: 0, kind: input, shape index: {}]
  %s1 = inlined_call_operand.vmem [shape: f32[32,8], index: 1, kind: input, shape index: {}]
  %s2 = inlined_call_operand.vmem [shape: f32[32,1], index: 2, kind: input, shape index: {}]
  %s3 = inlined_call_operand.hbm [shape: f32[3,32,32], index: 3, kind: input, shape index: {}]
  %s4 = inlined_call_operand.vmem [shape: f32[3,32,1], index: 4, kind: input, shape index: {}]
  %s5 = inlined_call_operand.vmem [shape: f32[4,32], index: 5, kind: input, shape index: {}]
  %s6 = inlined_call_operand.vmem [shape: f32[4,1], index: 6, kind: input, shape index: {}]
  %s7 = inlined_call_operand.hbm [shape: f32[4,2048], index: 7, kind: output, shape index: {}]
  %s8 = sld [smem:[#allocation0]]
  $region42: #{tpu_custom_call.1} parent=0
    _
  %s10 = ssub.s32 1, %s8
  %s11 = scalar_select 0, %s10, %s8
  $region1: #{tpu_custom_call.1} parent=0
    #allocation2 [shape = 'u8[49152]{0}', space=vmem, size = 0xc000, scoped, tag = 'input window, operand 3, single buffered']
    #allocation3 [shape = 's32[1]{0}', space=sflag, size = 0x4, scoped, tag = 'scoped memory for tpu_custom_call.1']
    #allocation4 [shape = 's32[1]{0}', space=sflag, size = 0x4, scoped, tag = 'scoped memory for tpu_custom_call.1']
    #allocation5 [shape = 'u8[32768]{0}', space=vmem, size = 0x8000, scoped, tag = 'output window, operand 0, single buffered']
    %12 = vsyncpa [#allocation3], 0
    %13 = vsyncpa [#allocation4], 0
    // Predicated region
    $region2: #{tpu_custom_call.1} parent=1 // pred_check
      _
    $region3: #{tpu_custom_call.1} parent=1 // pred_check_branch
      %15 = sbr.rel (0) target = $region5
    $region4: #{tpu_custom_call.1} parent=1 // pred_region
      _
    $region5: #{tpu_custom_call.1} parent=1 // pred_fallthru
      _
    // Predicated region
    $region6: #{tpu_custom_call.1} parent=1 // pred_check
      _
    $region7: #{tpu_custom_call.1} parent=1 // pred_check_branch
      %17 = sbr.rel (0) target = $region9
    $region8: #{tpu_custom_call.1} parent=1 // pred_region
      _
    $region9: #{tpu_custom_call.1} parent=1 // pred_fallthru
      _
    // Predicated region
    $region10: #{tpu_custom_call.1} parent=1 // pred_check
      _
    $region11: #{tpu_custom_call.1} parent=1 // pred_check_branch
      %19 = sbr.rel (0) target = $region13
    $region12: #{tpu_custom_call.1} parent=1 // pred_region
      _
    $region13: #{tpu_custom_call.1} parent=1 // pred_fallthru
      _
    // Predicated region
    $region14: #{tpu_custom_call.1} parent=1 // pred_check
      _
    $region15: #{tpu_custom_call.1} parent=1 // pred_check_branch
      %21 = sbr.rel (0) target = $region17
    $region16: #{tpu_custom_call.1} parent=1 // pred_region
      %s23 = ssub.s32 1536, 1536
      %24 = vsyncadd [#allocation3], %s23
      %s25 = sshll.u32 [#allocation2], 4
      %s26 = int_to_ptr.vmem [resolvable:$true] %s25
      %31 = dma.hbm_to_vmem [thread:$0]  %s3, 1536, %s26, [#allocation3], 128, 128, 8
    $region17: #{tpu_custom_call.1} parent=1 // pred_fallthru
      _
    // Predicated region
    $region18: #{tpu_custom_call.1} parent=1 // pred_check
      _
    $region19: #{tpu_custom_call.1} parent=1 // pred_check_branch
      %33 = sbr.rel (0) target = $region21
    $region20: #{tpu_custom_call.1} parent=1 // pred_region
      _
    $region21: #{tpu_custom_call.1} parent=1 // pred_fallthru
      _
    // Predicated region
    $region22: #{tpu_custom_call.1} parent=1 // pred_check
      _
    $region23: #{tpu_custom_call.1} parent=1 // pred_check_branch
      %35 = sbr.rel (0) target = $region25
    $region24: #{tpu_custom_call.1} parent=1 // pred_region
      _
    $region25: #{tpu_custom_call.1} parent=1 // pred_fallthru
      _
    // Predicated region
    $region26: #{tpu_custom_call.1} parent=1 // pred_check
      _
    $region27: #{tpu_custom_call.1} parent=1 // pred_check_branch
      %37 = sbr.rel (0) target = $region29
    $region28: #{tpu_custom_call.1} parent=1 // pred_region
      _
    $region29: #{tpu_custom_call.1} parent=1 // pred_fallthru
      _
    // Predicated region
    $region30: #{tpu_custom_call.1} parent=1 // pred_check
      _
    $region31: #{tpu_custom_call.1} parent=1 // pred_check_branch
      %39 = sbr.rel (0) target = $region33
    $region32: #{tpu_custom_call.1} parent=1 // pred_region
      %40 = dma.done [#allocation3], 1536
    $region33: #{tpu_custom_call.1} parent=1 // pred_fallthru
      _
    %v41 = vld [vmem:[%s0] sm:$0xff]
    %v42 = vld [vmem:[%s0 + $0x8] sm:$0xff]
    %v43 = vld [vmem:[%s0 + $0x10] sm:$0xff]
    %v44 = vld [vmem:[%s0 + $0x18] sm:$0xff]
    %v45 = vld [vmem:[%s0 + $0x20] sm:$0xff]
    %v46 = vld [vmem:[%s0 + $0x28] sm:$0xff]
    %v47 = vld [vmem:[%s0 + $0x30] sm:$0xff]
    %v48 = vld [vmem:[%s0 + $0x38] sm:$0xff]
    %v49 = vld [vmem:[%s0 + $0x40] sm:$0xff]
    %v50 = vld [vmem:[%s0 + $0x48] sm:$0xff]
    %v51 = vld [vmem:[%s0 + $0x50] sm:$0xff]
    %v52 = vld [vmem:[%s0 + $0x58] sm:$0xff]
    %v53 = vld [vmem:[%s0 + $0x60] sm:$0xff]
    %v54 = vld [vmem:[%s0 + $0x68] sm:$0xff]
    %v55 = vld [vmem:[%s0 + $0x70] sm:$0xff]
    %v56 = vld [vmem:[%s0 + $0x78] sm:$0xff]
    %v57 = vld [vmem:[%s1] sm:$0xff]
    %v58 = vld [vmem:[%s1 + $0x8] sm:$0xff]
    %v59 = vld [vmem:[%s1 + $0x10] sm:$0xff]
    %v60 = vld [vmem:[%s1 + $0x18] sm:$0xff]
    %v61 = vld [vmem:[%s2] sm:$0xff]
    %v62 = vld [vmem:[%s2 + $0x8] sm:$0xff]
    %v63 = vld [vmem:[%s2 + $0x10] sm:$0xff]
    %v64 = vld [vmem:[%s2 + $0x18] sm:$0xff]
    %66 = vset.pattern.permute.xlu0 0
    %67 = vperm.xlu0 %66, %v61
    %v68 = vpop.permute.xlu0 %67
    %71 = vset.pattern.permute.xlu0 0
    %72 = vperm.xlu0 %71, %v62
    %v73 = vpop.permute.xlu0 %72
    %76 = vset.pattern.permute.xlu0 0
    %77 = vperm.xlu0 %76, %v63
    %v78 = vpop.permute.xlu0 %77
    %81 = vset.pattern.permute.xlu0 0
    %82 = vperm.xlu0 %81, %v64
    %v83 = vpop.permute.xlu0 %82
    %vm85 = vcmask 64512
    %v87 = vsel %vm85, %v57, 0
    %v90 = vsel %vm85, %v58, 0
    %v93 = vsel %vm85, %v59, 0
    %v96 = vsel %vm85, %v60, 0
    %98 = vmatprep.subr.mxu0 0.0
    %99 = vmatpush1.msra.mxu0 0.0
    %100 = vmatprep.subr.mxu0 0.0
    %101 = vmatpush1.msra.mxu0 0.0
    %102 = vmatprep.subr.mxu0 0.0
    %103 = vmatpush1.msra.mxu0 0.0
    %104 = vmatprep.subr.mxu0 0.0
    %105 = vmatpush1.msra.mxu0 0.0
    %106 = vmatprep.subr.mxu0 0.0
    %107 = vmatpush1.msra.mxu0 0.0
    %108 = vmatprep.subr.mxu0 0.0
    %109 = vmatpush1.msra.mxu0 0.0
    %110 = vmatprep.subr.mxu0 0.0
    %111 = vmatpush1.msra.mxu0 0.0
    %112 = vmatprep.subr.mxu0 0.0
    %113 = vmatpush1.msra.mxu0 0.0
    %114 = vmatprep.subr.mxu0 0.0
    %115 = vmatpush1.msra.mxu0 0.0
    %116 = vmatprep.subr.mxu0 0.0
    %117 = vmatpush1.msra.mxu0 0.0
    %118 = vmatprep.subr.mxu0 0.0
    %119 = vmatpush1.msra.mxu0 0.0
    %120 = vmatprep.subr.mxu0 0.0
    %121 = vmatpush1.msra.mxu0 0.0
    %122 = vmatprep.subr.mxu0 0.0
    %123 = vmatpush1.msra.mxu0 0.0
    %124 = vmatprep.subr.mxu0 0.0
    %125 = vmatpush1.msra.mxu0 0.0
    %126 = vmatprep.subr.mxu0 0.0
    %127 = vmatpush1.msra.mxu0 0.0
    %128 = vmatprep.subr.mxu0 %v42
    %129 = vmatpush1.msra.mxu0 %v41
    %130 = vmatprep.subr.mxu0 0.0
    %131 = vmatpush2.msra.mxu0 0.0
    %132 = vmatprep.subr.mxu0 0.0
    %133 = vmatpush2.msra.mxu0 0.0
    %134 = vmatprep.subr.mxu0 0.0
    %135 = vmatpush2.msra.mxu0 0.0
    %136 = vmatprep.subr.mxu0 0.0
    %137 = vmatpush2.msra.mxu0 0.0
    %138 = vmatprep.subr.mxu0 0.0
    %139 = vmatpush2.msra.mxu0 0.0
    %140 = vmatprep.subr.mxu0 0.0
    %141 = vmatpush2.msra.mxu0 0.0
    %142 = vmatprep.subr.mxu0 0.0
    %143 = vmatpush2.msra.mxu0 0.0
    %144 = vmatprep.subr.mxu0 0.0
    %145 = vmatpush2.msra.mxu0 0.0
    %146 = vmatprep.subr.mxu0 0.0
    %147 = vmatpush2.msra.mxu0 0.0
    %148 = vmatprep.subr.mxu0 0.0
    %149 = vmatpush2.msra.mxu0 0.0
    %150 = vmatprep.subr.mxu0 0.0
    %151 = vmatpush2.msra.mxu0 0.0
    %152 = vmatprep.subr.mxu0 0.0
    %153 = vmatpush2.msra.mxu0 0.0
    %154 = vmatprep.subr.mxu0 0.0
    %155 = vmatpush2.msra.mxu0 0.0
    %156 = vmatprep.subr.mxu0 0.0
    %157 = vmatpush2.msra.mxu0 0.0
    %158 = vmatprep.subr.mxu0 0.0
    %159 = vmatpush2.msra.mxu0 0.0
    %160 = vmatprep.subr.mxu0 0.0
    %161 = vmatpush2.msra.mxu0 0.0
    %162 = vmatprep.mubr.f32.mxu0 0.0
    %163 = vmatmul.mubr.f32.gmra.mxu0 %v87
    %v164 = vpop.f32.mrf.mxu0
    %v165 = vadd.f32 %v68, %v164
    %v166 = vpop.f32.mrf.mxu0
    %v167 = vadd.f32 %v68, %v166
    %168 = vmatprep.mubr.f32.mxu0 0.0
    %169 = vmatmul.mubr.f32.gmra.mxu0 %v90
    %v170 = vpop.f32.mrf.mxu0
    %v171 = vadd.f32 %v73, %v170
    %v172 = vpop.f32.mrf.mxu0
    %v173 = vadd.f32 %v73, %v172
    %174 = vmatprep.mubr.f32.mxu0 0.0
    %175 = vmatmul.mubr.f32.gmra.mxu0 %v93
    %v176 = vpop.f32.mrf.mxu0
    %v177 = vadd.f32 %v78, %v176
    %v178 = vpop.f32.mrf.mxu0
    %v179 = vadd.f32 %v78, %v178
    %180 = vmatprep.mubr.f32.mxu0 0.0
    %181 = vmatmul.mubr.f32.gmra.mxu0 %v96
    %v182 = vpop.f32.mrf.mxu0
    %v183 = vadd.f32 %v83, %v182
    %v184 = vpop.f32.mrf.mxu0
    %v185 = vadd.f32 %v83, %v184
    %186 = vdwg.mxu0
    %187 = vmatprep.subr.mxu0 0.0
    %188 = vmatpush1.msra.mxu0 0.0
    %189 = vmatprep.subr.mxu0 0.0
    %190 = vmatpush1.msra.mxu0 0.0
    %191 = vmatprep.subr.mxu0 0.0
    %192 = vmatpush1.msra.mxu0 0.0
    %193 = vmatprep.subr.mxu0 0.0
    %194 = vmatpush1.msra.mxu0 0.0
    %195 = vmatprep.subr.mxu0 0.0
    %196 = vmatpush1.msra.mxu0 0.0
    %197 = vmatprep.subr.mxu0 0.0
    %198 = vmatpush1.msra.mxu0 0.0
    %199 = vmatprep.subr.mxu0 0.0
    %200 = vmatpush1.msra.mxu0 0.0
    %201 = vmatprep.subr.mxu0 0.0
    %202 = vmatpush1.msra.mxu0 0.0
    %203 = vmatprep.subr.mxu0 0.0
    %204 = vmatpush1.msra.mxu0 0.0
    %205 = vmatprep.subr.mxu0 0.0
    %206 = vmatpush1.msra.mxu0 0.0
    %207 = vmatprep.subr.mxu0 0.0
    %208 = vmatpush1.msra.mxu0 0.0
    %209 = vmatprep.subr.mxu0 0.0
    %210 = vmatpush1.msra.mxu0 0.0
    %211 = vmatprep.subr.mxu0 0.0
    %212 = vmatpush1.msra.mxu0 0.0
    %213 = vmatprep.subr.mxu0 0.0
    %214 = vmatpush1.msra.mxu0 0.0
    %215 = vmatprep.subr.mxu0 0.0
    %216 = vmatpush1.msra.mxu0 0.0
    %217 = vmatprep.subr.mxu0 %v44
    %218 = vmatpush1.msra.mxu0 %v43
    %219 = vmatprep.subr.mxu0 0.0
    %220 = vmatpush2.msra.mxu0 0.0
    %221 = vmatprep.subr.mxu0 0.0
    %222 = vmatpush2.msra.mxu0 0.0
    %223 = vmatprep.subr.mxu0 0.0
    %224 = vmatpush2.msra.mxu0 0.0
    %225 = vmatprep.subr.mxu0 0.0
    %226 = vmatpush2.msra.mxu0 0.0
    %227 = vmatprep.subr.mxu0 0.0
    %228 = vmatpush2.msra.mxu0 0.0
    %229 = vmatprep.subr.mxu0 0.0
    %230 = vmatpush2.msra.mxu0 0.0
    %231 = vmatprep.subr.mxu0 0.0
    %232 = vmatpush2.msra.mxu0 0.0
    %233 = vmatprep.subr.mxu0 0.0
    %234 = vmatpush2.msra.mxu0 0.0
    %235 = vmatprep.subr.mxu0 0.0
    %236 = vmatpush2.msra.mxu0 0.0
    %237 = vmatprep.subr.mxu0 0.0
    %238 = vmatpush2.msra.mxu0 0.0
    %239 = vmatprep.subr.mxu0 0.0
    %240 = vmatpush2.msra.mxu0 0.0
    %241 = vmatprep.subr.mxu0 0.0
    %242 = vmatpush2.msra.mxu0 0.0
    %243 = vmatprep.subr.mxu0 0.0
    %244 = vmatpush2.msra.mxu0 0.0
    %245 = vmatprep.subr.mxu0 0.0
    %246 = vmatpush2.msra.mxu0 0.0
    %247 = vmatprep.subr.mxu0 0.0
    %248 = vmatpush2.msra.mxu0 0.0
    %249 = vmatprep.subr.mxu0 0.0
    %250 = vmatpush2.msra.mxu0 0.0
    %251 = vmatprep.mubr.f32.mxu0 0.0
    %252 = vmatmul.mubr.f32.gmra.mxu0 %v87
    %v253 = vpop.f32.mrf.mxu0
    %v254 = vadd.f32 %v68, %v253
    %v255 = vpop.f32.mrf.mxu0
    %v256 = vadd.f32 %v68, %v255
    %257 = vmatprep.mubr.f32.mxu0 0.0
    %258 = vmatmul.mubr.f32.gmra.mxu0 %v90
    %v259 = vpop.f32.mrf.mxu0
    %v260 = vadd.f32 %v73, %v259
    %v261 = vpop.f32.mrf.mxu0
    %v262 = vadd.f32 %v73, %v261
    %263 = vmatprep.mubr.f32.mxu0 0.0
    %264 = vmatmul.mubr.f32.gmra.mxu0 %v93
    %v265 = vpop.f32.mrf.mxu0
    %v266 = vadd.f32 %v78, %v265
    %v267 = vpop.f32.mrf.mxu0
    %v268 = vadd.f32 %v78, %v267
    %269 = vmatprep.mubr.f32.mxu0 0.0
    %270 = vmatmul.mubr.f32.gmra.mxu0 %v96
    %v271 = vpop.f32.mrf.mxu0
    %v272 = vadd.f32 %v83, %v271
    %v273 = vpop.f32.mrf.mxu0
    %v274 = vadd.f32 %v83, %v273
    %275 = vdwg.mxu0
    %276 = vmatprep.subr.mxu0 0.0
    %277 = vmatpush1.msra.mxu0 0.0
    %278 = vmatprep.subr.mxu0 0.0
    %279 = vmatpush1.msra.mxu0 0.0
    %280 = vmatprep.subr.mxu0 0.0
    %281 = vmatpush1.msra.mxu0 0.0
    %282 = vmatprep.subr.mxu0 0.0
    %283 = vmatpush1.msra.mxu0 0.0
    %284 = vmatprep.subr.mxu0 0.0
    %285 = vmatpush1.msra.mxu0 0.0
    %286 = vmatprep.subr.mxu0 0.0
    %287 = vmatpush1.msra.mxu0 0.0
    %288 = vmatprep.subr.mxu0 0.0
    %289 = vmatpush1.msra.mxu0 0.0
    %290 = vmatprep.subr.mxu0 0.0
    %291 = vmatpush1.msra.mxu0 0.0
    %292 = vmatprep.subr.mxu0 0.0
    %293 = vmatpush1.msra.mxu0 0.0
    %294 = vmatprep.subr.mxu0 0.0
    %295 = vmatpush1.msra.mxu0 0.0
    %296 = vmatprep.subr.mxu0 0.0
    %297 = vmatpush1.msra.mxu0 0.0
    %298 = vmatprep.subr.mxu0 0.0
    %299 = vmatpush1.msra.mxu0 0.0
    %300 = vmatprep.subr.mxu0 0.0
    %301 = vmatpush1.msra.mxu0 0.0
    %302 = vmatprep.subr.mxu0 0.0
    %303 = vmatpush1.msra.mxu0 0.0
    %304 = vmatprep.subr.mxu0 0.0
    %305 = vmatpush1.msra.mxu0 0.0
    %306 = vmatprep.subr.mxu0 %v46
    %307 = vmatpush1.msra.mxu0 %v45
    %308 = vmatprep.subr.mxu0 0.0
    %309 = vmatpush2.msra.mxu0 0.0
    %310 = vmatprep.subr.mxu0 0.0
    %311 = vmatpush2.msra.mxu0 0.0
    %312 = vmatprep.subr.mxu0 0.0
    %313 = vmatpush2.msra.mxu0 0.0
    %314 = vmatprep.subr.mxu0 0.0
    %315 = vmatpush2.msra.mxu0 0.0
    %316 = vmatprep.subr.mxu0 0.0
    %317 = vmatpush2.msra.mxu0 0.0
    %318 = vmatprep.subr.mxu0 0.0
    %319 = vmatpush2.msra.mxu0 0.0
    %320 = vmatprep.subr.mxu0 0.0
    %321 = vmatpush2.msra.mxu0 0.0
    %322 = vmatprep.subr.mxu0 0.0
    %323 = vmatpush2.msra.mxu0 0.0
    %324 = vmatprep.subr.mxu0 0.0
    %325 = vmatpush2.msra.mxu0 0.0
    %326 = vmatprep.subr.mxu0 0.0
    %327 = vmatpush2.msra.mxu0 0.0
    %328 = vmatprep.subr.mxu0 0.0
    %329 = vmatpush2.msra.mxu0 0.0
    %330 = vmatprep.subr.mxu0 0.0
    %331 = vmatpush2.msra.mxu0 0.0
    %332 = vmatprep.subr.mxu0 0.0
    %333 = vmatpush2.msra.mxu0 0.0
    %334 = vmatprep.subr.mxu0 0.0
    %335 = vmatpush2.msra.mxu0 0.0
    %336 = vmatprep.subr.mxu0 0.0
    %337 = vmatpush2.msra.mxu0 0.0
    %338 = vmatprep.subr.mxu0 0.0
    %339 = vmatpush2.msra.mxu0 0.0
    %340 = vmatprep.mubr.f32.mxu0 0.0
    %341 = vmatmul.mubr.f32.gmra.mxu0 %v87
    %v342 = vpop.f32.mrf.mxu0
    %v343 = vadd.f32 %v68, %v342
    %v344 = vpop.f32.mrf.mxu0
    %v345 = vadd.f32 %v68, %v344
    %346 = vmatprep.mubr.f32.mxu0 0.0
    %347 = vmatmul.mubr.f32.gmra.mxu0 %v90
    %v348 = vpop.f32.mrf.mxu0
    %v349 = vadd.f32 %v73, %v348
    %v350 = vpop.f32.mrf.mxu0
    %v351 = vadd.f32 %v73, %v350
    %352 = vmatprep.mubr.f32.mxu0 0.0
    %353 = vmatmul.mubr.f32.gmra.mxu0 %v93
    %v354 = vpop.f32.mrf.mxu0
    %v355 = vadd.f32 %v78, %v354
    %v356 = vpop.f32.mrf.mxu0
    %v357 = vadd.f32 %v78, %v356
    %358 = vmatprep.mubr.f32.mxu0 0.0
    %359 = vmatmul.mubr.f32.gmra.mxu0 %v96
    %v360 = vpop.f32.mrf.mxu0
    %v361 = vadd.f32 %v83, %v360
    %v362 = vpop.f32.mrf.mxu0
    %v363 = vadd.f32 %v83, %v362
    %364 = vdwg.mxu0
    %365 = vmatprep.subr.mxu0 0.0
    %366 = vmatpush1.msra.mxu0 0.0
    %367 = vmatprep.subr.mxu0 0.0
    %368 = vmatpush1.msra.mxu0 0.0
    %369 = vmatprep.subr.mxu0 0.0
    %370 = vmatpush1.msra.mxu0 0.0
    %371 = vmatprep.subr.mxu0 0.0
    %372 = vmatpush1.msra.mxu0 0.0
    %373 = vmatprep.subr.mxu0 0.0
    %374 = vmatpush1.msra.mxu0 0.0
    %375 = vmatprep.subr.mxu0 0.0
    %376 = vmatpush1.msra.mxu0 0.0
    %377 = vmatprep.subr.mxu0 0.0
    %378 = vmatpush1.msra.mxu0 0.0
    %379 = vmatprep.subr.mxu0 0.0
    %380 = vmatpush1.msra.mxu0 0.0
    %381 = vmatprep.subr.mxu0 0.0
    %382 = vmatpush1.msra.mxu0 0.0
    %383 = vmatprep.subr.mxu0 0.0
    %384 = vmatpush1.msra.mxu0 0.0
    %385 = vmatprep.subr.mxu0 0.0
    %386 = vmatpush1.msra.mxu0 0.0
    %387 = vmatprep.subr.mxu0 0.0
    %388 = vmatpush1.msra.mxu0 0.0
    %389 = vmatprep.subr.mxu0 0.0
    %390 = vmatpush1.msra.mxu0 0.0
    %391 = vmatprep.subr.mxu0 0.0
    %392 = vmatpush1.msra.mxu0 0.0
    %393 = vmatprep.subr.mxu0 0.0
    %394 = vmatpush1.msra.mxu0 0.0
    %395 = vmatprep.subr.mxu0 %v48
    %396 = vmatpush1.msra.mxu0 %v47
    %397 = vmatprep.subr.mxu0 0.0
    %398 = vmatpush2.msra.mxu0 0.0
    %399 = vmatprep.subr.mxu0 0.0
    %400 = vmatpush2.msra.mxu0 0.0
    %401 = vmatprep.subr.mxu0 0.0
    %402 = vmatpush2.msra.mxu0 0.0
    %403 = vmatprep.subr.mxu0 0.0
    %404 = vmatpush2.msra.mxu0 0.0
    %405 = vmatprep.subr.mxu0 0.0
    %406 = vmatpush2.msra.mxu0 0.0
    %407 = vmatprep.subr.mxu0 0.0
    %408 = vmatpush2.msra.mxu0 0.0
    %409 = vmatprep.subr.mxu0 0.0
    %410 = vmatpush2.msra.mxu0 0.0
    %411 = vmatprep.subr.mxu0 0.0
    %412 = vmatpush2.msra.mxu0 0.0
    %413 = vmatprep.subr.mxu0 0.0
    %414 = vmatpush2.msra.mxu0 0.0
    %415 = vmatprep.subr.mxu0 0.0
    %416 = vmatpush2.msra.mxu0 0.0
    %417 = vmatprep.subr.mxu0 0.0
    %418 = vmatpush2.msra.mxu0 0.0
    %419 = vmatprep.subr.mxu0 0.0
    %420 = vmatpush2.msra.mxu0 0.0
    %421 = vmatprep.subr.mxu0 0.0
    %422 = vmatpush2.msra.mxu0 0.0
    %423 = vmatprep.subr.mxu0 0.0
    %424 = vmatpush2.msra.mxu0 0.0
    %425 = vmatprep.subr.mxu0 0.0
    %426 = vmatpush2.msra.mxu0 0.0
    %427 = vmatprep.subr.mxu0 0.0
    %428 = vmatpush2.msra.mxu0 0.0
    %429 = vmatprep.mubr.f32.mxu0 0.0
    %430 = vmatmul.mubr.f32.gmra.mxu0 %v87
    %v431 = vpop.f32.mrf.mxu0
    %v432 = vadd.f32 %v68, %v431
    %v433 = vpop.f32.mrf.mxu0
    %v434 = vadd.f32 %v68, %v433
    %435 = vmatprep.mubr.f32.mxu0 0.0
    %436 = vmatmul.mubr.f32.gmra.mxu0 %v90
    %v437 = vpop.f32.mrf.mxu0
    %v438 = vadd.f32 %v73, %v437
    %v439 = vpop.f32.mrf.mxu0
    %v440 = vadd.f32 %v73, %v439
    %441 = vmatprep.mubr.f32.mxu0 0.0
    %442 = vmatmul.mubr.f32.gmra.mxu0 %v93
    %v443 = vpop.f32.mrf.mxu0
    %v444 = vadd.f32 %v78, %v443
    %v445 = vpop.f32.mrf.mxu0
    %v446 = vadd.f32 %v78, %v445
    %447 = vmatprep.mubr.f32.mxu0 0.0
    %448 = vmatmul.mubr.f32.gmra.mxu0 %v96
    %v449 = vpop.f32.mrf.mxu0
    %v450 = vadd.f32 %v83, %v449
    %v451 = vpop.f32.mrf.mxu0
    %v452 = vadd.f32 %v83, %v451
    %453 = vdwg.mxu0
    %454 = vmatprep.subr.mxu0 0.0
    %455 = vmatpush1.msra.mxu0 0.0
    %456 = vmatprep.subr.mxu0 0.0
    %457 = vmatpush1.msra.mxu0 0.0
    %458 = vmatprep.subr.mxu0 0.0
    %459 = vmatpush1.msra.mxu0 0.0
    %460 = vmatprep.subr.mxu0 0.0
    %461 = vmatpush1.msra.mxu0 0.0
    %462 = vmatprep.subr.mxu0 0.0
    %463 = vmatpush1.msra.mxu0 0.0
    %464 = vmatprep.subr.mxu0 0.0
    %465 = vmatpush1.msra.mxu0 0.0
    %466 = vmatprep.subr.mxu0 0.0
    %467 = vmatpush1.msra.mxu0 0.0
    %468 = vmatprep.subr.mxu0 0.0
    %469 = vmatpush1.msra.mxu0 0.0
    %470 = vmatprep.subr.mxu0 0.0
    %471 = vmatpush1.msra.mxu0 0.0
    %472 = vmatprep.subr.mxu0 0.0
    %473 = vmatpush1.msra.mxu0 0.0
    %474 = vmatprep.subr.mxu0 0.0
    %475 = vmatpush1.msra.mxu0 0.0
    %476 = vmatprep.subr.mxu0 0.0
    %477 = vmatpush1.msra.mxu0 0.0
    %478 = vmatprep.subr.mxu0 0.0
    %479 = vmatpush1.msra.mxu0 0.0
    %480 = vmatprep.subr.mxu0 0.0
    %481 = vmatpush1.msra.mxu0 0.0
    %482 = vmatprep.subr.mxu0 0.0
    %483 = vmatpush1.msra.mxu0 0.0
    %484 = vmatprep.subr.mxu0 %v50
    %485 = vmatpush1.msra.mxu0 %v49
    %486 = vmatprep.subr.mxu0 0.0
    %487 = vmatpush2.msra.mxu0 0.0
    %488 = vmatprep.subr.mxu0 0.0
    %489 = vmatpush2.msra.mxu0 0.0
    %490 = vmatprep.subr.mxu0 0.0
    %491 = vmatpush2.msra.mxu0 0.0
    %492 = vmatprep.subr.mxu0 0.0
    %493 = vmatpush2.msra.mxu0 0.0
    %494 = vmatprep.subr.mxu0 0.0
    %495 = vmatpush2.msra.mxu0 0.0
    %496 = vmatprep.subr.mxu0 0.0
    %497 = vmatpush2.msra.mxu0 0.0
    %498 = vmatprep.subr.mxu0 0.0
    %499 = vmatpush2.msra.mxu0 0.0
    %500 = vmatprep.subr.mxu0 0.0
    %501 = vmatpush2.msra.mxu0 0.0
    %502 = vmatprep.subr.mxu0 0.0
    %503 = vmatpush2.msra.mxu0 0.0
    %504 = vmatprep.subr.mxu0 0.0
    %505 = vmatpush2.msra.mxu0 0.0
    %506 = vmatprep.subr.mxu0 0.0
    %507 = vmatpush2.msra.mxu0 0.0
    %508 = vmatprep.subr.mxu0 0.0
    %509 = vmatpush2.msra.mxu0 0.0
    %510 = vmatprep.subr.mxu0 0.0
    %511 = vmatpush2.msra.mxu0 0.0
    %512 = vmatprep.subr.mxu0 0.0
    %513 = vmatpush2.msra.mxu0 0.0
    %514 = vmatprep.subr.mxu0 0.0
    %515 = vmatpush2.msra.mxu0 0.0
    %516 = vmatprep.subr.mxu0 0.0
    %517 = vmatpush2.msra.mxu0 0.0
    %518 = vmatprep.mubr.f32.mxu0 0.0
    %519 = vmatmul.mubr.f32.gmra.mxu0 %v87
    %v520 = vpop.f32.mrf.mxu0
    %v521 = vadd.f32 %v68, %v520
    %v522 = vpop.f32.mrf.mxu0
    %v523 = vadd.f32 %v68, %v522
    %524 = vmatprep.mubr.f32.mxu0 0.0
    %525 = vmatmul.mubr.f32.gmra.mxu0 %v90
    %v526 = vpop.f32.mrf.mxu0
    %v527 = vadd.f32 %v73, %v526
    %v528 = vpop.f32.mrf.mxu0
    %v529 = vadd.f32 %v73, %v528
    %530 = vmatprep.mubr.f32.mxu0 0.0
    %531 = vmatmul.mubr.f32.gmra.mxu0 %v93
    %v532 = vpop.f32.mrf.mxu0
    %v533 = vadd.f32 %v78, %v532
    %v534 = vpop.f32.mrf.mxu0
    %v535 = vadd.f32 %v78, %v534
    %536 = vmatprep.mubr.f32.mxu0 0.0
    %537 = vmatmul.mubr.f32.gmra.mxu0 %v96
    %v538 = vpop.f32.mrf.mxu0
    %v539 = vadd.f32 %v83, %v538
    %v540 = vpop.f32.mrf.mxu0
    %v541 = vadd.f32 %v83, %v540
    %542 = vdwg.mxu0
    %543 = vmatprep.subr.mxu0 0.0
    %544 = vmatpush1.msra.mxu0 0.0
    %545 = vmatprep.subr.mxu0 0.0
    %546 = vmatpush1.msra.mxu0 0.0
    %547 = vmatprep.subr.mxu0 0.0
    %548 = vmatpush1.msra.mxu0 0.0
    %549 = vmatprep.subr.mxu0 0.0
    %550 = vmatpush1.msra.mxu0 0.0
    %551 = vmatprep.subr.mxu0 0.0
    %552 = vmatpush1.msra.mxu0 0.0
    %553 = vmatprep.subr.mxu0 0.0
    %554 = vmatpush1.msra.mxu0 0.0
    %555 = vmatprep.subr.mxu0 0.0
    %556 = vmatpush1.msra.mxu0 0.0
    %557 = vmatprep.subr.mxu0 0.0
    %558 = vmatpush1.msra.mxu0 0.0
    %559 = vmatprep.subr.mxu0 0.0
    %560 = vmatpush1.msra.mxu0 0.0
    %561 = vmatprep.subr.mxu0 0.0
    %562 = vmatpush1.msra.mxu0 0.0
    %563 = vmatprep.subr.mxu0 0.0
    %564 = vmatpush1.msra.mxu0 0.0
    %565 = vmatprep.subr.mxu0 0.0
    %566 = vmatpush1.msra.mxu0 0.0
    %567 = vmatprep.subr.mxu0 0.0
    %568 = vmatpush1.msra.mxu0 0.0
    %569 = vmatprep.subr.mxu0 0.0
    %570 = vmatpush1.msra.mxu0 0.0
    %571 = vmatprep.subr.mxu0 0.0
    %572 = vmatpush1.msra.mxu0 0.0
    %573 = vmatprep.subr.mxu0 %v52
    %574 = vmatpush1.msra.mxu0 %v51
    %575 = vmatprep.subr.mxu0 0.0
    %576 = vmatpush2.msra.mxu0 0.0
    %577 = vmatprep.subr.mxu0 0.0
    %578 = vmatpush2.msra.mxu0 0.0
    %579 = vmatprep.subr.mxu0 0.0
    %580 = vmatpush2.msra.mxu0 0.0
    %581 = vmatprep.subr.mxu0 0.0
    %582 = vmatpush2.msra.mxu0 0.0
    %583 = vmatprep.subr.mxu0 0.0
    %584 = vmatpush2.msra.mxu0 0.0
    %585 = vmatprep.subr.mxu0 0.0
    %586 = vmatpush2.msra.mxu0 0.0
    %587 = vmatprep.subr.mxu0 0.0
    %588 = vmatpush2.msra.mxu0 0.0
    %589 = vmatprep.subr.mxu0 0.0
    %590 = vmatpush2.msra.mxu0 0.0
    %591 = vmatprep.subr.mxu0 0.0
    %592 = vmatpush2.msra.mxu0 0.0
    %593 = vmatprep.subr.mxu0 0.0
    %594 = vmatpush2.msra.mxu0 0.0
    %595 = vmatprep.subr.mxu0 0.0
    %596 = vmatpush2.msra.mxu0 0.0
    %597 = vmatprep.subr.mxu0 0.0
    %598 = vmatpush2.msra.mxu0 0.0
    %599 = vmatprep.subr.mxu0 0.0
    %600 = vmatpush2.msra.mxu0 0.0
    %601 = vmatprep.subr.mxu0 0.0
    %602 = vmatpush2.msra.mxu0 0.0
    %603 = vmatprep.subr.mxu0 0.0
    %604 = vmatpush2.msra.mxu0 0.0
    %605 = vmatprep.subr.mxu0 0.0
    %606 = vmatpush2.msra.mxu0 0.0
    %607 = vmatprep.mubr.f32.mxu0 0.0
    %608 = vmatmul.mubr.f32.gmra.mxu0 %v87
    %v609 = vpop.f32.mrf.mxu0
    %v610 = vadd.f32 %v68, %v609
    %v611 = vpop.f32.mrf.mxu0
    %v612 = vadd.f32 %v68, %v611
    %613 = vmatprep.mubr.f32.mxu0 0.0
    %614 = vmatmul.mubr.f32.gmra.mxu0 %v90
    %v615 = vpop.f32.mrf.mxu0
    %v616 = vadd.f32 %v73, %v615
    %v617 = vpop.f32.mrf.mxu0
    %v618 = vadd.f32 %v73, %v617
    %619 = vmatprep.mubr.f32.mxu0 0.0
    %620 = vmatmul.mubr.f32.gmra.mxu0 %v93
    %v621 = vpop.f32.mrf.mxu0
    %v622 = vadd.f32 %v78, %v621
    %v623 = vpop.f32.mrf.mxu0
    %v624 = vadd.f32 %v78, %v623
    %625 = vmatprep.mubr.f32.mxu0 0.0
    %626 = vmatmul.mubr.f32.gmra.mxu0 %v96
    %v627 = vpop.f32.mrf.mxu0
    %v628 = vadd.f32 %v83, %v627
    %v629 = vpop.f32.mrf.mxu0
    %v630 = vadd.f32 %v83, %v629
    %631 = vdwg.mxu0
    %632 = vmatprep.subr.mxu0 0.0
    %633 = vmatpush1.msra.mxu0 0.0
    %634 = vmatprep.subr.mxu0 0.0
    %635 = vmatpush1.msra.mxu0 0.0
    %636 = vmatprep.subr.mxu0 0.0
    %637 = vmatpush1.msra.mxu0 0.0
    %638 = vmatprep.subr.mxu0 0.0
    %639 = vmatpush1.msra.mxu0 0.0
    %640 = vmatprep.subr.mxu0 0.0
    %641 = vmatpush1.msra.mxu0 0.0
    %642 = vmatprep.subr.mxu0 0.0
    %643 = vmatpush1.msra.mxu0 0.0
    %644 = vmatprep.subr.mxu0 0.0
    %645 = vmatpush1.msra.mxu0 0.0
    %646 = vmatprep.subr.mxu0 0.0
    %647 = vmatpush1.msra.mxu0 0.0
    %648 = vmatprep.subr.mxu0 0.0
    %649 = vmatpush1.msra.mxu0 0.0
    %650 = vmatprep.subr.mxu0 0.0
    %651 = vmatpush1.msra.mxu0 0.0
    %652 = vmatprep.subr.mxu0 0.0
    %653 = vmatpush1.msra.mxu0 0.0
    %654 = vmatprep.subr.mxu0 0.0
    %655 = vmatpush1.msra.mxu0 0.0
    %656 = vmatprep.subr.mxu0 0.0
    %657 = vmatpush1.msra.mxu0 0.0
    %658 = vmatprep.subr.mxu0 0.0
    %659 = vmatpush1.msra.mxu0 0.0
    %660 = vmatprep.subr.mxu0 0.0
    %661 = vmatpush1.msra.mxu0 0.0
    %662 = vmatprep.subr.mxu0 %v54
    %663 = vmatpush1.msra.mxu0 %v53
    %664 = vmatprep.subr.mxu0 0.0
    %665 = vmatpush2.msra.mxu0 0.0
    %666 = vmatprep.subr.mxu0 0.0
    %667 = vmatpush2.msra.mxu0 0.0
    %668 = vmatprep.subr.mxu0 0.0
    %669 = vmatpush2.msra.mxu0 0.0
    %670 = vmatprep.subr.mxu0 0.0
    %671 = vmatpush2.msra.mxu0 0.0
    %672 = vmatprep.subr.mxu0 0.0
    %673 = vmatpush2.msra.mxu0 0.0
    %674 = vmatprep.subr.mxu0 0.0
    %675 = vmatpush2.msra.mxu0 0.0
    %676 = vmatprep.subr.mxu0 0.0
    %677 = vmatpush2.msra.mxu0 0.0
    %678 = vmatprep.subr.mxu0 0.0
    %679 = vmatpush2.msra.mxu0 0.0
    %680 = vmatprep.subr.mxu0 0.0
    %681 = vmatpush2.msra.mxu0 0.0
    %682 = vmatprep.subr.mxu0 0.0
    %683 = vmatpush2.msra.mxu0 0.0
    %684 = vmatprep.subr.mxu0 0.0
    %685 = vmatpush2.msra.mxu0 0.0
    %686 = vmatprep.subr.mxu0 0.0
    %687 = vmatpush2.msra.mxu0 0.0
    %688 = vmatprep.subr.mxu0 0.0
    %689 = vmatpush2.msra.mxu0 0.0
    %690 = vmatprep.subr.mxu0 0.0
    %691 = vmatpush2.msra.mxu0 0.0
    %692 = vmatprep.subr.mxu0 0.0
    %693 = vmatpush2.msra.mxu0 0.0
    %694 = vmatprep.subr.mxu0 0.0
    %695 = vmatpush2.msra.mxu0 0.0
    %696 = vmatprep.mubr.f32.mxu0 0.0
    %697 = vmatmul.mubr.f32.gmra.mxu0 %v87
    %v698 = vpop.f32.mrf.mxu0
    %v699 = vadd.f32 %v68, %v698
    %v700 = vpop.f32.mrf.mxu0
    %v701 = vadd.f32 %v68, %v700
    %702 = vmatprep.mubr.f32.mxu0 0.0
    %703 = vmatmul.mubr.f32.gmra.mxu0 %v90
    %v704 = vpop.f32.mrf.mxu0
    %v705 = vadd.f32 %v73, %v704
    %v706 = vpop.f32.mrf.mxu0
    %v707 = vadd.f32 %v73, %v706
    %708 = vmatprep.mubr.f32.mxu0 0.0
    %709 = vmatmul.mubr.f32.gmra.mxu0 %v93
    %v710 = vpop.f32.mrf.mxu0
    %v711 = vadd.f32 %v78, %v710
    %v712 = vpop.f32.mrf.mxu0
    %v713 = vadd.f32 %v78, %v712
    %714 = vmatprep.mubr.f32.mxu0 0.0
    %715 = vmatmul.mubr.f32.gmra.mxu0 %v96
    %v716 = vpop.f32.mrf.mxu0
    %v717 = vadd.f32 %v83, %v716
    %v718 = vpop.f32.mrf.mxu0
    %v719 = vadd.f32 %v83, %v718
    %720 = vdwg.mxu0
    %721 = vmatprep.subr.mxu0 0.0
    %722 = vmatpush1.msra.mxu0 0.0
    %723 = vmatprep.subr.mxu0 0.0
    %724 = vmatpush1.msra.mxu0 0.0
    %725 = vmatprep.subr.mxu0 0.0
    %726 = vmatpush1.msra.mxu0 0.0
    %727 = vmatprep.subr.mxu0 0.0
    %728 = vmatpush1.msra.mxu0 0.0
    %729 = vmatprep.subr.mxu0 0.0
    %730 = vmatpush1.msra.mxu0 0.0
    %731 = vmatprep.subr.mxu0 0.0
    %732 = vmatpush1.msra.mxu0 0.0
    %733 = vmatprep.subr.mxu0 0.0
    %734 = vmatpush1.msra.mxu0 0.0
    %735 = vmatprep.subr.mxu0 0.0
    %736 = vmatpush1.msra.mxu0 0.0
    %737 = vmatprep.subr.mxu0 0.0
    %738 = vmatpush1.msra.mxu0 0.0
    %739 = vmatprep.subr.mxu0 0.0
    %740 = vmatpush1.msra.mxu0 0.0
    %741 = vmatprep.subr.mxu0 0.0
    %742 = vmatpush1.msra.mxu0 0.0
    %743 = vmatprep.subr.mxu0 0.0
    %744 = vmatpush1.msra.mxu0 0.0
    %745 = vmatprep.subr.mxu0 0.0
    %746 = vmatpush1.msra.mxu0 0.0
    %747 = vmatprep.subr.mxu0 0.0
    %748 = vmatpush1.msra.mxu0 0.0
    %749 = vmatprep.subr.mxu0 0.0
    %750 = vmatpush1.msra.mxu0 0.0
    %751 = vmatprep.subr.mxu0 %v56
    %752 = vmatpush1.msra.mxu0 %v55
    %753 = vmatprep.subr.mxu0 0.0
    %754 = vmatpush2.msra.mxu0 0.0
    %755 = vmatprep.subr.mxu0 0.0
    %756 = vmatpush2.msra.mxu0 0.0
    %757 = vmatprep.subr.mxu0 0.0
    %758 = vmatpush2.msra.mxu0 0.0
    %759 = vmatprep.subr.mxu0 0.0
    %760 = vmatpush2.msra.mxu0 0.0
    %761 = vmatprep.subr.mxu0 0.0
    %762 = vmatpush2.msra.mxu0 0.0
    %763 = vmatprep.subr.mxu0 0.0
    %764 = vmatpush2.msra.mxu0 0.0
    %765 = vmatprep.subr.mxu0 0.0
    %766 = vmatpush2.msra.mxu0 0.0
    %767 = vmatprep.subr.mxu0 0.0
    %768 = vmatpush2.msra.mxu0 0.0
    %769 = vmatprep.subr.mxu0 0.0
    %770 = vmatpush2.msra.mxu0 0.0
    %771 = vmatprep.subr.mxu0 0.0
    %772 = vmatpush2.msra.mxu0 0.0
    %773 = vmatprep.subr.mxu0 0.0
    %774 = vmatpush2.msra.mxu0 0.0
    %775 = vmatprep.subr.mxu0 0.0
    %776 = vmatpush2.msra.mxu0 0.0
    %777 = vmatprep.subr.mxu0 0.0
    %778 = vmatpush2.msra.mxu0 0.0
    %779 = vmatprep.subr.mxu0 0.0
    %780 = vmatpush2.msra.mxu0 0.0
    %781 = vmatprep.subr.mxu0 0.0
    %782 = vmatpush2.msra.mxu0 0.0
    %783 = vmatprep.subr.mxu0 0.0
    %784 = vmatpush2.msra.mxu0 0.0
    %785 = vmatprep.mubr.f32.mxu0 0.0
    %786 = vmatmul.mubr.f32.gmra.mxu0 %v87
    %v787 = vpop.f32.mrf.mxu0
    %v788 = vadd.f32 %v68, %v787
    %v789 = vpop.f32.mrf.mxu0
    %v790 = vadd.f32 %v68, %v789
    %791 = vmatprep.mubr.f32.mxu0 0.0
    %792 = vmatmul.mubr.f32.gmra.mxu0 %v90
    %v793 = vpop.f32.mrf.mxu0
    %v794 = vadd.f32 %v73, %v793
    %v795 = vpop.f32.mrf.mxu0
    %v796 = vadd.f32 %v73, %v795
    %797 = vmatprep.mubr.f32.mxu0 0.0
    %798 = vmatmul.mubr.f32.gmra.mxu0 %v93
    %v799 = vpop.f32.mrf.mxu0
    %v800 = vadd.f32 %v78, %v799
    %v801 = vpop.f32.mrf.mxu0
    %v802 = vadd.f32 %v78, %v801
    %803 = vmatprep.mubr.f32.mxu0 0.0
    %804 = vmatmul.mubr.f32.gmra.mxu0 %v96
    %v805 = vpop.f32.mrf.mxu0
    %v806 = vadd.f32 %v83, %v805
    %v807 = vpop.f32.mrf.mxu0
    %v808 = vadd.f32 %v83, %v807
    %809 = vdwg.mxu0
    %v810 = vmax.f32 %v165, 0.0
    %v811 = vmax.f32 %v167, 0.0
    %v812 = vmax.f32 %v254, 0.0
    %v813 = vmax.f32 %v256, 0.0
    %v814 = vmax.f32 %v343, 0.0
    %v815 = vmax.f32 %v345, 0.0
    %v816 = vmax.f32 %v432, 0.0
    %v817 = vmax.f32 %v434, 0.0
    %v818 = vmax.f32 %v521, 0.0
    %v819 = vmax.f32 %v523, 0.0
    %v820 = vmax.f32 %v610, 0.0
    %v821 = vmax.f32 %v612, 0.0
    %v822 = vmax.f32 %v699, 0.0
    %v823 = vmax.f32 %v701, 0.0
    %v824 = vmax.f32 %v788, 0.0
    %v825 = vmax.f32 %v790, 0.0
    %v826 = vmax.f32 %v171, 0.0
    %v827 = vmax.f32 %v173, 0.0
    %v828 = vmax.f32 %v260, 0.0
    %v829 = vmax.f32 %v262, 0.0
    %v830 = vmax.f32 %v349, 0.0
    %v831 = vmax.f32 %v351, 0.0
    %v832 = vmax.f32 %v438, 0.0
    %v833 = vmax.f32 %v440, 0.0
    %v834 = vmax.f32 %v527, 0.0
    %v835 = vmax.f32 %v529, 0.0
    %v836 = vmax.f32 %v616, 0.0
    %v837 = vmax.f32 %v618, 0.0
    %v838 = vmax.f32 %v705, 0.0
    %v839 = vmax.f32 %v707, 0.0
    %v840 = vmax.f32 %v794, 0.0
    %v841 = vmax.f32 %v796, 0.0
    %v842 = vmax.f32 %v177, 0.0
    %v843 = vmax.f32 %v179, 0.0
    %v844 = vmax.f32 %v266, 0.0
    %v845 = vmax.f32 %v268, 0.0
    %v846 = vmax.f32 %v355, 0.0
    %v847 = vmax.f32 %v357, 0.0
    %v848 = vmax.f32 %v444, 0.0
    %v849 = vmax.f32 %v446, 0.0
    %v850 = vmax.f32 %v533, 0.0
    %v851 = vmax.f32 %v535, 0.0
    %v852 = vmax.f32 %v622, 0.0
    %v853 = vmax.f32 %v624, 0.0
    %v854 = vmax.f32 %v711, 0.0
    %v855 = vmax.f32 %v713, 0.0
    %v856 = vmax.f32 %v800, 0.0
    %v857 = vmax.f32 %v802, 0.0
    %v858 = vmax.f32 %v183, 0.0
    %v859 = vmax.f32 %v185, 0.0
    %v860 = vmax.f32 %v272, 0.0
    %v861 = vmax.f32 %v274, 0.0
    %v862 = vmax.f32 %v361, 0.0
    %v863 = vmax.f32 %v363, 0.0
    %v864 = vmax.f32 %v450, 0.0
    %v865 = vmax.f32 %v452, 0.0
    %v866 = vmax.f32 %v539, 0.0
    %v867 = vmax.f32 %v541, 0.0
    %v868 = vmax.f32 %v628, 0.0
    %v869 = vmax.f32 %v630, 0.0
    %v870 = vmax.f32 %v717, 0.0
    %v871 = vmax.f32 %v719, 0.0
    %v872 = vmax.f32 %v806, 0.0
    %v873 = vmax.f32 %v808, 0.0
    %v874 = vld [vmem:[#allocation2] sm:$0xff]
    %v875 = vld [vmem:[#allocation2 + $0x8] sm:$0xff]
    %v876 = vld [vmem:[#allocation2 + $0x10] sm:$0xff]
    %v877 = vld [vmem:[#allocation2 + $0x18] sm:$0xff]
    %v878 = vld [vmem:[%s4] sm:$0xff]
    %v879 = vld [vmem:[%s4 + $0x8] sm:$0xff]
    %v880 = vld [vmem:[%s4 + $0x10] sm:$0xff]
    %v881 = vld [vmem:[%s4 + $0x18] sm:$0xff]
    %883 = vset.pattern.permute.xlu0 0
    %884 = vperm.xlu0 %883, %v878
    %v885 = vpop.permute.xlu0 %884
    %888 = vset.pattern.permute.xlu0 0
    %889 = vperm.xlu0 %888, %v879
    %v890 = vpop.permute.xlu0 %889
    %893 = vset.pattern.permute.xlu0 0
    %894 = vperm.xlu0 %893, %v880
    %v895 = vpop.permute.xlu0 %894
    %898 = vset.pattern.permute.xlu0 0
    %899 = vperm.xlu0 %898, %v881
    %v900 = vpop.permute.xlu0 %899
    %vm902 = vcmask 261120
    %v904 = vsel %vm902, %v874, 0
    %v907 = vsel %vm902, %v875, 0
    %v910 = vsel %vm902, %v876, 0
    %v913 = vsel %vm902, %v877, 0
    %915 = vmatprep.subr.mxu0 0.0
    %916 = vmatpush1.msra.mxu0 0.0
    %917 = vmatprep.subr.mxu0 0.0
    %918 = vmatpush1.msra.mxu0 0.0
    %919 = vmatprep.subr.mxu0 0.0
    %920 = vmatpush1.msra.mxu0 0.0
    %921 = vmatprep.subr.mxu0 0.0
    %922 = vmatpush1.msra.mxu0 0.0
    %923 = vmatprep.subr.mxu0 0.0
    %924 = vmatpush1.msra.mxu0 0.0
    %925 = vmatprep.subr.mxu0 0.0
    %926 = vmatpush1.msra.mxu0 0.0
    %927 = vmatprep.subr.mxu0 0.0
    %928 = vmatpush1.msra.mxu0 0.0
    %929 = vmatprep.subr.mxu0 0.0
    %930 = vmatpush1.msra.mxu0 0.0
    %931 = vmatprep.subr.mxu0 0.0
    %932 = vmatpush1.msra.mxu0 0.0
    %933 = vmatprep.subr.mxu0 0.0
    %934 = vmatpush1.msra.mxu0 0.0
    %935 = vmatprep.subr.mxu0 0.0
    %936 = vmatpush1.msra.mxu0 0.0
    %937 = vmatprep.subr.mxu0 0.0
    %938 = vmatpush1.msra.mxu0 0.0
    %939 = vmatprep.subr.mxu0 %v859
    %940 = vmatpush1.msra.mxu0 %v858
    %941 = vmatprep.subr.mxu0 %v843
    %942 = vmatpush1.msra.mxu0 %v842
    %943 = vmatprep.subr.mxu0 %v827
    %944 = vmatpush1.msra.mxu0 %v826
    %945 = vmatprep.subr.mxu0 %v811
    %946 = vmatpush1.msra.mxu0 %v810
    %947 = vmatprep.subr.mxu0 0.0
    %948 = vmatpush2.msra.mxu0 0.0
    %949 = vmatprep.subr.mxu0 0.0
    %950 = vmatpush2.msra.mxu0 0.0
    %951 = vmatprep.subr.mxu0 0.0
    %952 = vmatpush2.msra.mxu0 0.0
    %953 = vmatprep.subr.mxu0 0.0
    %954 = vmatpush2.msra.mxu0 0.0
    %955 = vmatprep.subr.mxu0 0.0
    %956 = vmatpush2.msra.mxu0 0.0
    %957 = vmatprep.subr.mxu0 0.0
    %958 = vmatpush2.msra.mxu0 0.0
    %959 = vmatprep.subr.mxu0 0.0
    %960 = vmatpush2.msra.mxu0 0.0
    %961 = vmatprep.subr.mxu0 0.0
    %962 = vmatpush2.msra.mxu0 0.0
    %963 = vmatprep.subr.mxu0 0.0
    %964 = vmatpush2.msra.mxu0 0.0
    %965 = vmatprep.subr.mxu0 0.0
    %966 = vmatpush2.msra.mxu0 0.0
    %967 = vmatprep.subr.mxu0 0.0
    %968 = vmatpush2.msra.mxu0 0.0
    %969 = vmatprep.subr.mxu0 0.0
    %970 = vmatpush2.msra.mxu0 0.0
    %971 = vmatprep.subr.mxu0 0.0
    %972 = vmatpush2.msra.mxu0 0.0
    %973 = vmatprep.subr.mxu0 0.0
    %974 = vmatpush2.msra.mxu0 0.0
    %975 = vmatprep.subr.mxu0 0.0
    %976 = vmatpush2.msra.mxu0 0.0
    %977 = vmatprep.subr.mxu0 0.0
    %978 = vmatpush2.msra.mxu0 0.0
    %979 = vmatprep.mubr.f32.mxu0 0.0
    %980 = vmatmul.mubr.f32.gmra.mxu0 %v904
    %v981 = vpop.f32.mrf.mxu0
    %v982 = vadd.f32 %v885, %v981
    %v983 = vpop.f32.mrf.mxu0
    %v984 = vadd.f32 %v885, %v983
    %985 = vmatprep.mubr.f32.mxu0 0.0
    %986 = vmatmul.mubr.f32.gmra.mxu0 %v907
    %v987 = vpop.f32.mrf.mxu0
    %v988 = vadd.f32 %v890, %v987
    %v989 = vpop.f32.mrf.mxu0
    %v990 = vadd.f32 %v890, %v989
    %991 = vmatprep.mubr.f32.mxu0 0.0
    %992 = vmatmul.mubr.f32.gmra.mxu0 %v910
    %v993 = vpop.f32.mrf.mxu0
    %v994 = vadd.f32 %v895, %v993
    %v995 = vpop.f32.mrf.mxu0
    %v996 = vadd.f32 %v895, %v995
    %997 = vmatprep.mubr.f32.mxu0 0.0
    %998 = vmatmul.mubr.f32.gmra.mxu0 %v913
    %v999 = vpop.f32.mrf.mxu0
    %v1000 = vadd.f32 %v900, %v999
    %v1001 = vpop.f32.mrf.mxu0
    %v1002 = vadd.f32 %v900, %v1001
    %1003 = vdwg.mxu0
    %1004 = vmatprep.subr.mxu0 0.0
    %1005 = vmatpush1.msra.mxu0 0.0
    %1006 = vmatprep.subr.mxu0 0.0
    %1007 = vmatpush1.msra.mxu0 0.0
    %1008 = vmatprep.subr.mxu0 0.0
    %1009 = vmatpush1.msra.mxu0 0.0
    %1010 = vmatprep.subr.mxu0 0.0
    %1011 = vmatpush1.msra.mxu0 0.0
    %1012 = vmatprep.subr.mxu0 0.0
    %1013 = vmatpush1.msra.mxu0 0.0
    %1014 = vmatprep.subr.mxu0 0.0
    %1015 = vmatpush1.msra.mxu0 0.0
    %1016 = vmatprep.subr.mxu0 0.0
    %1017 = vmatpush1.msra.mxu0 0.0
    %1018 = vmatprep.subr.mxu0 0.0
    %1019 = vmatpush1.msra.mxu0 0.0
    %1020 = vmatprep.subr.mxu0 0.0
    %1021 = vmatpush1.msra.mxu0 0.0
    %1022 = vmatprep.subr.mxu0 0.0
    %1023 = vmatpush1.msra.mxu0 0.0
    %1024 = vmatprep.subr.mxu0 0.0
    %1025 = vmatpush1.msra.mxu0 0.0
    %1026 = vmatprep.subr.mxu0 0.0
    %1027 = vmatpush1.msra.mxu0 0.0
    %1028 = vmatprep.subr.mxu0 %v861
    %1029 = vmatpush1.msra.mxu0 %v860
    %1030 = vmatprep.subr.mxu0 %v845
    %1031 = vmatpush1.msra.mxu0 %v844
    %1032 = vmatprep.subr.mxu0 %v829
    %1033 = vmatpush1.msra.mxu0 %v828
    %1034 = vmatprep.subr.mxu0 %v813
    %1035 = vmatpush1.msra.mxu0 %v812
    %1036 = vmatprep.subr.mxu0 0.0
    %1037 = vmatpush2.msra.mxu0 0.0
    %1038 = vmatprep.subr.mxu0 0.0
    %1039 = vmatpush2.msra.mxu0 0.0
    %1040 = vmatprep.subr.mxu0 0.0
    %1041 = vmatpush2.msra.mxu0 0.0
    %1042 = vmatprep.subr.mxu0 0.0
    %1043 = vmatpush2.msra.mxu0 0.0
    %1044 = vmatprep.subr.mxu0 0.0
    %1045 = vmatpush2.msra.mxu0 0.0
    %1046 = vmatprep.subr.mxu0 0.0
    %1047 = vmatpush2.msra.mxu0 0.0
    %1048 = vmatprep.subr.mxu0 0.0
    %1049 = vmatpush2.msra.mxu0 0.0
    %1050 = vmatprep.subr.mxu0 0.0
    %1051 = vmatpush2.msra.mxu0 0.0
    %1052 = vmatprep.subr.mxu0 0.0
    %1053 = vmatpush2.msra.mxu0 0.0
    %1054 = vmatprep.subr.mxu0 0.0
    %1055 = vmatpush2.msra.mxu0 0.0
    %1056 = vmatprep.subr.mxu0 0.0
    %1057 = vmatpush2.msra.mxu0 0.0
    %1058 = vmatprep.subr.mxu0 0.0
    %1059 = vmatpush2.msra.mxu0 0.0
    %1060 = vmatprep.subr.mxu0 0.0
    %1061 = vmatpush2.msra.mxu0 0.0
    %1062 = vmatprep.subr.mxu0 0.0
    %1063 = vmatpush2.msra.mxu0 0.0
    %1064 = vmatprep.subr.mxu0 0.0
    %1065 = vmatpush2.msra.mxu0 0.0
    %1066 = vmatprep.subr.mxu0 0.0
    %1067 = vmatpush2.msra.mxu0 0.0
    %1068 = vmatprep.mubr.f32.mxu0 0.0
    %1069 = vmatmul.mubr.f32.gmra.mxu0 %v904
    %v1070 = vpop.f32.mrf.mxu0
    %v1071 = vadd.f32 %v885, %v1070
    %v1072 = vpop.f32.mrf.mxu0
    %v1073 = vadd.f32 %v885, %v1072
    %1074 = vmatprep.mubr.f32.mxu0 0.0
    %1075 = vmatmul.mubr.f32.gmra.mxu0 %v907
    %v1076 = vpop.f32.mrf.mxu0
    %v1077 = vadd.f32 %v890, %v1076
    %v1078 = vpop.f32.mrf.mxu0
    %v1079 = vadd.f32 %v890, %v1078
    %1080 = vmatprep.mubr.f32.mxu0 0.0
    %1081 = vmatmul.mubr.f32.gmra.mxu0 %v910
    %v1082 = vpop.f32.mrf.mxu0
    %v1083 = vadd.f32 %v895, %v1082
    %v1084 = vpop.f32.mrf.mxu0
    %v1085 = vadd.f32 %v895, %v1084
    %1086 = vmatprep.mubr.f32.mxu0 0.0
    %1087 = vmatmul.mubr.f32.gmra.mxu0 %v913
    %v1088 = vpop.f32.mrf.mxu0
    %v1089 = vadd.f32 %v900, %v1088
    %v1090 = vpop.f32.mrf.mxu0
    %v1091 = vadd.f32 %v900, %v1090
    %1092 = vdwg.mxu0
    %1093 = vmatprep.subr.mxu0 0.0
    %1094 = vmatpush1.msra.mxu0 0.0
    %1095 = vmatprep.subr.mxu0 0.0
    %1096 = vmatpush1.msra.mxu0 0.0
    %1097 = vmatprep.subr.mxu0 0.0
    %1098 = vmatpush1.msra.mxu0 0.0
    %1099 = vmatprep.subr.mxu0 0.0
    %1100 = vmatpush1.msra.mxu0 0.0
    %1101 = vmatprep.subr.mxu0 0.0
    %1102 = vmatpush1.msra.mxu0 0.0
    %1103 = vmatprep.subr.mxu0 0.0
    %1104 = vmatpush1.msra.mxu0 0.0
    %1105 = vmatprep.subr.mxu0 0.0
    %1106 = vmatpush1.msra.mxu0 0.0
    %1107 = vmatprep.subr.mxu0 0.0
    %1108 = vmatpush1.msra.mxu0 0.0
    %1109 = vmatprep.subr.mxu0 0.0
    %1110 = vmatpush1.msra.mxu0 0.0
    %1111 = vmatprep.subr.mxu0 0.0
    %1112 = vmatpush1.msra.mxu0 0.0
    %1113 = vmatprep.subr.mxu0 0.0
    %1114 = vmatpush1.msra.mxu0 0.0
    %1115 = vmatprep.subr.mxu0 0.0
    %1116 = vmatpush1.msra.mxu0 0.0
    %1117 = vmatprep.subr.mxu0 %v863
    %1118 = vmatpush1.msra.mxu0 %v862
    %1119 = vmatprep.subr.mxu0 %v847
    %1120 = vmatpush1.msra.mxu0 %v846
    %1121 = vmatprep.subr.mxu0 %v831
    %1122 = vmatpush1.msra.mxu0 %v830
    %1123 = vmatprep.subr.mxu0 %v815
    %1124 = vmatpush1.msra.mxu0 %v814
    %1125 = vmatprep.subr.mxu0 0.0
    %1126 = vmatpush2.msra.mxu0 0.0
    %1127 = vmatprep.subr.mxu0 0.0
    %1128 = vmatpush2.msra.mxu0 0.0
    %1129 = vmatprep.subr.mxu0 0.0
    %1130 = vmatpush2.msra.mxu0 0.0
    %1131 = vmatprep.subr.mxu0 0.0
    %1132 = vmatpush2.msra.mxu0 0.0
    %1133 = vmatprep.subr.mxu0 0.0
    %1134 = vmatpush2.msra.mxu0 0.0
    %1135 = vmatprep.subr.mxu0 0.0
    %1136 = vmatpush2.msra.mxu0 0.0
    %1137 = vmatprep.subr.mxu0 0.0
    %1138 = vmatpush2.msra.mxu0 0.0
    %1139 = vmatprep.subr.mxu0 0.0
    %1140 = vmatpush2.msra.mxu0 0.0
    %1141 = vmatprep.subr.mxu0 0.0
    %1142 = vmatpush2.msra.mxu0 0.0
    %1143 = vmatprep.subr.mxu0 0.0
    %1144 = vmatpush2.msra.mxu0 0.0
    %1145 = vmatprep.subr.mxu0 0.0
    %1146 = vmatpush2.msra.mxu0 0.0
    %1147 = vmatprep.subr.mxu0 0.0
    %1148 = vmatpush2.msra.mxu0 0.0
    %1149 = vmatprep.subr.mxu0 0.0
    %1150 = vmatpush2.msra.mxu0 0.0
    %1151 = vmatprep.subr.mxu0 0.0
    %1152 = vmatpush2.msra.mxu0 0.0
    %1153 = vmatprep.subr.mxu0 0.0
    %1154 = vmatpush2.msra.mxu0 0.0
    %1155 = vmatprep.subr.mxu0 0.0
    %1156 = vmatpush2.msra.mxu0 0.0
    %1157 = vmatprep.mubr.f32.mxu0 0.0
    %1158 = vmatmul.mubr.f32.gmra.mxu0 %v904
    %v1159 = vpop.f32.mrf.mxu0
    %v1160 = vadd.f32 %v885, %v1159
    %v1161 = vpop.f32.mrf.mxu0
    %v1162 = vadd.f32 %v885, %v1161
    %1163 = vmatprep.mubr.f32.mxu0 0.0
    %1164 = vmatmul.mubr.f32.gmra.mxu0 %v907
    %v1165 = vpop.f32.mrf.mxu0
    %v1166 = vadd.f32 %v890, %v1165
    %v1167 = vpop.f32.mrf.mxu0
    %v1168 = vadd.f32 %v890, %v1167
    %1169 = vmatprep.mubr.f32.mxu0 0.0
    %1170 = vmatmul.mubr.f32.gmra.mxu0 %v910
    %v1171 = vpop.f32.mrf.mxu0
    %v1172 = vadd.f32 %v895, %v1171
    %v1173 = vpop.f32.mrf.mxu0
    %v1174 = vadd.f32 %v895, %v1173
    %1175 = vmatprep.mubr.f32.mxu0 0.0
    %1176 = vmatmul.mubr.f32.gmra.mxu0 %v913
    %v1177 = vpop.f32.mrf.mxu0
    %v1178 = vadd.f32 %v900, %v1177
    %v1179 = vpop.f32.mrf.mxu0
    %v1180 = vadd.f32 %v900, %v1179
    %1181 = vdwg.mxu0
    %1182 = vmatprep.subr.mxu0 0.0
    %1183 = vmatpush1.msra.mxu0 0.0
    %1184 = vmatprep.subr.mxu0 0.0
    %1185 = vmatpush1.msra.mxu0 0.0
    %1186 = vmatprep.subr.mxu0 0.0
    %1187 = vmatpush1.msra.mxu0 0.0
    %1188 = vmatprep.subr.mxu0 0.0
    %1189 = vmatpush1.msra.mxu0 0.0
    %1190 = vmatprep.subr.mxu0 0.0
    %1191 = vmatpush1.msra.mxu0 0.0
    %1192 = vmatprep.subr.mxu0 0.0
    %1193 = vmatpush1.msra.mxu0 0.0
    %1194 = vmatprep.subr.mxu0 0.0
    %1195 = vmatpush1.msra.mxu0 0.0
    %1196 = vmatprep.subr.mxu0 0.0
    %1197 = vmatpush1.msra.mxu0 0.0
    %1198 = vmatprep.subr.mxu0 0.0
    %1199 = vmatpush1.msra.mxu0 0.0
    %1200 = vmatprep.subr.mxu0 0.0
    %1201 = vmatpush1.msra.mxu0 0.0
    %1202 = vmatprep.subr.mxu0 0.0
    %1203 = vmatpush1.msra.mxu0 0.0
    %1204 = vmatprep.subr.mxu0 0.0
    %1205 = vmatpush1.msra.mxu0 0.0
    %1206 = vmatprep.subr.mxu0 %v865
    %1207 = vmatpush1.msra.mxu0 %v864
    %1208 = vmatprep.subr.mxu0 %v849
    %1209 = vmatpush1.msra.mxu0 %v848
    %1210 = vmatprep.subr.mxu0 %v833
    %1211 = vmatpush1.msra.mxu0 %v832
    %1212 = vmatprep.subr.mxu0 %v817
    %1213 = vmatpush1.msra.mxu0 %v816
    %1214 = vmatprep.subr.mxu0 0.0
    %1215 = vmatpush2.msra.mxu0 0.0
    %1216 = vmatprep.subr.mxu0 0.0
    %1217 = vmatpush2.msra.mxu0 0.0
    %1218 = vmatprep.subr.mxu0 0.0
    %1219 = vmatpush2.msra.mxu0 0.0
    %1220 = vmatprep.subr.mxu0 0.0
    %1221 = vmatpush2.msra.mxu0 0.0
    %1222 = vmatprep.subr.mxu0 0.0
    %1223 = vmatpush2.msra.mxu0 0.0
    %1224 = vmatprep.subr.mxu0 0.0
    %1225 = vmatpush2.msra.mxu0 0.0
    %1226 = vmatprep.subr.mxu0 0.0
    %1227 = vmatpush2.msra.mxu0 0.0
    %1228 = vmatprep.subr.mxu0 0.0
    %1229 = vmatpush2.msra.mxu0 0.0
    %1230 = vmatprep.subr.mxu0 0.0
    %1231 = vmatpush2.msra.mxu0 0.0
    %1232 = vmatprep.subr.mxu0 0.0
    %1233 = vmatpush2.msra.mxu0 0.0
    %1234 = vmatprep.subr.mxu0 0.0
    %1235 = vmatpush2.msra.mxu0 0.0
    %1236 = vmatprep.subr.mxu0 0.0
    %1237 = vmatpush2.msra.mxu0 0.0
    %1238 = vmatprep.subr.mxu0 0.0
    %1239 = vmatpush2.msra.mxu0 0.0
    %1240 = vmatprep.subr.mxu0 0.0
    %1241 = vmatpush2.msra.mxu0 0.0
    %1242 = vmatprep.subr.mxu0 0.0
    %1243 = vmatpush2.msra.mxu0 0.0
    %1244 = vmatprep.subr.mxu0 0.0
    %1245 = vmatpush2.msra.mxu0 0.0
    %1246 = vmatprep.mubr.f32.mxu0 0.0
    %1247 = vmatmul.mubr.f32.gmra.mxu0 %v904
    %v1248 = vpop.f32.mrf.mxu0
    %v1249 = vadd.f32 %v885, %v1248
    %v1250 = vpop.f32.mrf.mxu0
    %v1251 = vadd.f32 %v885, %v1250
    %1252 = vmatprep.mubr.f32.mxu0 0.0
    %1253 = vmatmul.mubr.f32.gmra.mxu0 %v907
    %v1254 = vpop.f32.mrf.mxu0
    %v1255 = vadd.f32 %v890, %v1254
    %v1256 = vpop.f32.mrf.mxu0
    %v1257 = vadd.f32 %v890, %v1256
    %1258 = vmatprep.mubr.f32.mxu0 0.0
    %1259 = vmatmul.mubr.f32.gmra.mxu0 %v910
    %v1260 = vpop.f32.mrf.mxu0
    %v1261 = vadd.f32 %v895, %v1260
    %v1262 = vpop.f32.mrf.mxu0
    %v1263 = vadd.f32 %v895, %v1262
    %1264 = vmatprep.mubr.f32.mxu0 0.0
    %1265 = vmatmul.mubr.f32.gmra.mxu0 %v913
    %v1266 = vpop.f32.mrf.mxu0
    %v1267 = vadd.f32 %v900, %v1266
    %v1268 = vpop.f32.mrf.mxu0
    %v1269 = vadd.f32 %v900, %v1268
    %1270 = vdwg.mxu0
    %1271 = vmatprep.subr.mxu0 0.0
    %1272 = vmatpush1.msra.mxu0 0.0
    %1273 = vmatprep.subr.mxu0 0.0
    %1274 = vmatpush1.msra.mxu0 0.0
    %1275 = vmatprep.subr.mxu0 0.0
    %1276 = vmatpush1.msra.mxu0 0.0
    %1277 = vmatprep.subr.mxu0 0.0
    %1278 = vmatpush1.msra.mxu0 0.0
    %1279 = vmatprep.subr.mxu0 0.0
    %1280 = vmatpush1.msra.mxu0 0.0
    %1281 = vmatprep.subr.mxu0 0.0
    %1282 = vmatpush1.msra.mxu0 0.0
    %1283 = vmatprep.subr.mxu0 0.0
    %1284 = vmatpush1.msra.mxu0 0.0
    %1285 = vmatprep.subr.mxu0 0.0
    %1286 = vmatpush1.msra.mxu0 0.0
    %1287 = vmatprep.subr.mxu0 0.0
    %1288 = vmatpush1.msra.mxu0 0.0
    %1289 = vmatprep.subr.mxu0 0.0
    %1290 = vmatpush1.msra.mxu0 0.0
    %1291 = vmatprep.subr.mxu0 0.0
    %1292 = vmatpush1.msra.mxu0 0.0
    %1293 = vmatprep.subr.mxu0 0.0
    %1294 = vmatpush1.msra.mxu0 0.0
    %1295 = vmatprep.subr.mxu0 %v867
    %1296 = vmatpush1.msra.mxu0 %v866
    %1297 = vmatprep.subr.mxu0 %v851
    %1298 = vmatpush1.msra.mxu0 %v850
    %1299 = vmatprep.subr.mxu0 %v835
    %1300 = vmatpush1.msra.mxu0 %v834
    %1301 = vmatprep.subr.mxu0 %v819
    %1302 = vmatpush1.msra.mxu0 %v818
    %1303 = vmatprep.subr.mxu0 0.0
    %1304 = vmatpush2.msra.mxu0 0.0
    %1305 = vmatprep.subr.mxu0 0.0
    %1306 = vmatpush2.msra.mxu0 0.0
    %1307 = vmatprep.subr.mxu0 0.0
    %1308 = vmatpush2.msra.mxu0 0.0
    %1309 = vmatprep.subr.mxu0 0.0
    %1310 = vmatpush2.msra.mxu0 0.0
    %1311 = vmatprep.subr.mxu0 0.0
    %1312 = vmatpush2.msra.mxu0 0.0
    %1313 = vmatprep.subr.mxu0 0.0
    %1314 = vmatpush2.msra.mxu0 0.0
    %1315 = vmatprep.subr.mxu0 0.0
    %1316 = vmatpush2.msra.mxu0 0.0
    %1317 = vmatprep.subr.mxu0 0.0
    %1318 = vmatpush2.msra.mxu0 0.0
    %1319 = vmatprep.subr.mxu0 0.0
    %1320 = vmatpush2.msra.mxu0 0.0
    %1321 = vmatprep.subr.mxu0 0.0
    %1322 = vmatpush2.msra.mxu0 0.0
    %1323 = vmatprep.subr.mxu0 0.0
    %1324 = vmatpush2.msra.mxu0 0.0
    %1325 = vmatprep.subr.mxu0 0.0
    %1326 = vmatpush2.msra.mxu0 0.0
    %1327 = vmatprep.subr.mxu0 0.0
    %1328 = vmatpush2.msra.mxu0 0.0
    %1329 = vmatprep.subr.mxu0 0.0
    %1330 = vmatpush2.msra.mxu0 0.0
    %1331 = vmatprep.subr.mxu0 0.0
    %1332 = vmatpush2.msra.mxu0 0.0
    %1333 = vmatprep.subr.mxu0 0.0
    %1334 = vmatpush2.msra.mxu0 0.0
    %1335 = vmatprep.mubr.f32.mxu0 0.0
    %1336 = vmatmul.mubr.f32.gmra.mxu0 %v904
    %v1337 = vpop.f32.mrf.mxu0
    %v1338 = vadd.f32 %v885, %v1337
    %v1339 = vpop.f32.mrf.mxu0
    %v1340 = vadd.f32 %v885, %v1339
    %1341 = vmatprep.mubr.f32.mxu0 0.0
    %1342 = vmatmul.mubr.f32.gmra.mxu0 %v907
    %v1343 = vpop.f32.mrf.mxu0
    %v1344 = vadd.f32 %v890, %v1343
    %v1345 = vpop.f32.mrf.mxu0
    %v1346 = vadd.f32 %v890, %v1345
    %1347 = vmatprep.mubr.f32.mxu0 0.0
    %1348 = vmatmul.mubr.f32.gmra.mxu0 %v910
    %v1349 = vpop.f32.mrf.mxu0
    %v1350 = vadd.f32 %v895, %v1349
    %v1351 = vpop.f32.mrf.mxu0
    %v1352 = vadd.f32 %v895, %v1351
    %1353 = vmatprep.mubr.f32.mxu0 0.0
    %1354 = vmatmul.mubr.f32.gmra.mxu0 %v913
    %v1355 = vpop.f32.mrf.mxu0
    %v1356 = vadd.f32 %v900, %v1355
    %v1357 = vpop.f32.mrf.mxu0
    %v1358 = vadd.f32 %v900, %v1357
    %1359 = vdwg.mxu0
    %1360 = vmatprep.subr.mxu0 0.0
    %1361 = vmatpush1.msra.mxu0 0.0
    %1362 = vmatprep.subr.mxu0 0.0
    %1363 = vmatpush1.msra.mxu0 0.0
    %1364 = vmatprep.subr.mxu0 0.0
    %1365 = vmatpush1.msra.mxu0 0.0
    %1366 = vmatprep.subr.mxu0 0.0
    %1367 = vmatpush1.msra.mxu0 0.0
    %1368 = vmatprep.subr.mxu0 0.0
    %1369 = vmatpush1.msra.mxu0 0.0
    %1370 = vmatprep.subr.mxu0 0.0
    %1371 = vmatpush1.msra.mxu0 0.0
    %1372 = vmatprep.subr.mxu0 0.0
    %1373 = vmatpush1.msra.mxu0 0.0
    %1374 = vmatprep.subr.mxu0 0.0
    %1375 = vmatpush1.msra.mxu0 0.0
    %1376 = vmatprep.subr.mxu0 0.0
    %1377 = vmatpush1.msra.mxu0 0.0
    %1378 = vmatprep.subr.mxu0 0.0
    %1379 = vmatpush1.msra.mxu0 0.0
    %1380 = vmatprep.subr.mxu0 0.0
    %1381 = vmatpush1.msra.mxu0 0.0
    %1382 = vmatprep.subr.mxu0 0.0
    %1383 = vmatpush1.msra.mxu0 0.0
    %1384 = vmatprep.subr.mxu0 %v869
    %1385 = vmatpush1.msra.mxu0 %v868
    %1386 = vmatprep.subr.mxu0 %v853
    %1387 = vmatpush1.msra.mxu0 %v852
    %1388 = vmatprep.subr.mxu0 %v837
    %1389 = vmatpush1.msra.mxu0 %v836
    %1390 = vmatprep.subr.mxu0 %v821
    %1391 = vmatpush1.msra.mxu0 %v820
    %1392 = vmatprep.subr.mxu0 0.0
    %1393 = vmatpush2.msra.mxu0 0.0
    %1394 = vmatprep.subr.mxu0 0.0
    %1395 = vmatpush2.msra.mxu0 0.0
    %1396 = vmatprep.subr.mxu0 0.0
    %1397 = vmatpush2.msra.mxu0 0.0
    %1398 = vmatprep.subr.mxu0 0.0
    %1399 = vmatpush2.msra.mxu0 0.0
    %1400 = vmatprep.subr.mxu0 0.0
    %1401 = vmatpush2.msra.mxu0 0.0
    %1402 = vmatprep.subr.mxu0 0.0
    %1403 = vmatpush2.msra.mxu0 0.0
    %1404 = vmatprep.subr.mxu0 0.0
    %1405 = vmatpush2.msra.mxu0 0.0
    %1406 = vmatprep.subr.mxu0 0.0
    %1407 = vmatpush2.msra.mxu0 0.0
    %1408 = vmatprep.subr.mxu0 0.0
    %1409 = vmatpush2.msra.mxu0 0.0
    %1410 = vmatprep.subr.mxu0 0.0
    %1411 = vmatpush2.msra.mxu0 0.0
    %1412 = vmatprep.subr.mxu0 0.0
    %1413 = vmatpush2.msra.mxu0 0.0
    %1414 = vmatprep.subr.mxu0 0.0
    %1415 = vmatpush2.msra.mxu0 0.0
    %1416 = vmatprep.subr.mxu0 0.0
    %1417 = vmatpush2.msra.mxu0 0.0
    %1418 = vmatprep.subr.mxu0 0.0
    %1419 = vmatpush2.msra.mxu0 0.0
    %1420 = vmatprep.subr.mxu0 0.0
    %1421 = vmatpush2.msra.mxu0 0.0
    %1422 = vmatprep.subr.mxu0 0.0
    %1423 = vmatpush2.msra.mxu0 0.0
    %1424 = vmatprep.mubr.f32.mxu0 0.0
    %1425 = vmatmul.mubr.f32.gmra.mxu0 %v904
    %v1426 = vpop.f32.mrf.mxu0
    %v1427 = vadd.f32 %v885, %v1426
    %v1428 = vpop.f32.mrf.mxu0
    %v1429 = vadd.f32 %v885, %v1428
    %1430 = vmatprep.mubr.f32.mxu0 0.0
    %1431 = vmatmul.mubr.f32.gmra.mxu0 %v907
    %v1432 = vpop.f32.mrf.mxu0
    %v1433 = vadd.f32 %v890, %v1432
    %v1434 = vpop.f32.mrf.mxu0
    %v1435 = vadd.f32 %v890, %v1434
    %1436 = vmatprep.mubr.f32.mxu0 0.0
    %1437 = vmatmul.mubr.f32.gmra.mxu0 %v910
    %v1438 = vpop.f32.mrf.mxu0
    %v1439 = vadd.f32 %v895, %v1438
    %v1440 = vpop.f32.mrf.mxu0
    %v1441 = vadd.f32 %v895, %v1440
    %1442 = vmatprep.mubr.f32.mxu0 0.0
    %1443 = vmatmul.mubr.f32.gmra.mxu0 %v913
    %v1444 = vpop.f32.mrf.mxu0
    %v1445 = vadd.f32 %v900, %v1444
    %v1446 = vpop.f32.mrf.mxu0
    %v1447 = vadd.f32 %v900, %v1446
    %1448 = vdwg.mxu0
    %1449 = vmatprep.subr.mxu0 0.0
    %1450 = vmatpush1.msra.mxu0 0.0
    %1451 = vmatprep.subr.mxu0 0.0
    %1452 = vmatpush1.msra.mxu0 0.0
    %1453 = vmatprep.subr.mxu0 0.0
    %1454 = vmatpush1.msra.mxu0 0.0
    %1455 = vmatprep.subr.mxu0 0.0
    %1456 = vmatpush1.msra.mxu0 0.0
    %1457 = vmatprep.subr.mxu0 0.0
    %1458 = vmatpush1.msra.mxu0 0.0
    %1459 = vmatprep.subr.mxu0 0.0
    %1460 = vmatpush1.msra.mxu0 0.0
    %1461 = vmatprep.subr.mxu0 0.0
    %1462 = vmatpush1.msra.mxu0 0.0
    %1463 = vmatprep.subr.mxu0 0.0
    %1464 = vmatpush1.msra.mxu0 0.0
    %1465 = vmatprep.subr.mxu0 0.0
    %1466 = vmatpush1.msra.mxu0 0.0
    %1467 = vmatprep.subr.mxu0 0.0
    %1468 = vmatpush1.msra.mxu0 0.0
    %1469 = vmatprep.subr.mxu0 0.0
    %1470 = vmatpush1.msra.mxu0 0.0
    %1471 = vmatprep.subr.mxu0 0.0
    %1472 = vmatpush1.msra.mxu0 0.0
    %1473 = vmatprep.subr.mxu0 %v871
    %1474 = vmatpush1.msra.mxu0 %v870
    %1475 = vmatprep.subr.mxu0 %v855
    %1476 = vmatpush1.msra.mxu0 %v854
    %1477 = vmatprep.subr.mxu0 %v839
    %1478 = vmatpush1.msra.mxu0 %v838
    %1479 = vmatprep.subr.mxu0 %v823
    %1480 = vmatpush1.msra.mxu0 %v822
    %1481 = vmatprep.subr.mxu0 0.0
    %1482 = vmatpush2.msra.mxu0 0.0
    %1483 = vmatprep.subr.mxu0 0.0
    %1484 = vmatpush2.msra.mxu0 0.0
    %1485 = vmatprep.subr.mxu0 0.0
    %1486 = vmatpush2.msra.mxu0 0.0
    %1487 = vmatprep.subr.mxu0 0.0
    %1488 = vmatpush2.msra.mxu0 0.0
    %1489 = vmatprep.subr.mxu0 0.0
    %1490 = vmatpush2.msra.mxu0 0.0
    %1491 = vmatprep.subr.mxu0 0.0
    %1492 = vmatpush2.msra.mxu0 0.0
    %1493 = vmatprep.subr.mxu0 0.0
    %1494 = vmatpush2.msra.mxu0 0.0
    %1495 = vmatprep.subr.mxu0 0.0
    %1496 = vmatpush2.msra.mxu0 0.0
    %1497 = vmatprep.subr.mxu0 0.0
    %1498 = vmatpush2.msra.mxu0 0.0
    %1499 = vmatprep.subr.mxu0 0.0
    %1500 = vmatpush2.msra.mxu0 0.0
    %1501 = vmatprep.subr.mxu0 0.0
    %1502 = vmatpush2.msra.mxu0 0.0
    %1503 = vmatprep.subr.mxu0 0.0
    %1504 = vmatpush2.msra.mxu0 0.0
    %1505 = vmatprep.subr.mxu0 0.0
    %1506 = vmatpush2.msra.mxu0 0.0
    %1507 = vmatprep.subr.mxu0 0.0
    %1508 = vmatpush2.msra.mxu0 0.0
    %1509 = vmatprep.subr.mxu0 0.0
    %1510 = vmatpush2.msra.mxu0 0.0
    %1511 = vmatprep.subr.mxu0 0.0
    %1512 = vmatpush2.msra.mxu0 0.0
    %1513 = vmatprep.mubr.f32.mxu0 0.0
    %1514 = vmatmul.mubr.f32.gmra.mxu0 %v904
    %v1515 = vpop.f32.mrf.mxu0
    %v1516 = vadd.f32 %v885, %v1515
    %v1517 = vpop.f32.mrf.mxu0
    %v1518 = vadd.f32 %v885, %v1517
    %1519 = vmatprep.mubr.f32.mxu0 0.0
    %1520 = vmatmul.mubr.f32.gmra.mxu0 %v907
    %v1521 = vpop.f32.mrf.mxu0
    %v1522 = vadd.f32 %v890, %v1521
    %v1523 = vpop.f32.mrf.mxu0
    %v1524 = vadd.f32 %v890, %v1523
    %1525 = vmatprep.mubr.f32.mxu0 0.0
    %1526 = vmatmul.mubr.f32.gmra.mxu0 %v910
    %v1527 = vpop.f32.mrf.mxu0
    %v1528 = vadd.f32 %v895, %v1527
    %v1529 = vpop.f32.mrf.mxu0
    %v1530 = vadd.f32 %v895, %v1529
    %1531 = vmatprep.mubr.f32.mxu0 0.0
    %1532 = vmatmul.mubr.f32.gmra.mxu0 %v913
    %v1533 = vpop.f32.mrf.mxu0
    %v1534 = vadd.f32 %v900, %v1533
    %v1535 = vpop.f32.mrf.mxu0
    %v1536 = vadd.f32 %v900, %v1535
    %1537 = vdwg.mxu0
    %1538 = vmatprep.subr.mxu0 0.0
    %1539 = vmatpush1.msra.mxu0 0.0
    %1540 = vmatprep.subr.mxu0 0.0
    %1541 = vmatpush1.msra.mxu0 0.0
    %1542 = vmatprep.subr.mxu0 0.0
    %1543 = vmatpush1.msra.mxu0 0.0
    %1544 = vmatprep.subr.mxu0 0.0
    %1545 = vmatpush1.msra.mxu0 0.0
    %1546 = vmatprep.subr.mxu0 0.0
    %1547 = vmatpush1.msra.mxu0 0.0
    %1548 = vmatprep.subr.mxu0 0.0
    %1549 = vmatpush1.msra.mxu0 0.0
    %1550 = vmatprep.subr.mxu0 0.0
    %1551 = vmatpush1.msra.mxu0 0.0
    %1552 = vmatprep.subr.mxu0 0.0
    %1553 = vmatpush1.msra.mxu0 0.0
    %1554 = vmatprep.subr.mxu0 0.0
    %1555 = vmatpush1.msra.mxu0 0.0
    %1556 = vmatprep.subr.mxu0 0.0
    %1557 = vmatpush1.msra.mxu0 0.0
    %1558 = vmatprep.subr.mxu0 0.0
    %1559 = vmatpush1.msra.mxu0 0.0
    %1560 = vmatprep.subr.mxu0 0.0
    %1561 = vmatpush1.msra.mxu0 0.0
    %1562 = vmatprep.subr.mxu0 %v873
    %1563 = vmatpush1.msra.mxu0 %v872
    %1564 = vmatprep.subr.mxu0 %v857
    %1565 = vmatpush1.msra.mxu0 %v856
    %1566 = vmatprep.subr.mxu0 %v841
    %1567 = vmatpush1.msra.mxu0 %v840
    %1568 = vmatprep.subr.mxu0 %v825
    %1569 = vmatpush1.msra.mxu0 %v824
    %1570 = vmatprep.subr.mxu0 0.0
    %1571 = vmatpush2.msra.mxu0 0.0
    %1572 = vmatprep.subr.mxu0 0.0
    %1573 = vmatpush2.msra.mxu0 0.0
    %1574 = vmatprep.subr.mxu0 0.0
    %1575 = vmatpush2.msra.mxu0 0.0
    %1576 = vmatprep.subr.mxu0 0.0
    %1577 = vmatpush2.msra.mxu0 0.0
    %1578 = vmatprep.subr.mxu0 0.0
    %1579 = vmatpush2.msra.mxu0 0.0
    %1580 = vmatprep.subr.mxu0 0.0
    %1581 = vmatpush2.msra.mxu0 0.0
    %1582 = vmatprep.subr.mxu0 0.0
    %1583 = vmatpush2.msra.mxu0 0.0
    %1584 = vmatprep.subr.mxu0 0.0
    %1585 = vmatpush2.msra.mxu0 0.0
    %1586 = vmatprep.subr.mxu0 0.0
    %1587 = vmatpush2.msra.mxu0 0.0
    %1588 = vmatprep.subr.mxu0 0.0
    %1589 = vmatpush2.msra.mxu0 0.0
    %1590 = vmatprep.subr.mxu0 0.0
    %1591 = vmatpush2.msra.mxu0 0.0
    %1592 = vmatprep.subr.mxu0 0.0
    %1593 = vmatpush2.msra.mxu0 0.0
    %1594 = vmatprep.subr.mxu0 0.0
    %1595 = vmatpush2.msra.mxu0 0.0
    %1596 = vmatprep.subr.mxu0 0.0
    %1597 = vmatpush2.msra.mxu0 0.0
    %1598 = vmatprep.subr.mxu0 0.0
    %1599 = vmatpush2.msra.mxu0 0.0
    %1600 = vmatprep.subr.mxu0 0.0
    %1601 = vmatpush2.msra.mxu0 0.0
    %1602 = vmatprep.mubr.f32.mxu0 0.0
    %1603 = vmatmul.mubr.f32.gmra.mxu0 %v904
    %v1604 = vpop.f32.mrf.mxu0
    %v1605 = vadd.f32 %v885, %v1604
    %v1606 = vpop.f32.mrf.mxu0
    %v1607 = vadd.f32 %v885, %v1606
    %1608 = vmatprep.mubr.f32.mxu0 0.0
    %1609 = vmatmul.mubr.f32.gmra.mxu0 %v907
    %v1610 = vpop.f32.mrf.mxu0
    %v1611 = vadd.f32 %v890, %v1610
    %v1612 = vpop.f32.mrf.mxu0
    %v1613 = vadd.f32 %v890, %v1612
    %1614 = vmatprep.mubr.f32.mxu0 0.0
    %1615 = vmatmul.mubr.f32.gmra.mxu0 %v910
    %v1616 = vpop.f32.mrf.mxu0
    %v1617 = vadd.f32 %v895, %v1616
    %v1618 = vpop.f32.mrf.mxu0
    %v1619 = vadd.f32 %v895, %v1618
    %1620 = vmatprep.mubr.f32.mxu0 0.0
    %1621 = vmatmul.mubr.f32.gmra.mxu0 %v913
    %v1622 = vpop.f32.mrf.mxu0
    %v1623 = vadd.f32 %v900, %v1622
    %v1624 = vpop.f32.mrf.mxu0
    %v1625 = vadd.f32 %v900, %v1624
    %1626 = vdwg.mxu0
    %v1627 = vmax.f32 %v982, 0.0
    %v1628 = vmax.f32 %v984, 0.0
    %v1629 = vmax.f32 %v1071, 0.0
    %v1630 = vmax.f32 %v1073, 0.0
    %v1631 = vmax.f32 %v1160, 0.0
    %v1632 = vmax.f32 %v1162, 0.0
    %v1633 = vmax.f32 %v1249, 0.0
    %v1634 = vmax.f32 %v1251, 0.0
    %v1635 = vmax.f32 %v1338, 0.0
    %v1636 = vmax.f32 %v1340, 0.0
    %v1637 = vmax.f32 %v1427, 0.0
    %v1638 = vmax.f32 %v1429, 0.0
    %v1639 = vmax.f32 %v1516, 0.0
    %v1640 = vmax.f32 %v1518, 0.0
    %v1641 = vmax.f32 %v1605, 0.0
    %v1642 = vmax.f32 %v1607, 0.0
    %v1643 = vmax.f32 %v988, 0.0
    %v1644 = vmax.f32 %v990, 0.0
    %v1645 = vmax.f32 %v1077, 0.0
    %v1646 = vmax.f32 %v1079, 0.0
    %v1647 = vmax.f32 %v1166, 0.0
    %v1648 = vmax.f32 %v1168, 0.0
    %v1649 = vmax.f32 %v1255, 0.0
    %v1650 = vmax.f32 %v1257, 0.0
    %v1651 = vmax.f32 %v1344, 0.0
    %v1652 = vmax.f32 %v1346, 0.0
    %v1653 = vmax.f32 %v1433, 0.0
    %v1654 = vmax.f32 %v1435, 0.0
    %v1655 = vmax.f32 %v1522, 0.0
    %v1656 = vmax.f32 %v1524, 0.0
    %v1657 = vmax.f32 %v1611, 0.0
    %v1658 = vmax.f32 %v1613, 0.0
    %v1659 = vmax.f32 %v994, 0.0
    %v1660 = vmax.f32 %v996, 0.0
    %v1661 = vmax.f32 %v1083, 0.0
    %v1662 = vmax.f32 %v1085, 0.0
    %v1663 = vmax.f32 %v1172, 0.0
    %v1664 = vmax.f32 %v1174, 0.0
    %v1665 = vmax.f32 %v1261, 0.0
    %v1666 = vmax.f32 %v1263, 0.0
    %v1667 = vmax.f32 %v1350, 0.0
    %v1668 = vmax.f32 %v1352, 0.0
    %v1669 = vmax.f32 %v1439, 0.0
    %v1670 = vmax.f32 %v1441, 0.0
    %v1671 = vmax.f32 %v1528, 0.0
    %v1672 = vmax.f32 %v1530, 0.0
    %v1673 = vmax.f32 %v1617, 0.0
    %v1674 = vmax.f32 %v1619, 0.0
    %v1675 = vmax.f32 %v1000, 0.0
    %v1676 = vmax.f32 %v1002, 0.0
    %v1677 = vmax.f32 %v1089, 0.0
    %v1678 = vmax.f32 %v1091, 0.0
    %v1679 = vmax.f32 %v1178, 0.0
    %v1680 = vmax.f32 %v1180, 0.0
    %v1681 = vmax.f32 %v1267, 0.0
    %v1682 = vmax.f32 %v1269, 0.0
    %v1683 = vmax.f32 %v1356, 0.0
    %v1684 = vmax.f32 %v1358, 0.0
    %v1685 = vmax.f32 %v1445, 0.0
    %v1686 = vmax.f32 %v1447, 0.0
    %v1687 = vmax.f32 %v1534, 0.0
    %v1688 = vmax.f32 %v1536, 0.0
    %v1689 = vmax.f32 %v1623, 0.0
    %v1690 = vmax.f32 %v1625, 0.0
    %v1691 = vadd.f32 %v810, %v1627
    %v1692 = vadd.f32 %v811, %v1628
    %v1693 = vadd.f32 %v812, %v1629
    %v1694 = vadd.f32 %v813, %v1630
    %v1695 = vadd.f32 %v814, %v1631
    %v1696 = vadd.f32 %v815, %v1632
    %v1697 = vadd.f32 %v816, %v1633
    %v1698 = vadd.f32 %v817, %v1634
    %v1699 = vadd.f32 %v818, %v1635
    %v1700 = vadd.f32 %v819, %v1636
    %v1701 = vadd.f32 %v820, %v1637
    %v1702 = vadd.f32 %v821, %v1638
    %v1703 = vadd.f32 %v822, %v1639
    %v1704 = vadd.f32 %v823, %v1640
    %v1705 = vadd.f32 %v824, %v1641
    %v1706 = vadd.f32 %v825, %v1642
    %v1707 = vadd.f32 %v826, %v1643
    %v1708 = vadd.f32 %v827, %v1644
    %v1709 = vadd.f32 %v828, %v1645
    %v1710 = vadd.f32 %v829, %v1646
    %v1711 = vadd.f32 %v830, %v1647
    %v1712 = vadd.f32 %v831, %v1648
    %v1713 = vadd.f32 %v832, %v1649
    %v1714 = vadd.f32 %v833, %v1650
    %v1715 = vadd.f32 %v834, %v1651
    %v1716 = vadd.f32 %v835, %v1652
    %v1717 = vadd.f32 %v836, %v1653
    %v1718 = vadd.f32 %v837, %v1654
    %v1719 = vadd.f32 %v838, %v1655
    %v1720 = vadd.f32 %v839, %v1656
    %v1721 = vadd.f32 %v840, %v1657
    %v1722 = vadd.f32 %v841, %v1658
    %v1723 = vadd.f32 %v842, %v1659
    %v1724 = vadd.f32 %v843, %v1660
    %v1725 = vadd.f32 %v844, %v1661
    %v1726 = vadd.f32 %v845, %v1662
    %v1727 = vadd.f32 %v846, %v1663
    %v1728 = vadd.f32 %v847, %v1664
    %v1729 = vadd.f32 %v848, %v1665
    %v1730 = vadd.f32 %v849, %v1666
    %v1731 = vadd.f32 %v850, %v1667
    %v1732 = vadd.f32 %v851, %v1668
    %v1733 = vadd.f32 %v852, %v1669
    %v1734 = vadd.f32 %v853, %v1670
    %v1735 = vadd.f32 %v854, %v1671
    %v1736 = vadd.f32 %v855, %v1672
    %v1737 = vadd.f32 %v856, %v1673
    %v1738 = vadd.f32 %v857, %v1674
    %v1739 = vadd.f32 %v858, %v1675
    %v1740 = vadd.f32 %v859, %v1676
    %v1741 = vadd.f32 %v860, %v1677
    %v1742 = vadd.f32 %v861, %v1678
    %v1743 = vadd.f32 %v862, %v1679
    %v1744 = vadd.f32 %v863, %v1680
    %v1745 = vadd.f32 %v864, %v1681
    %v1746 = vadd.f32 %v865, %v1682
    %v1747 = vadd.f32 %v866, %v1683
    %v1748 = vadd.f32 %v867, %v1684
    %v1749 = vadd.f32 %v868, %v1685
    %v1750 = vadd.f32 %v869, %v1686
    %v1751 = vadd.f32 %v870, %v1687
    %v1752 = vadd.f32 %v871, %v1688
    %v1753 = vadd.f32 %v872, %v1689
    %v1754 = vadd.f32 %v873, %v1690
    %s1755 = scalar_lea.vmem [#allocation2], 32
    %v1756 = vld [vmem:[%s1755] sm:$0xff]
    %v1757 = vld [vmem:[%s1755 + $0x8] sm:$0xff]
    %v1758 = vld [vmem:[%s1755 + $0x10] sm:$0xff]
    %v1759 = vld [vmem:[%s1755 + $0x18] sm:$0xff]
    %s1760 = scalar_lea.vmem %s4, 32
    %v1761 = vld [vmem:[%s1760] sm:$0xff]
    %v1762 = vld [vmem:[%s1760 + $0x8] sm:$0xff]
    %v1763 = vld [vmem:[%s1760 + $0x10] sm:$0xff]
    %v1764 = vld [vmem:[%s1760 + $0x18] sm:$0xff]
    %1766 = vset.pattern.permute.xlu0 0
    %1767 = vperm.xlu0 %1766, %v1761
    %v1768 = vpop.permute.xlu0 %1767
    %1771 = vset.pattern.permute.xlu0 0
    %1772 = vperm.xlu0 %1771, %v1762
    %v1773 = vpop.permute.xlu0 %1772
    %1776 = vset.pattern.permute.xlu0 0
    %1777 = vperm.xlu0 %1776, %v1763
    %v1778 = vpop.permute.xlu0 %1777
    %1781 = vset.pattern.permute.xlu0 0
    %1782 = vperm.xlu0 %1781, %v1764
    %v1783 = vpop.permute.xlu0 %1782
    %v1786 = vsel %vm902, %v1756, 0
    %v1789 = vsel %vm902, %v1757, 0
    %v1792 = vsel %vm902, %v1758, 0
    %v1795 = vsel %vm902, %v1759, 0
    %1797 = vmatprep.subr.mxu0 0.0
    %1798 = vmatpush1.msra.mxu0 0.0
    %1799 = vmatprep.subr.mxu0 0.0
    %1800 = vmatpush1.msra.mxu0 0.0
    %1801 = vmatprep.subr.mxu0 0.0
    %1802 = vmatpush1.msra.mxu0 0.0
    %1803 = vmatprep.subr.mxu0 0.0
    %1804 = vmatpush1.msra.mxu0 0.0
    %1805 = vmatprep.subr.mxu0 0.0
    %1806 = vmatpush1.msra.mxu0 0.0
    %1807 = vmatprep.subr.mxu0 0.0
    %1808 = vmatpush1.msra.mxu0 0.0
    %1809 = vmatprep.subr.mxu0 0.0
    %1810 = vmatpush1.msra.mxu0 0.0
    %1811 = vmatprep.subr.mxu0 0.0
    %1812 = vmatpush1.msra.mxu0 0.0
    %1813 = vmatprep.subr.mxu0 0.0
    %1814 = vmatpush1.msra.mxu0 0.0
    %1815 = vmatprep.subr.mxu0 0.0
    %1816 = vmatpush1.msra.mxu0 0.0
    %1817 = vmatprep.subr.mxu0 0.0
    %1818 = vmatpush1.msra.mxu0 0.0
    %1819 = vmatprep.subr.mxu0 0.0
    %1820 = vmatpush1.msra.mxu0 0.0
    %1821 = vmatprep.subr.mxu0 %v1740
    %1822 = vmatpush1.msra.mxu0 %v1739
    %1823 = vmatprep.subr.mxu0 %v1724
    %1824 = vmatpush1.msra.mxu0 %v1723
    %1825 = vmatprep.subr.mxu0 %v1708
    %1826 = vmatpush1.msra.mxu0 %v1707
    %1827 = vmatprep.subr.mxu0 %v1692
    %1828 = vmatpush1.msra.mxu0 %v1691
    %1829 = vmatprep.subr.mxu0 0.0
    %1830 = vmatpush2.msra.mxu0 0.0
    %1831 = vmatprep.subr.mxu0 0.0
    %1832 = vmatpush2.msra.mxu0 0.0
    %1833 = vmatprep.subr.mxu0 0.0
    %1834 = vmatpush2.msra.mxu0 0.0
    %1835 = vmatprep.subr.mxu0 0.0
    %1836 = vmatpush2.msra.mxu0 0.0
    %1837 = vmatprep.subr.mxu0 0.0
    %1838 = vmatpush2.msra.mxu0 0.0
    %1839 = vmatprep.subr.mxu0 0.0
    %1840 = vmatpush2.msra.mxu0 0.0
    %1841 = vmatprep.subr.mxu0 0.0
    %1842 = vmatpush2.msra.mxu0 0.0
    %1843 = vmatprep.subr.mxu0 0.0
    %1844 = vmatpush2.msra.mxu0 0.0
    %1845 = vmatprep.subr.mxu0 0.0
    %1846 = vmatpush2.msra.mxu0 0.0
    %1847 = vmatprep.subr.mxu0 0.0
    %1848 = vmatpush2.msra.mxu0 0.0
    %1849 = vmatprep.subr.mxu0 0.0
    %1850 = vmatpush2.msra.mxu0 0.0
    %1851 = vmatprep.subr.mxu0 0.0
    %1852 = vmatpush2.msra.mxu0 0.0
    %1853 = vmatprep.subr.mxu0 0.0
    %1854 = vmatpush2.msra.mxu0 0.0
    %1855 = vmatprep.subr.mxu0 0.0
    %1856 = vmatpush2.msra.mxu0 0.0
    %1857 = vmatprep.subr.mxu0 0.0
    %1858 = vmatpush2.msra.mxu0 0.0
    %1859 = vmatprep.subr.mxu0 0.0
    %1860 = vmatpush2.msra.mxu0 0.0
    %1861 = vmatprep.mubr.f32.mxu0 0.0
    %1862 = vmatmul.mubr.f32.gmra.mxu0 %v1786
    %v1863 = vpop.f32.mrf.mxu0
    %v1864 = vadd.f32 %v1768, %v1863
    %v1865 = vpop.f32.mrf.mxu0
    %v1866 = vadd.f32 %v1768, %v1865
    %1867 = vmatprep.mubr.f32.mxu0 0.0
    %1868 = vmatmul.mubr.f32.gmra.mxu0 %v1789
    %v1869 = vpop.f32.mrf.mxu0
    %v1870 = vadd.f32 %v1773, %v1869
    %v1871 = vpop.f32.mrf.mxu0
    %v1872 = vadd.f32 %v1773, %v1871
    %1873 = vmatprep.mubr.f32.mxu0 0.0
    %1874 = vmatmul.mubr.f32.gmra.mxu0 %v1792
    %v1875 = vpop.f32.mrf.mxu0
    %v1876 = vadd.f32 %v1778, %v1875
    %v1877 = vpop.f32.mrf.mxu0
    %v1878 = vadd.f32 %v1778, %v1877
    %1879 = vmatprep.mubr.f32.mxu0 0.0
    %1880 = vmatmul.mubr.f32.gmra.mxu0 %v1795
    %v1881 = vpop.f32.mrf.mxu0
    %v1882 = vadd.f32 %v1783, %v1881
    %v1883 = vpop.f32.mrf.mxu0
    %v1884 = vadd.f32 %v1783, %v1883
    %1885 = vdwg.mxu0
    %1886 = vmatprep.subr.mxu0 0.0
    %1887 = vmatpush1.msra.mxu0 0.0
    %1888 = vmatprep.subr.mxu0 0.0
    %1889 = vmatpush1.msra.mxu0 0.0
    %1890 = vmatprep.subr.mxu0 0.0
    %1891 = vmatpush1.msra.mxu0 0.0
    %1892 = vmatprep.subr.mxu0 0.0
    %1893 = vmatpush1.msra.mxu0 0.0
    %1894 = vmatprep.subr.mxu0 0.0
    %1895 = vmatpush1.msra.mxu0 0.0
    %1896 = vmatprep.subr.mxu0 0.0
    %1897 = vmatpush1.msra.mxu0 0.0
    %1898 = vmatprep.subr.mxu0 0.0
    %1899 = vmatpush1.msra.mxu0 0.0
    %1900 = vmatprep.subr.mxu0 0.0
    %1901 = vmatpush1.msra.mxu0 0.0
    %1902 = vmatprep.subr.mxu0 0.0
    %1903 = vmatpush1.msra.mxu0 0.0
    %1904 = vmatprep.subr.mxu0 0.0
    %1905 = vmatpush1.msra.mxu0 0.0
    %1906 = vmatprep.subr.mxu0 0.0
    %1907 = vmatpush1.msra.mxu0 0.0
    %1908 = vmatprep.subr.mxu0 0.0
    %1909 = vmatpush1.msra.mxu0 0.0
    %1910 = vmatprep.subr.mxu0 %v1742
    %1911 = vmatpush1.msra.mxu0 %v1741
    %1912 = vmatprep.subr.mxu0 %v1726
    %1913 = vmatpush1.msra.mxu0 %v1725
    %1914 = vmatprep.subr.mxu0 %v1710
    %1915 = vmatpush1.msra.mxu0 %v1709
    %1916 = vmatprep.subr.mxu0 %v1694
    %1917 = vmatpush1.msra.mxu0 %v1693
    %1918 = vmatprep.subr.mxu0 0.0
    %1919 = vmatpush2.msra.mxu0 0.0
    %1920 = vmatprep.subr.mxu0 0.0
    %1921 = vmatpush2.msra.mxu0 0.0
    %1922 = vmatprep.subr.mxu0 0.0
    %1923 = vmatpush2.msra.mxu0 0.0
    %1924 = vmatprep.subr.mxu0 0.0
    %1925 = vmatpush2.msra.mxu0 0.0
    %1926 = vmatprep.subr.mxu0 0.0
    %1927 = vmatpush2.msra.mxu0 0.0
    %1928 = vmatprep.subr.mxu0 0.0
    %1929 = vmatpush2.msra.mxu0 0.0
    %1930 = vmatprep.subr.mxu0 0.0
    %1931 = vmatpush2.msra.mxu0 0.0
    %1932 = vmatprep.subr.mxu0 0.0
    %1933 = vmatpush2.msra.mxu0 0.0
    %1934 = vmatprep.subr.mxu0 0.0
    %1935 = vmatpush2.msra.mxu0 0.0
    %1936 = vmatprep.subr.mxu0 0.0
    %1937 = vmatpush2.msra.mxu0 0.0
    %1938 = vmatprep.subr.mxu0 0.0
    %1939 = vmatpush2.msra.mxu0 0.0
    %1940 = vmatprep.subr.mxu0 0.0
    %1941 = vmatpush2.msra.mxu0 0.0
    %1942 = vmatprep.subr.mxu0 0.0
    %1943 = vmatpush2.msra.mxu0 0.0
    %1944 = vmatprep.subr.mxu0 0.0
    %1945 = vmatpush2.msra.mxu0 0.0
    %1946 = vmatprep.subr.mxu0 0.0
    %1947 = vmatpush2.msra.mxu0 0.0
    %1948 = vmatprep.subr.mxu0 0.0
    %1949 = vmatpush2.msra.mxu0 0.0
    %1950 = vmatprep.mubr.f32.mxu0 0.0
    %1951 = vmatmul.mubr.f32.gmra.mxu0 %v1786
    %v1952 = vpop.f32.mrf.mxu0
    %v1953 = vadd.f32 %v1768, %v1952
    %v1954 = vpop.f32.mrf.mxu0
    %v1955 = vadd.f32 %v1768, %v1954
    %1956 = vmatprep.mubr.f32.mxu0 0.0
    %1957 = vmatmul.mubr.f32.gmra.mxu0 %v1789
    %v1958 = vpop.f32.mrf.mxu0
    %v1959 = vadd.f32 %v1773, %v1958
    %v1960 = vpop.f32.mrf.mxu0
    %v1961 = vadd.f32 %v1773, %v1960
    %1962 = vmatprep.mubr.f32.mxu0 0.0
    %1963 = vmatmul.mubr.f32.gmra.mxu0 %v1792
    %v1964 = vpop.f32.mrf.mxu0
    %v1965 = vadd.f32 %v1778, %v1964
    %v1966 = vpop.f32.mrf.mxu0
    %v1967 = vadd.f32 %v1778, %v1966
    %1968 = vmatprep.mubr.f32.mxu0 0.0
    %1969 = vmatmul.mubr.f32.gmra.mxu0 %v1795
    %v1970 = vpop.f32.mrf.mxu0
    %v1971 = vadd.f32 %v1783, %v1970
    %v1972 = vpop.f32.mrf.mxu0
    %v1973 = vadd.f32 %v1783, %v1972
    %1974 = vdwg.mxu0
    %1975 = vmatprep.subr.mxu0 0.0
    %1976 = vmatpush1.msra.mxu0 0.0
    %1977 = vmatprep.subr.mxu0 0.0
    %1978 = vmatpush1.msra.mxu0 0.0
    %1979 = vmatprep.subr.mxu0 0.0
    %1980 = vmatpush1.msra.mxu0 0.0
    %1981 = vmatprep.subr.mxu0 0.0
    %1982 = vmatpush1.msra.mxu0 0.0
    %1983 = vmatprep.subr.mxu0 0.0
    %1984 = vmatpush1.msra.mxu0 0.0
    %1985 = vmatprep.subr.mxu0 0.0
    %1986 = vmatpush1.msra.mxu0 0.0
    %1987 = vmatprep.subr.mxu0 0.0
    %1988 = vmatpush1.msra.mxu0 0.0
    %1989 = vmatprep.subr.mxu0 0.0
    %1990 = vmatpush1.msra.mxu0 0.0
    %1991 = vmatprep.subr.mxu0 0.0
    %1992 = vmatpush1.msra.mxu0 0.0
    %1993 = vmatprep.subr.mxu0 0.0
    %1994 = vmatpush1.msra.mxu0 0.0
    %1995 = vmatprep.subr.mxu0 0.0
    %1996 = vmatpush1.msra.mxu0 0.0
    %1997 = vmatprep.subr.mxu0 0.0
    %1998 = vmatpush1.msra.mxu0 0.0
    %1999 = vmatprep.subr.mxu0 %v1744
    %2000 = vmatpush1.msra.mxu0 %v1743
    %2001 = vmatprep.subr.mxu0 %v1728
    %2002 = vmatpush1.msra.mxu0 %v1727
    %2003 = vmatprep.subr.mxu0 %v1712
    %2004 = vmatpush1.msra.mxu0 %v1711
    %2005 = vmatprep.subr.mxu0 %v1696
    %2006 = vmatpush1.msra.mxu0 %v1695
    %2007 = vmatprep.subr.mxu0 0.0
    %2008 = vmatpush2.msra.mxu0 0.0
    %2009 = vmatprep.subr.mxu0 0.0
    %2010 = vmatpush2.msra.mxu0 0.0
    %2011 = vmatprep.subr.mxu0 0.0
    %2012 = vmatpush2.msra.mxu0 0.0
    %2013 = vmatprep.subr.mxu0 0.0
    %2014 = vmatpush2.msra.mxu0 0.0
    %2015 = vmatprep.subr.mxu0 0.0
    %2016 = vmatpush2.msra.mxu0 0.0
    %2017 = vmatprep.subr.mxu0 0.0
    %2018 = vmatpush2.msra.mxu0 0.0
    %2019 = vmatprep.subr.mxu0 0.0
    %2020 = vmatpush2.msra.mxu0 0.0
    %2021 = vmatprep.subr.mxu0 0.0
    %2022 = vmatpush2.msra.mxu0 0.0
    %2023 = vmatprep.subr.mxu0 0.0
    %2024 = vmatpush2.msra.mxu0 0.0
    %2025 = vmatprep.subr.mxu0 0.0
    %2026 = vmatpush2.msra.mxu0 0.0
    %2027 = vmatprep.subr.mxu0 0.0
    %2028 = vmatpush2.msra.mxu0 0.0
    %2029 = vmatprep.subr.mxu0 0.0
    %2030 = vmatpush2.msra.mxu0 0.0
    %2031 = vmatprep.subr.mxu0 0.0
    %2032 = vmatpush2.msra.mxu0 0.0
    %2033 = vmatprep.subr.mxu0 0.0
    %2034 = vmatpush2.msra.mxu0 0.0
    %2035 = vmatprep.subr.mxu0 0.0
    %2036 = vmatpush2.msra.mxu0 0.0
    %2037 = vmatprep.subr.mxu0 0.0
    %2038 = vmatpush2.msra.mxu0 0.0
    %2039 = vmatprep.mubr.f32.mxu0 0.0
    %2040 = vmatmul.mubr.f32.gmra.mxu0 %v1786
    %v2041 = vpop.f32.mrf.mxu0
    %v2042 = vadd.f32 %v1768, %v2041
    %v2043 = vpop.f32.mrf.mxu0
    %v2044 = vadd.f32 %v1768, %v2043
    %2045 = vmatprep.mubr.f32.mxu0 0.0
    %2046 = vmatmul.mubr.f32.gmra.mxu0 %v1789
    %v2047 = vpop.f32.mrf.mxu0
    %v2048 = vadd.f32 %v1773, %v2047
    %v2049 = vpop.f32.mrf.mxu0
    %v2050 = vadd.f32 %v1773, %v2049
    %2051 = vmatprep.mubr.f32.mxu0 0.0
    %2052 = vmatmul.mubr.f32.gmra.mxu0 %v1792
    %v2053 = vpop.f32.mrf.mxu0
    %v2054 = vadd.f32 %v1778, %v2053
    %v2055 = vpop.f32.mrf.mxu0
    %v2056 = vadd.f32 %v1778, %v2055
    %2057 = vmatprep.mubr.f32.mxu0 0.0
    %2058 = vmatmul.mubr.f32.gmra.mxu0 %v1795
    %v2059 = vpop.f32.mrf.mxu0
    %v2060 = vadd.f32 %v1783, %v2059
    %v2061 = vpop.f32.mrf.mxu0
    %v2062 = vadd.f32 %v1783, %v2061
    %2063 = vdwg.mxu0
    %2064 = vmatprep.subr.mxu0 0.0
    %2065 = vmatpush1.msra.mxu0 0.0
    %2066 = vmatprep.subr.mxu0 0.0
    %2067 = vmatpush1.msra.mxu0 0.0
    %2068 = vmatprep.subr.mxu0 0.0
    %2069 = vmatpush1.msra.mxu0 0.0
    %2070 = vmatprep.subr.mxu0 0.0
    %2071 = vmatpush1.msra.mxu0 0.0
    %2072 = vmatprep.subr.mxu0 0.0
    %2073 = vmatpush1.msra.mxu0 0.0
    %2074 = vmatprep.subr.mxu0 0.0
    %2075 = vmatpush1.msra.mxu0 0.0
    %2076 = vmatprep.subr.mxu0 0.0
    %2077 = vmatpush1.msra.mxu0 0.0
    %2078 = vmatprep.subr.mxu0 0.0
    %2079 = vmatpush1.msra.mxu0 0.0
    %2080 = vmatprep.subr.mxu0 0.0
    %2081 = vmatpush1.msra.mxu0 0.0
    %2082 = vmatprep.subr.mxu0 0.0
    %2083 = vmatpush1.msra.mxu0 0.0
    %2084 = vmatprep.subr.mxu0 0.0
    %2085 = vmatpush1.msra.mxu0 0.0
    %2086 = vmatprep.subr.mxu0 0.0
    %2087 = vmatpush1.msra.mxu0 0.0
    %2088 = vmatprep.subr.mxu0 %v1746
    %2089 = vmatpush1.msra.mxu0 %v1745
    %2090 = vmatprep.subr.mxu0 %v1730
    %2091 = vmatpush1.msra.mxu0 %v1729
    %2092 = vmatprep.subr.mxu0 %v1714
    %2093 = vmatpush1.msra.mxu0 %v1713
    %2094 = vmatprep.subr.mxu0 %v1698
    %2095 = vmatpush1.msra.mxu0 %v1697
    %2096 = vmatprep.subr.mxu0 0.0
    %2097 = vmatpush2.msra.mxu0 0.0
    %2098 = vmatprep.subr.mxu0 0.0
    %2099 = vmatpush2.msra.mxu0 0.0
    %2100 = vmatprep.subr.mxu0 0.0
    %2101 = vmatpush2.msra.mxu0 0.0
    %2102 = vmatprep.subr.mxu0 0.0
    %2103 = vmatpush2.msra.mxu0 0.0
    %2104 = vmatprep.subr.mxu0 0.0
    %2105 = vmatpush2.msra.mxu0 0.0
    %2106 = vmatprep.subr.mxu0 0.0
    %2107 = vmatpush2.msra.mxu0 0.0
    %2108 = vmatprep.subr.mxu0 0.0
    %2109 = vmatpush2.msra.mxu0 0.0
    %2110 = vmatprep.subr.mxu0 0.0
    %2111 = vmatpush2.msra.mxu0 0.0
    %2112 = vmatprep.subr.mxu0 0.0
    %2113 = vmatpush2.msra.mxu0 0.0
    %2114 = vmatprep.subr.mxu0 0.0
    %2115 = vmatpush2.msra.mxu0 0.0
    %2116 = vmatprep.subr.mxu0 0.0
    %2117 = vmatpush2.msra.mxu0 0.0
    %2118 = vmatprep.subr.mxu0 0.0
    %2119 = vmatpush2.msra.mxu0 0.0
    %2120 = vmatprep.subr.mxu0 0.0
    %2121 = vmatpush2.msra.mxu0 0.0
    %2122 = vmatprep.subr.mxu0 0.0
    %2123 = vmatpush2.msra.mxu0 0.0
    %2124 = vmatprep.subr.mxu0 0.0
    %2125 = vmatpush2.msra.mxu0 0.0
    %2126 = vmatprep.subr.mxu0 0.0
    %2127 = vmatpush2.msra.mxu0 0.0
    %2128 = vmatprep.mubr.f32.mxu0 0.0
    %2129 = vmatmul.mubr.f32.gmra.mxu0 %v1786
    %v2130 = vpop.f32.mrf.mxu0
    %v2131 = vadd.f32 %v1768, %v2130
    %v2132 = vpop.f32.mrf.mxu0
    %v2133 = vadd.f32 %v1768, %v2132
    %2134 = vmatprep.mubr.f32.mxu0 0.0
    %2135 = vmatmul.mubr.f32.gmra.mxu0 %v1789
    %v2136 = vpop.f32.mrf.mxu0
    %v2137 = vadd.f32 %v1773, %v2136
    %v2138 = vpop.f32.mrf.mxu0
    %v2139 = vadd.f32 %v1773, %v2138
    %2140 = vmatprep.mubr.f32.mxu0 0.0
    %2141 = vmatmul.mubr.f32.gmra.mxu0 %v1792
    %v2142 = vpop.f32.mrf.mxu0
    %v2143 = vadd.f32 %v1778, %v2142
    %v2144 = vpop.f32.mrf.mxu0
    %v2145 = vadd.f32 %v1778, %v2144
    %2146 = vmatprep.mubr.f32.mxu0 0.0
    %2147 = vmatmul.mubr.f32.gmra.mxu0 %v1795
    %v2148 = vpop.f32.mrf.mxu0
    %v2149 = vadd.f32 %v1783, %v2148
    %v2150 = vpop.f32.mrf.mxu0
    %v2151 = vadd.f32 %v1783, %v2150
    %2152 = vdwg.mxu0
    %2153 = vmatprep.subr.mxu0 0.0
    %2154 = vmatpush1.msra.mxu0 0.0
    %2155 = vmatprep.subr.mxu0 0.0
    %2156 = vmatpush1.msra.mxu0 0.0
    %2157 = vmatprep.subr.mxu0 0.0
    %2158 = vmatpush1.msra.mxu0 0.0
    %2159 = vmatprep.subr.mxu0 0.0
    %2160 = vmatpush1.msra.mxu0 0.0
    %2161 = vmatprep.subr.mxu0 0.0
    %2162 = vmatpush1.msra.mxu0 0.0
    %2163 = vmatprep.subr.mxu0 0.0
    %2164 = vmatpush1.msra.mxu0 0.0
    %2165 = vmatprep.subr.mxu0 0.0
    %2166 = vmatpush1.msra.mxu0 0.0
    %2167 = vmatprep.subr.mxu0 0.0
    %2168 = vmatpush1.msra.mxu0 0.0
    %2169 = vmatprep.subr.mxu0 0.0
    %2170 = vmatpush1.msra.mxu0 0.0
    %2171 = vmatprep.subr.mxu0 0.0
    %2172 = vmatpush1.msra.mxu0 0.0
    %2173 = vmatprep.subr.mxu0 0.0
    %2174 = vmatpush1.msra.mxu0 0.0
    %2175 = vmatprep.subr.mxu0 0.0
    %2176 = vmatpush1.msra.mxu0 0.0
    %2177 = vmatprep.subr.mxu0 %v1748
    %2178 = vmatpush1.msra.mxu0 %v1747
    %2179 = vmatprep.subr.mxu0 %v1732
    %2180 = vmatpush1.msra.mxu0 %v1731
    %2181 = vmatprep.subr.mxu0 %v1716
    %2182 = vmatpush1.msra.mxu0 %v1715
    %2183 = vmatprep.subr.mxu0 %v1700
    %2184 = vmatpush1.msra.mxu0 %v1699
    %2185 = vmatprep.subr.mxu0 0.0
    %2186 = vmatpush2.msra.mxu0 0.0
    %2187 = vmatprep.subr.mxu0 0.0
    %2188 = vmatpush2.msra.mxu0 0.0
    %2189 = vmatprep.subr.mxu0 0.0
    %2190 = vmatpush2.msra.mxu0 0.0
    %2191 = vmatprep.subr.mxu0 0.0
    %2192 = vmatpush2.msra.mxu0 0.0
    %2193 = vmatprep.subr.mxu0 0.0
    %2194 = vmatpush2.msra.mxu0 0.0
    %2195 = vmatprep.subr.mxu0 0.0
    %2196 = vmatpush2.msra.mxu0 0.0
    %2197 = vmatprep.subr.mxu0 0.0
    %2198 = vmatpush2.msra.mxu0 0.0
    %2199 = vmatprep.subr.mxu0 0.0
    %2200 = vmatpush2.msra.mxu0 0.0
    %2201 = vmatprep.subr.mxu0 0.0
    %2202 = vmatpush2.msra.mxu0 0.0
    %2203 = vmatprep.subr.mxu0 0.0
    %2204 = vmatpush2.msra.mxu0 0.0
    %2205 = vmatprep.subr.mxu0 0.0
    %2206 = vmatpush2.msra.mxu0 0.0
    %2207 = vmatprep.subr.mxu0 0.0
    %2208 = vmatpush2.msra.mxu0 0.0
    %2209 = vmatprep.subr.mxu0 0.0
    %2210 = vmatpush2.msra.mxu0 0.0
    %2211 = vmatprep.subr.mxu0 0.0
    %2212 = vmatpush2.msra.mxu0 0.0
    %2213 = vmatprep.subr.mxu0 0.0
    %2214 = vmatpush2.msra.mxu0 0.0
    %2215 = vmatprep.subr.mxu0 0.0
    %2216 = vmatpush2.msra.mxu0 0.0
    %2217 = vmatprep.mubr.f32.mxu0 0.0
    %2218 = vmatmul.mubr.f32.gmra.mxu0 %v1786
    %v2219 = vpop.f32.mrf.mxu0
    %v2220 = vadd.f32 %v1768, %v2219
    %v2221 = vpop.f32.mrf.mxu0
    %v2222 = vadd.f32 %v1768, %v2221
    %2223 = vmatprep.mubr.f32.mxu0 0.0
    %2224 = vmatmul.mubr.f32.gmra.mxu0 %v1789
    %v2225 = vpop.f32.mrf.mxu0
    %v2226 = vadd.f32 %v1773, %v2225
    %v2227 = vpop.f32.mrf.mxu0
    %v2228 = vadd.f32 %v1773, %v2227
    %2229 = vmatprep.mubr.f32.mxu0 0.0
    %2230 = vmatmul.mubr.f32.gmra.mxu0 %v1792
    %v2231 = vpop.f32.mrf.mxu0
    %v2232 = vadd.f32 %v1778, %v2231
    %v2233 = vpop.f32.mrf.mxu0
    %v2234 = vadd.f32 %v1778, %v2233
    %2235 = vmatprep.mubr.f32.mxu0 0.0
    %2236 = vmatmul.mubr.f32.gmra.mxu0 %v1795
    %v2237 = vpop.f32.mrf.mxu0
    %v2238 = vadd.f32 %v1783, %v2237
    %v2239 = vpop.f32.mrf.mxu0
    %v2240 = vadd.f32 %v1783, %v2239
    %2241 = vdwg.mxu0
    %2242 = vmatprep.subr.mxu0 0.0
    %2243 = vmatpush1.msra.mxu0 0.0
    %2244 = vmatprep.subr.mxu0 0.0
    %2245 = vmatpush1.msra.mxu0 0.0
    %2246 = vmatprep.subr.mxu0 0.0
    %2247 = vmatpush1.msra.mxu0 0.0
    %2248 = vmatprep.subr.mxu0 0.0
    %2249 = vmatpush1.msra.mxu0 0.0
    %2250 = vmatprep.subr.mxu0 0.0
    %2251 = vmatpush1.msra.mxu0 0.0
    %2252 = vmatprep.subr.mxu0 0.0
    %2253 = vmatpush1.msra.mxu0 0.0
    %2254 = vmatprep.subr.mxu0 0.0
    %2255 = vmatpush1.msra.mxu0 0.0
    %2256 = vmatprep.subr.mxu0 0.0
    %2257 = vmatpush1.msra.mxu0 0.0
    %2258 = vmatprep.subr.mxu0 0.0
    %2259 = vmatpush1.msra.mxu0 0.0
    %2260 = vmatprep.subr.mxu0 0.0
    %2261 = vmatpush1.msra.mxu0 0.0
    %2262 = vmatprep.subr.mxu0 0.0
    %2263 = vmatpush1.msra.mxu0 0.0
    %2264 = vmatprep.subr.mxu0 0.0
    %2265 = vmatpush1.msra.mxu0 0.0
    %2266 = vmatprep.subr.mxu0 %v1750
    %2267 = vmatpush1.msra.mxu0 %v1749
    %2268 = vmatprep.subr.mxu0 %v1734
    %2269 = vmatpush1.msra.mxu0 %v1733
    %2270 = vmatprep.subr.mxu0 %v1718
    %2271 = vmatpush1.msra.mxu0 %v1717
    %2272 = vmatprep.subr.mxu0 %v1702
    %2273 = vmatpush1.msra.mxu0 %v1701
    %2274 = vmatprep.subr.mxu0 0.0
    %2275 = vmatpush2.msra.mxu0 0.0
    %2276 = vmatprep.subr.mxu0 0.0
    %2277 = vmatpush2.msra.mxu0 0.0
    %2278 = vmatprep.subr.mxu0 0.0
    %2279 = vmatpush2.msra.mxu0 0.0
    %2280 = vmatprep.subr.mxu0 0.0
    %2281 = vmatpush2.msra.mxu0 0.0
    %2282 = vmatprep.subr.mxu0 0.0
    %2283 = vmatpush2.msra.mxu0 0.0
    %2284 = vmatprep.subr.mxu0 0.0
    %2285 = vmatpush2.msra.mxu0 0.0
    %2286 = vmatprep.subr.mxu0 0.0
    %2287 = vmatpush2.msra.mxu0 0.0
    %2288 = vmatprep.subr.mxu0 0.0
    %2289 = vmatpush2.msra.mxu0 0.0
    %2290 = vmatprep.subr.mxu0 0.0
    %2291 = vmatpush2.msra.mxu0 0.0
    %2292 = vmatprep.subr.mxu0 0.0
    %2293 = vmatpush2.msra.mxu0 0.0
    %2294 = vmatprep.subr.mxu0 0.0
    %2295 = vmatpush2.msra.mxu0 0.0
    %2296 = vmatprep.subr.mxu0 0.0
    %2297 = vmatpush2.msra.mxu0 0.0
    %2298 = vmatprep.subr.mxu0 0.0
    %2299 = vmatpush2.msra.mxu0 0.0
    %2300 = vmatprep.subr.mxu0 0.0
    %2301 = vmatpush2.msra.mxu0 0.0
    %2302 = vmatprep.subr.mxu0 0.0
    %2303 = vmatpush2.msra.mxu0 0.0
    %2304 = vmatprep.subr.mxu0 0.0
    %2305 = vmatpush2.msra.mxu0 0.0
    %2306 = vmatprep.mubr.f32.mxu0 0.0
    %2307 = vmatmul.mubr.f32.gmra.mxu0 %v1786
    %v2308 = vpop.f32.mrf.mxu0
    %v2309 = vadd.f32 %v1768, %v2308
    %v2310 = vpop.f32.mrf.mxu0
    %v2311 = vadd.f32 %v1768, %v2310
    %2312 = vmatprep.mubr.f32.mxu0 0.0
    %2313 = vmatmul.mubr.f32.gmra.mxu0 %v1789
    %v2314 = vpop.f32.mrf.mxu0
    %v2315 = vadd.f32 %v1773, %v2314
    %v2316 = vpop.f32.mrf.mxu0
    %v2317 = vadd.f32 %v1773, %v2316
    %2318 = vmatprep.mubr.f32.mxu0 0.0
    %2319 = vmatmul.mubr.f32.gmra.mxu0 %v1792
    %v2320 = vpop.f32.mrf.mxu0
    %v2321 = vadd.f32 %v1778, %v2320
    %v2322 = vpop.f32.mrf.mxu0
    %v2323 = vadd.f32 %v1778, %v2322
    %2324 = vmatprep.mubr.f32.mxu0 0.0
    %2325 = vmatmul.mubr.f32.gmra.mxu0 %v1795
    %v2326 = vpop.f32.mrf.mxu0
    %v2327 = vadd.f32 %v1783, %v2326
    %v2328 = vpop.f32.mrf.mxu0
    %v2329 = vadd.f32 %v1783, %v2328
    %2330 = vdwg.mxu0
    %2331 = vmatprep.subr.mxu0 0.0
    %2332 = vmatpush1.msra.mxu0 0.0
    %2333 = vmatprep.subr.mxu0 0.0
    %2334 = vmatpush1.msra.mxu0 0.0
    %2335 = vmatprep.subr.mxu0 0.0
    %2336 = vmatpush1.msra.mxu0 0.0
    %2337 = vmatprep.subr.mxu0 0.0
    %2338 = vmatpush1.msra.mxu0 0.0
    %2339 = vmatprep.subr.mxu0 0.0
    %2340 = vmatpush1.msra.mxu0 0.0
    %2341 = vmatprep.subr.mxu0 0.0
    %2342 = vmatpush1.msra.mxu0 0.0
    %2343 = vmatprep.subr.mxu0 0.0
    %2344 = vmatpush1.msra.mxu0 0.0
    %2345 = vmatprep.subr.mxu0 0.0
    %2346 = vmatpush1.msra.mxu0 0.0
    %2347 = vmatprep.subr.mxu0 0.0
    %2348 = vmatpush1.msra.mxu0 0.0
    %2349 = vmatprep.subr.mxu0 0.0
    %2350 = vmatpush1.msra.mxu0 0.0
    %2351 = vmatprep.subr.mxu0 0.0
    %2352 = vmatpush1.msra.mxu0 0.0
    %2353 = vmatprep.subr.mxu0 0.0
    %2354 = vmatpush1.msra.mxu0 0.0
    %2355 = vmatprep.subr.mxu0 %v1752
    %2356 = vmatpush1.msra.mxu0 %v1751
    %2357 = vmatprep.subr.mxu0 %v1736
    %2358 = vmatpush1.msra.mxu0 %v1735
    %2359 = vmatprep.subr.mxu0 %v1720
    %2360 = vmatpush1.msra.mxu0 %v1719
    %2361 = vmatprep.subr.mxu0 %v1704
    %2362 = vmatpush1.msra.mxu0 %v1703
    %2363 = vmatprep.subr.mxu0 0.0
    %2364 = vmatpush2.msra.mxu0 0.0
    %2365 = vmatprep.subr.mxu0 0.0
    %2366 = vmatpush2.msra.mxu0 0.0
    %2367 = vmatprep.subr.mxu0 0.0
    %2368 = vmatpush2.msra.mxu0 0.0
    %2369 = vmatprep.subr.mxu0 0.0
    %2370 = vmatpush2.msra.mxu0 0.0
    %2371 = vmatprep.subr.mxu0 0.0
    %2372 = vmatpush2.msra.mxu0 0.0
    %2373 = vmatprep.subr.mxu0 0.0
    %2374 = vmatpush2.msra.mxu0 0.0
    %2375 = vmatprep.subr.mxu0 0.0
    %2376 = vmatpush2.msra.mxu0 0.0
    %2377 = vmatprep.subr.mxu0 0.0
    %2378 = vmatpush2.msra.mxu0 0.0
    %2379 = vmatprep.subr.mxu0 0.0
    %2380 = vmatpush2.msra.mxu0 0.0
    %2381 = vmatprep.subr.mxu0 0.0
    %2382 = vmatpush2.msra.mxu0 0.0
    %2383 = vmatprep.subr.mxu0 0.0
    %2384 = vmatpush2.msra.mxu0 0.0
    %2385 = vmatprep.subr.mxu0 0.0
    %2386 = vmatpush2.msra.mxu0 0.0
    %2387 = vmatprep.subr.mxu0 0.0
    %2388 = vmatpush2.msra.mxu0 0.0
    %2389 = vmatprep.subr.mxu0 0.0
    %2390 = vmatpush2.msra.mxu0 0.0
    %2391 = vmatprep.subr.mxu0 0.0
    %2392 = vmatpush2.msra.mxu0 0.0
    %2393 = vmatprep.subr.mxu0 0.0
    %2394 = vmatpush2.msra.mxu0 0.0
    %2395 = vmatprep.mubr.f32.mxu0 0.0
    %2396 = vmatmul.mubr.f32.gmra.mxu0 %v1786
    %v2397 = vpop.f32.mrf.mxu0
    %v2398 = vadd.f32 %v1768, %v2397
    %v2399 = vpop.f32.mrf.mxu0
    %v2400 = vadd.f32 %v1768, %v2399
    %2401 = vmatprep.mubr.f32.mxu0 0.0
    %2402 = vmatmul.mubr.f32.gmra.mxu0 %v1789
    %v2403 = vpop.f32.mrf.mxu0
    %v2404 = vadd.f32 %v1773, %v2403
    %v2405 = vpop.f32.mrf.mxu0
    %v2406 = vadd.f32 %v1773, %v2405
    %2407 = vmatprep.mubr.f32.mxu0 0.0
    %2408 = vmatmul.mubr.f32.gmra.mxu0 %v1792
    %v2409 = vpop.f32.mrf.mxu0
    %v2410 = vadd.f32 %v1778, %v2409
    %v2411 = vpop.f32.mrf.mxu0
    %v2412 = vadd.f32 %v1778, %v2411
    %2413 = vmatprep.mubr.f32.mxu0 0.0
    %2414 = vmatmul.mubr.f32.gmra.mxu0 %v1795
    %v2415 = vpop.f32.mrf.mxu0
    %v2416 = vadd.f32 %v1783, %v2415
    %v2417 = vpop.f32.mrf.mxu0
    %v2418 = vadd.f32 %v1783, %v2417
    %2419 = vdwg.mxu0
    %2420 = vmatprep.subr.mxu0 0.0
    %2421 = vmatpush1.msra.mxu0 0.0
    %2422 = vmatprep.subr.mxu0 0.0
    %2423 = vmatpush1.msra.mxu0 0.0
    %2424 = vmatprep.subr.mxu0 0.0
    %2425 = vmatpush1.msra.mxu0 0.0
    %2426 = vmatprep.subr.mxu0 0.0
    %2427 = vmatpush1.msra.mxu0 0.0
    %2428 = vmatprep.subr.mxu0 0.0
    %2429 = vmatpush1.msra.mxu0 0.0
    %2430 = vmatprep.subr.mxu0 0.0
    %2431 = vmatpush1.msra.mxu0 0.0
    %2432 = vmatprep.subr.mxu0 0.0
    %2433 = vmatpush1.msra.mxu0 0.0
    %2434 = vmatprep.subr.mxu0 0.0
    %2435 = vmatpush1.msra.mxu0 0.0
    %2436 = vmatprep.subr.mxu0 0.0
    %2437 = vmatpush1.msra.mxu0 0.0
    %2438 = vmatprep.subr.mxu0 0.0
    %2439 = vmatpush1.msra.mxu0 0.0
    %2440 = vmatprep.subr.mxu0 0.0
    %2441 = vmatpush1.msra.mxu0 0.0
    %2442 = vmatprep.subr.mxu0 0.0
    %2443 = vmatpush1.msra.mxu0 0.0
    %2444 = vmatprep.subr.mxu0 %v1754
    %2445 = vmatpush1.msra.mxu0 %v1753
    %2446 = vmatprep.subr.mxu0 %v1738
    %2447 = vmatpush1.msra.mxu0 %v1737
    %2448 = vmatprep.subr.mxu0 %v1722
    %2449 = vmatpush1.msra.mxu0 %v1721
    %2450 = vmatprep.subr.mxu0 %v1706
    %2451 = vmatpush1.msra.mxu0 %v1705
    %2452 = vmatprep.subr.mxu0 0.0
    %2453 = vmatpush2.msra.mxu0 0.0
    %2454 = vmatprep.subr.mxu0 0.0
    %2455 = vmatpush2.msra.mxu0 0.0
    %2456 = vmatprep.subr.mxu0 0.0
    %2457 = vmatpush2.msra.mxu0 0.0
    %2458 = vmatprep.subr.mxu0 0.0
    %2459 = vmatpush2.msra.mxu0 0.0
    %2460 = vmatprep.subr.mxu0 0.0
    %2461 = vmatpush2.msra.mxu0 0.0
    %2462 = vmatprep.subr.mxu0 0.0
    %2463 = vmatpush2.msra.mxu0 0.0
    %2464 = vmatprep.subr.mxu0 0.0
    %2465 = vmatpush2.msra.mxu0 0.0
    %2466 = vmatprep.subr.mxu0 0.0
    %2467 = vmatpush2.msra.mxu0 0.0
    %2468 = vmatprep.subr.mxu0 0.0
    %2469 = vmatpush2.msra.mxu0 0.0
    %2470 = vmatprep.subr.mxu0 0.0
    %2471 = vmatpush2.msra.mxu0 0.0
    %2472 = vmatprep.subr.mxu0 0.0
    %2473 = vmatpush2.msra.mxu0 0.0
    %2474 = vmatprep.subr.mxu0 0.0
    %2475 = vmatpush2.msra.mxu0 0.0
    %2476 = vmatprep.subr.mxu0 0.0
    %2477 = vmatpush2.msra.mxu0 0.0
    %2478 = vmatprep.subr.mxu0 0.0
    %2479 = vmatpush2.msra.mxu0 0.0
    %2480 = vmatprep.subr.mxu0 0.0
    %2481 = vmatpush2.msra.mxu0 0.0
    %2482 = vmatprep.subr.mxu0 0.0
    %2483 = vmatpush2.msra.mxu0 0.0
    %2484 = vmatprep.mubr.f32.mxu0 0.0
    %2485 = vmatmul.mubr.f32.gmra.mxu0 %v1786
    %v2486 = vpop.f32.mrf.mxu0
    %v2487 = vadd.f32 %v1768, %v2486
    %v2488 = vpop.f32.mrf.mxu0
    %v2489 = vadd.f32 %v1768, %v2488
    %2490 = vmatprep.mubr.f32.mxu0 0.0
    %2491 = vmatmul.mubr.f32.gmra.mxu0 %v1789
    %v2492 = vpop.f32.mrf.mxu0
    %v2493 = vadd.f32 %v1773, %v2492
    %v2494 = vpop.f32.mrf.mxu0
    %v2495 = vadd.f32 %v1773, %v2494
    %2496 = vmatprep.mubr.f32.mxu0 0.0
    %2497 = vmatmul.mubr.f32.gmra.mxu0 %v1792
    %v2498 = vpop.f32.mrf.mxu0
    %v2499 = vadd.f32 %v1778, %v2498
    %v2500 = vpop.f32.mrf.mxu0
    %v2501 = vadd.f32 %v1778, %v2500
    %2502 = vmatprep.mubr.f32.mxu0 0.0
    %2503 = vmatmul.mubr.f32.gmra.mxu0 %v1795
    %v2504 = vpop.f32.mrf.mxu0
    %v2505 = vadd.f32 %v1783, %v2504
    %v2506 = vpop.f32.mrf.mxu0
    %v2507 = vadd.f32 %v1783, %v2506
    %2508 = vdwg.mxu0
    %v2509 = vmax.f32 %v1864, 0.0
    %v2510 = vmax.f32 %v1866, 0.0
    %v2511 = vmax.f32 %v1953, 0.0
    %v2512 = vmax.f32 %v1955, 0.0
    %v2513 = vmax.f32 %v2042, 0.0
    %v2514 = vmax.f32 %v2044, 0.0
    %v2515 = vmax.f32 %v2131, 0.0
    %v2516 = vmax.f32 %v2133, 0.0
    %v2517 = vmax.f32 %v2220, 0.0
    %v2518 = vmax.f32 %v2222, 0.0
    %v2519 = vmax.f32 %v2309, 0.0
    %v2520 = vmax.f32 %v2311, 0.0
    %v2521 = vmax.f32 %v2398, 0.0
    %v2522 = vmax.f32 %v2400, 0.0
    %v2523 = vmax.f32 %v2487, 0.0
    %v2524 = vmax.f32 %v2489, 0.0
    %v2525 = vmax.f32 %v1870, 0.0
    %v2526 = vmax.f32 %v1872, 0.0
    %v2527 = vmax.f32 %v1959, 0.0
    %v2528 = vmax.f32 %v1961, 0.0
    %v2529 = vmax.f32 %v2048, 0.0
    %v2530 = vmax.f32 %v2050, 0.0
    %v2531 = vmax.f32 %v2137, 0.0
    %v2532 = vmax.f32 %v2139, 0.0
    %v2533 = vmax.f32 %v2226, 0.0
    %v2534 = vmax.f32 %v2228, 0.0
    %v2535 = vmax.f32 %v2315, 0.0
    %v2536 = vmax.f32 %v2317, 0.0
    %v2537 = vmax.f32 %v2404, 0.0
    %v2538 = vmax.f32 %v2406, 0.0
    %v2539 = vmax.f32 %v2493, 0.0
    %v2540 = vmax.f32 %v2495, 0.0
    %v2541 = vmax.f32 %v1876, 0.0
    %v2542 = vmax.f32 %v1878, 0.0
    %v2543 = vmax.f32 %v1965, 0.0
    %v2544 = vmax.f32 %v1967, 0.0
    %v2545 = vmax.f32 %v2054, 0.0
    %v2546 = vmax.f32 %v2056, 0.0
    %v2547 = vmax.f32 %v2143, 0.0
    %v2548 = vmax.f32 %v2145, 0.0
    %v2549 = vmax.f32 %v2232, 0.0
    %v2550 = vmax.f32 %v2234, 0.0
    %v2551 = vmax.f32 %v2321, 0.0
    %v2552 = vmax.f32 %v2323, 0.0
    %v2553 = vmax.f32 %v2410, 0.0
    %v2554 = vmax.f32 %v2412, 0.0
    %v2555 = vmax.f32 %v2499, 0.0
    %v2556 = vmax.f32 %v2501, 0.0
    %v2557 = vmax.f32 %v1882, 0.0
    %v2558 = vmax.f32 %v1884, 0.0
    %v2559 = vmax.f32 %v1971, 0.0
    %v2560 = vmax.f32 %v1973, 0.0
    %v2561 = vmax.f32 %v2060, 0.0
    %v2562 = vmax.f32 %v2062, 0.0
    %v2563 = vmax.f32 %v2149, 0.0
    %v2564 = vmax.f32 %v2151, 0.0
    %v2565 = vmax.f32 %v2238, 0.0
    %v2566 = vmax.f32 %v2240, 0.0
    %v2567 = vmax.f32 %v2327, 0.0
    %v2568 = vmax.f32 %v2329, 0.0
    %v2569 = vmax.f32 %v2416, 0.0
    %v2570 = vmax.f32 %v2418, 0.0
    %v2571 = vmax.f32 %v2505, 0.0
    %v2572 = vmax.f32 %v2507, 0.0
    %v2573 = vadd.f32 %v1691, %v2509
    %v2574 = vadd.f32 %v1692, %v2510
    %v2575 = vadd.f32 %v1693, %v2511
    %v2576 = vadd.f32 %v1694, %v2512
    %v2577 = vadd.f32 %v1695, %v2513
    %v2578 = vadd.f32 %v1696, %v2514
    %v2579 = vadd.f32 %v1697, %v2515
    %v2580 = vadd.f32 %v1698, %v2516
    %v2581 = vadd.f32 %v1699, %v2517
    %v2582 = vadd.f32 %v1700, %v2518
    %v2583 = vadd.f32 %v1701, %v2519
    %v2584 = vadd.f32 %v1702, %v2520
    %v2585 = vadd.f32 %v1703, %v2521
    %v2586 = vadd.f32 %v1704, %v2522
    %v2587 = vadd.f32 %v1705, %v2523
    %v2588 = vadd.f32 %v1706, %v2524
    %v2589 = vadd.f32 %v1707, %v2525
    %v2590 = vadd.f32 %v1708, %v2526
    %v2591 = vadd.f32 %v1709, %v2527
    %v2592 = vadd.f32 %v1710, %v2528
    %v2593 = vadd.f32 %v1711, %v2529
    %v2594 = vadd.f32 %v1712, %v2530
    %v2595 = vadd.f32 %v1713, %v2531
    %v2596 = vadd.f32 %v1714, %v2532
    %v2597 = vadd.f32 %v1715, %v2533
    %v2598 = vadd.f32 %v1716, %v2534
    %v2599 = vadd.f32 %v1717, %v2535
    %v2600 = vadd.f32 %v1718, %v2536
    %v2601 = vadd.f32 %v1719, %v2537
    %v2602 = vadd.f32 %v1720, %v2538
    %v2603 = vadd.f32 %v1721, %v2539
    %v2604 = vadd.f32 %v1722, %v2540
    %v2605 = vadd.f32 %v1723, %v2541
    %v2606 = vadd.f32 %v1724, %v2542
    %v2607 = vadd.f32 %v1725, %v2543
    %v2608 = vadd.f32 %v1726, %v2544
    %v2609 = vadd.f32 %v1727, %v2545
    %v2610 = vadd.f32 %v1728, %v2546
    %v2611 = vadd.f32 %v1729, %v2547
    %v2612 = vadd.f32 %v1730, %v2548
    %v2613 = vadd.f32 %v1731, %v2549
    %v2614 = vadd.f32 %v1732, %v2550
    %v2615 = vadd.f32 %v1733, %v2551
    %v2616 = vadd.f32 %v1734, %v2552
    %v2617 = vadd.f32 %v1735, %v2553
    %v2618 = vadd.f32 %v1736, %v2554
    %v2619 = vadd.f32 %v1737, %v2555
    %v2620 = vadd.f32 %v1738, %v2556
    %v2621 = vadd.f32 %v1739, %v2557
    %v2622 = vadd.f32 %v1740, %v2558
    %v2623 = vadd.f32 %v1741, %v2559
    %v2624 = vadd.f32 %v1742, %v2560
    %v2625 = vadd.f32 %v1743, %v2561
    %v2626 = vadd.f32 %v1744, %v2562
    %v2627 = vadd.f32 %v1745, %v2563
    %v2628 = vadd.f32 %v1746, %v2564
    %v2629 = vadd.f32 %v1747, %v2565
    %v2630 = vadd.f32 %v1748, %v2566
    %v2631 = vadd.f32 %v1749, %v2567
    %v2632 = vadd.f32 %v1750, %v2568
    %v2633 = vadd.f32 %v1751, %v2569
    %v2634 = vadd.f32 %v1752, %v2570
    %v2635 = vadd.f32 %v1753, %v2571
    %v2636 = vadd.f32 %v1754, %v2572
    %s2637 = scalar_lea.vmem [#allocation2], 64
    %v2638 = vld [vmem:[%s2637] sm:$0xff]
    %v2639 = vld [vmem:[%s2637 + $0x8] sm:$0xff]
    %v2640 = vld [vmem:[%s2637 + $0x10] sm:$0xff]
    %v2641 = vld [vmem:[%s2637 + $0x18] sm:$0xff]
    %s2642 = scalar_lea.vmem %s4, 64
    %v2643 = vld [vmem:[%s2642] sm:$0xff]
    %v2644 = vld [vmem:[%s2642 + $0x8] sm:$0xff]
    %v2645 = vld [vmem:[%s2642 + $0x10] sm:$0xff]
    %v2646 = vld [vmem:[%s2642 + $0x18] sm:$0xff]
    %2648 = vset.pattern.permute.xlu0 0
    %2649 = vperm.xlu0 %2648, %v2643
    %v2650 = vpop.permute.xlu0 %2649
    %2653 = vset.pattern.permute.xlu0 0
    %2654 = vperm.xlu0 %2653, %v2644
    %v2655 = vpop.permute.xlu0 %2654
    %2658 = vset.pattern.permute.xlu0 0
    %2659 = vperm.xlu0 %2658, %v2645
    %v2660 = vpop.permute.xlu0 %2659
    %2663 = vset.pattern.permute.xlu0 0
    %2664 = vperm.xlu0 %2663, %v2646
    %v2665 = vpop.permute.xlu0 %2664
    %v2668 = vsel %vm902, %v2638, 0
    %v2671 = vsel %vm902, %v2639, 0
    %v2674 = vsel %vm902, %v2640, 0
    %v2677 = vsel %vm902, %v2641, 0
    %2679 = vmatprep.subr.mxu0 0.0
    %2680 = vmatpush1.msra.mxu0 0.0
    %2681 = vmatprep.subr.mxu0 0.0
    %2682 = vmatpush1.msra.mxu0 0.0
    %2683 = vmatprep.subr.mxu0 0.0
    %2684 = vmatpush1.msra.mxu0 0.0
    %2685 = vmatprep.subr.mxu0 0.0
    %2686 = vmatpush1.msra.mxu0 0.0
    %2687 = vmatprep.subr.mxu0 0.0
    %2688 = vmatpush1.msra.mxu0 0.0
    %2689 = vmatprep.subr.mxu0 0.0
    %2690 = vmatpush1.msra.mxu0 0.0
    %2691 = vmatprep.subr.mxu0 0.0
    %2692 = vmatpush1.msra.mxu0 0.0
    %2693 = vmatprep.subr.mxu0 0.0
    %2694 = vmatpush1.msra.mxu0 0.0
    %2695 = vmatprep.subr.mxu0 0.0
    %2696 = vmatpush1.msra.mxu0 0.0
    %2697 = vmatprep.subr.mxu0 0.0
    %2698 = vmatpush1.msra.mxu0 0.0
    %2699 = vmatprep.subr.mxu0 0.0
    %2700 = vmatpush1.msra.mxu0 0.0
    %2701 = vmatprep.subr.mxu0 0.0
    %2702 = vmatpush1.msra.mxu0 0.0
    %2703 = vmatprep.subr.mxu0 %v2622
    %2704 = vmatpush1.msra.mxu0 %v2621
    %2705 = vmatprep.subr.mxu0 %v2606
    %2706 = vmatpush1.msra.mxu0 %v2605
    %2707 = vmatprep.subr.mxu0 %v2590
    %2708 = vmatpush1.msra.mxu0 %v2589
    %2709 = vmatprep.subr.mxu0 %v2574
    %2710 = vmatpush1.msra.mxu0 %v2573
    %2711 = vmatprep.subr.mxu0 0.0
    %2712 = vmatpush2.msra.mxu0 0.0
    %2713 = vmatprep.subr.mxu0 0.0
    %2714 = vmatpush2.msra.mxu0 0.0
    %2715 = vmatprep.subr.mxu0 0.0
    %2716 = vmatpush2.msra.mxu0 0.0
    %2717 = vmatprep.subr.mxu0 0.0
    %2718 = vmatpush2.msra.mxu0 0.0
    %2719 = vmatprep.subr.mxu0 0.0
    %2720 = vmatpush2.msra.mxu0 0.0
    %2721 = vmatprep.subr.mxu0 0.0
    %2722 = vmatpush2.msra.mxu0 0.0
    %2723 = vmatprep.subr.mxu0 0.0
    %2724 = vmatpush2.msra.mxu0 0.0
    %2725 = vmatprep.subr.mxu0 0.0
    %2726 = vmatpush2.msra.mxu0 0.0
    %2727 = vmatprep.subr.mxu0 0.0
    %2728 = vmatpush2.msra.mxu0 0.0
    %2729 = vmatprep.subr.mxu0 0.0
    %2730 = vmatpush2.msra.mxu0 0.0
    %2731 = vmatprep.subr.mxu0 0.0
    %2732 = vmatpush2.msra.mxu0 0.0
    %2733 = vmatprep.subr.mxu0 0.0
    %2734 = vmatpush2.msra.mxu0 0.0
    %2735 = vmatprep.subr.mxu0 0.0
    %2736 = vmatpush2.msra.mxu0 0.0
    %2737 = vmatprep.subr.mxu0 0.0
    %2738 = vmatpush2.msra.mxu0 0.0
    %2739 = vmatprep.subr.mxu0 0.0
    %2740 = vmatpush2.msra.mxu0 0.0
    %2741 = vmatprep.subr.mxu0 0.0
    %2742 = vmatpush2.msra.mxu0 0.0
    %2743 = vmatprep.mubr.f32.mxu0 0.0
    %2744 = vmatmul.mubr.f32.gmra.mxu0 %v2668
    %v2745 = vpop.f32.mrf.mxu0
    %v2746 = vadd.f32 %v2650, %v2745
    %v2747 = vpop.f32.mrf.mxu0
    %v2748 = vadd.f32 %v2650, %v2747
    %2749 = vmatprep.mubr.f32.mxu0 0.0
    %2750 = vmatmul.mubr.f32.gmra.mxu0 %v2671
    %v2751 = vpop.f32.mrf.mxu0
    %v2752 = vadd.f32 %v2655, %v2751
    %v2753 = vpop.f32.mrf.mxu0
    %v2754 = vadd.f32 %v2655, %v2753
    %2755 = vmatprep.mubr.f32.mxu0 0.0
    %2756 = vmatmul.mubr.f32.gmra.mxu0 %v2674
    %v2757 = vpop.f32.mrf.mxu0
    %v2758 = vadd.f32 %v2660, %v2757
    %v2759 = vpop.f32.mrf.mxu0
    %v2760 = vadd.f32 %v2660, %v2759
    %2761 = vmatprep.mubr.f32.mxu0 0.0
    %2762 = vmatmul.mubr.f32.gmra.mxu0 %v2677
    %v2763 = vpop.f32.mrf.mxu0
    %v2764 = vadd.f32 %v2665, %v2763
    %v2765 = vpop.f32.mrf.mxu0
    %v2766 = vadd.f32 %v2665, %v2765
    %2767 = vdwg.mxu0
    %2768 = vmatprep.subr.mxu0 0.0
    %2769 = vmatpush1.msra.mxu0 0.0
    %2770 = vmatprep.subr.mxu0 0.0
    %2771 = vmatpush1.msra.mxu0 0.0
    %2772 = vmatprep.subr.mxu0 0.0
    %2773 = vmatpush1.msra.mxu0 0.0
    %2774 = vmatprep.subr.mxu0 0.0
    %2775 = vmatpush1.msra.mxu0 0.0
    %2776 = vmatprep.subr.mxu0 0.0
    %2777 = vmatpush1.msra.mxu0 0.0
    %2778 = vmatprep.subr.mxu0 0.0
    %2779 = vmatpush1.msra.mxu0 0.0
    %2780 = vmatprep.subr.mxu0 0.0
    %2781 = vmatpush1.msra.mxu0 0.0
    %2782 = vmatprep.subr.mxu0 0.0
    %2783 = vmatpush1.msra.mxu0 0.0
    %2784 = vmatprep.subr.mxu0 0.0
    %2785 = vmatpush1.msra.mxu0 0.0
    %2786 = vmatprep.subr.mxu0 0.0
    %2787 = vmatpush1.msra.mxu0 0.0
    %2788 = vmatprep.subr.mxu0 0.0
    %2789 = vmatpush1.msra.mxu0 0.0
    %2790 = vmatprep.subr.mxu0 0.0
    %2791 = vmatpush1.msra.mxu0 0.0
    %2792 = vmatprep.subr.mxu0 %v2624
    %2793 = vmatpush1.msra.mxu0 %v2623
    %2794 = vmatprep.subr.mxu0 %v2608
    %2795 = vmatpush1.msra.mxu0 %v2607
    %2796 = vmatprep.subr.mxu0 %v2592
    %2797 = vmatpush1.msra.mxu0 %v2591
    %2798 = vmatprep.subr.mxu0 %v2576
    %2799 = vmatpush1.msra.mxu0 %v2575
    %2800 = vmatprep.subr.mxu0 0.0
    %2801 = vmatpush2.msra.mxu0 0.0
    %2802 = vmatprep.subr.mxu0 0.0
    %2803 = vmatpush2.msra.mxu0 0.0
    %2804 = vmatprep.subr.mxu0 0.0
    %2805 = vmatpush2.msra.mxu0 0.0
    %2806 = vmatprep.subr.mxu0 0.0
    %2807 = vmatpush2.msra.mxu0 0.0
    %2808 = vmatprep.subr.mxu0 0.0
    %2809 = vmatpush2.msra.mxu0 0.0
    %2810 = vmatprep.subr.mxu0 0.0
    %2811 = vmatpush2.msra.mxu0 0.0
    %2812 = vmatprep.subr.mxu0 0.0
    %2813 = vmatpush2.msra.mxu0 0.0
    %2814 = vmatprep.subr.mxu0 0.0
    %2815 = vmatpush2.msra.mxu0 0.0
    %2816 = vmatprep.subr.mxu0 0.0
    %2817 = vmatpush2.msra.mxu0 0.0
    %2818 = vmatprep.subr.mxu0 0.0
    %2819 = vmatpush2.msra.mxu0 0.0
    %2820 = vmatprep.subr.mxu0 0.0
    %2821 = vmatpush2.msra.mxu0 0.0
    %2822 = vmatprep.subr.mxu0 0.0
    %2823 = vmatpush2.msra.mxu0 0.0
    %2824 = vmatprep.subr.mxu0 0.0
    %2825 = vmatpush2.msra.mxu0 0.0
    %2826 = vmatprep.subr.mxu0 0.0
    %2827 = vmatpush2.msra.mxu0 0.0
    %2828 = vmatprep.subr.mxu0 0.0
    %2829 = vmatpush2.msra.mxu0 0.0
    %2830 = vmatprep.subr.mxu0 0.0
    %2831 = vmatpush2.msra.mxu0 0.0
    %2832 = vmatprep.mubr.f32.mxu0 0.0
    %2833 = vmatmul.mubr.f32.gmra.mxu0 %v2668
    %v2834 = vpop.f32.mrf.mxu0
    %v2835 = vadd.f32 %v2650, %v2834
    %v2836 = vpop.f32.mrf.mxu0
    %v2837 = vadd.f32 %v2650, %v2836
    %2838 = vmatprep.mubr.f32.mxu0 0.0
    %2839 = vmatmul.mubr.f32.gmra.mxu0 %v2671
    %v2840 = vpop.f32.mrf.mxu0
    %v2841 = vadd.f32 %v2655, %v2840
    %v2842 = vpop.f32.mrf.mxu0
    %v2843 = vadd.f32 %v2655, %v2842
    %2844 = vmatprep.mubr.f32.mxu0 0.0
    %2845 = vmatmul.mubr.f32.gmra.mxu0 %v2674
    %v2846 = vpop.f32.mrf.mxu0
    %v2847 = vadd.f32 %v2660, %v2846
    %v2848 = vpop.f32.mrf.mxu0
    %v2849 = vadd.f32 %v2660, %v2848
    %2850 = vmatprep.mubr.f32.mxu0 0.0
    %2851 = vmatmul.mubr.f32.gmra.mxu0 %v2677
    %v2852 = vpop.f32.mrf.mxu0
    %v2853 = vadd.f32 %v2665, %v2852
    %v2854 = vpop.f32.mrf.mxu0
    %v2855 = vadd.f32 %v2665, %v2854
    %2856 = vdwg.mxu0
    %2857 = vmatprep.subr.mxu0 0.0
    %2858 = vmatpush1.msra.mxu0 0.0
    %2859 = vmatprep.subr.mxu0 0.0
    %2860 = vmatpush1.msra.mxu0 0.0
    %2861 = vmatprep.subr.mxu0 0.0
    %2862 = vmatpush1.msra.mxu0 0.0
    %2863 = vmatprep.subr.mxu0 0.0
    %2864 = vmatpush1.msra.mxu0 0.0
    %2865 = vmatprep.subr.mxu0 0.0
    %2866 = vmatpush1.msra.mxu0 0.0
    %2867 = vmatprep.subr.mxu0 0.0
    %2868 = vmatpush1.msra.mxu0 0.0
    %2869 = vmatprep.subr.mxu0 0.0
    %2870 = vmatpush1.msra.mxu0 0.0
    %2871 = vmatprep.subr.mxu0 0.0
    %2872 = vmatpush1.msra.mxu0 0.0
    %2873 = vmatprep.subr.mxu0 0.0
    %2874 = vmatpush1.msra.mxu0 0.0
    %2875 = vmatprep.subr.mxu0 0.0
    %2876 = vmatpush1.msra.mxu0 0.0
    %2877 = vmatprep.subr.mxu0 0.0
    %2878 = vmatpush1.msra.mxu0 0.0
    %2879 = vmatprep.subr.mxu0 0.0
    %2880 = vmatpush1.msra.mxu0 0.0
    %2881 = vmatprep.subr.mxu0 %v2626
    %2882 = vmatpush1.msra.mxu0 %v2625
    %2883 = vmatprep.subr.mxu0 %v2610
    %2884 = vmatpush1.msra.mxu0 %v2609
    %2885 = vmatprep.subr.mxu0 %v2594
    %2886 = vmatpush1.msra.mxu0 %v2593
    %2887 = vmatprep.subr.mxu0 %v2578
    %2888 = vmatpush1.msra.mxu0 %v2577
    %2889 = vmatprep.subr.mxu0 0.0
    %2890 = vmatpush2.msra.mxu0 0.0
    %2891 = vmatprep.subr.mxu0 0.0
    %2892 = vmatpush2.msra.mxu0 0.0
    %2893 = vmatprep.subr.mxu0 0.0
    %2894 = vmatpush2.msra.mxu0 0.0
    %2895 = vmatprep.subr.mxu0 0.0
    %2896 = vmatpush2.msra.mxu0 0.0
    %2897 = vmatprep.subr.mxu0 0.0
    %2898 = vmatpush2.msra.mxu0 0.0
    %2899 = vmatprep.subr.mxu0 0.0
    %2900 = vmatpush2.msra.mxu0 0.0
    %2901 = vmatprep.subr.mxu0 0.0
    %2902 = vmatpush2.msra.mxu0 0.0
    %2903 = vmatprep.subr.mxu0 0.0
    %2904 = vmatpush2.msra.mxu0 0.0
    %2905 = vmatprep.subr.mxu0 0.0
    %2906 = vmatpush2.msra.mxu0 0.0
    %2907 = vmatprep.subr.mxu0 0.0
    %2908 = vmatpush2.msra.mxu0 0.0
    %2909 = vmatprep.subr.mxu0 0.0
    %2910 = vmatpush2.msra.mxu0 0.0
    %2911 = vmatprep.subr.mxu0 0.0
    %2912 = vmatpush2.msra.mxu0 0.0
    %2913 = vmatprep.subr.mxu0 0.0
    %2914 = vmatpush2.msra.mxu0 0.0
    %2915 = vmatprep.subr.mxu0 0.0
    %2916 = vmatpush2.msra.mxu0 0.0
    %2917 = vmatprep.subr.mxu0 0.0
    %2918 = vmatpush2.msra.mxu0 0.0
    %2919 = vmatprep.subr.mxu0 0.0
    %2920 = vmatpush2.msra.mxu0 0.0
    %2921 = vmatprep.mubr.f32.mxu0 0.0
    %2922 = vmatmul.mubr.f32.gmra.mxu0 %v2668
    %v2923 = vpop.f32.mrf.mxu0
    %v2924 = vadd.f32 %v2650, %v2923
    %v2925 = vpop.f32.mrf.mxu0
    %v2926 = vadd.f32 %v2650, %v2925
    %2927 = vmatprep.mubr.f32.mxu0 0.0
    %2928 = vmatmul.mubr.f32.gmra.mxu0 %v2671
    %v2929 = vpop.f32.mrf.mxu0
    %v2930 = vadd.f32 %v2655, %v2929
    %v2931 = vpop.f32.mrf.mxu0
    %v2932 = vadd.f32 %v2655, %v2931
    %2933 = vmatprep.mubr.f32.mxu0 0.0
    %2934 = vmatmul.mubr.f32.gmra.mxu0 %v2674
    %v2935 = vpop.f32.mrf.mxu0
    %v2936 = vadd.f32 %v2660, %v2935
    %v2937 = vpop.f32.mrf.mxu0
    %v2938 = vadd.f32 %v2660, %v2937
    %2939 = vmatprep.mubr.f32.mxu0 0.0
    %2940 = vmatmul.mubr.f32.gmra.mxu0 %v2677
    %v2941 = vpop.f32.mrf.mxu0
    %v2942 = vadd.f32 %v2665, %v2941
    %v2943 = vpop.f32.mrf.mxu0
    %v2944 = vadd.f32 %v2665, %v2943
    %2945 = vdwg.mxu0
    %2946 = vmatprep.subr.mxu0 0.0
    %2947 = vmatpush1.msra.mxu0 0.0
    %2948 = vmatprep.subr.mxu0 0.0
    %2949 = vmatpush1.msra.mxu0 0.0
    %2950 = vmatprep.subr.mxu0 0.0
    %2951 = vmatpush1.msra.mxu0 0.0
    %2952 = vmatprep.subr.mxu0 0.0
    %2953 = vmatpush1.msra.mxu0 0.0
    %2954 = vmatprep.subr.mxu0 0.0
    %2955 = vmatpush1.msra.mxu0 0.0
    %2956 = vmatprep.subr.mxu0 0.0
    %2957 = vmatpush1.msra.mxu0 0.0
    %2958 = vmatprep.subr.mxu0 0.0
    %2959 = vmatpush1.msra.mxu0 0.0
    %2960 = vmatprep.subr.mxu0 0.0
    %2961 = vmatpush1.msra.mxu0 0.0
    %2962 = vmatprep.subr.mxu0 0.0
    %2963 = vmatpush1.msra.mxu0 0.0
    %2964 = vmatprep.subr.mxu0 0.0
    %2965 = vmatpush1.msra.mxu0 0.0
    %2966 = vmatprep.subr.mxu0 0.0
    %2967 = vmatpush1.msra.mxu0 0.0
    %2968 = vmatprep.subr.mxu0 0.0
    %2969 = vmatpush1.msra.mxu0 0.0
    %2970 = vmatprep.subr.mxu0 %v2628
    %2971 = vmatpush1.msra.mxu0 %v2627
    %2972 = vmatprep.subr.mxu0 %v2612
    %2973 = vmatpush1.msra.mxu0 %v2611
    %2974 = vmatprep.subr.mxu0 %v2596
    %2975 = vmatpush1.msra.mxu0 %v2595
    %2976 = vmatprep.subr.mxu0 %v2580
    %2977 = vmatpush1.msra.mxu0 %v2579
    %2978 = vmatprep.subr.mxu0 0.0
    %2979 = vmatpush2.msra.mxu0 0.0
    %2980 = vmatprep.subr.mxu0 0.0
    %2981 = vmatpush2.msra.mxu0 0.0
    %2982 = vmatprep.subr.mxu0 0.0
    %2983 = vmatpush2.msra.mxu0 0.0
    %2984 = vmatprep.subr.mxu0 0.0
    %2985 = vmatpush2.msra.mxu0 0.0
    %2986 = vmatprep.subr.mxu0 0.0
    %2987 = vmatpush2.msra.mxu0 0.0
    %2988 = vmatprep.subr.mxu0 0.0
    %2989 = vmatpush2.msra.mxu0 0.0
    %2990 = vmatprep.subr.mxu0 0.0
    %2991 = vmatpush2.msra.mxu0 0.0
    %2992 = vmatprep.subr.mxu0 0.0
    %2993 = vmatpush2.msra.mxu0 0.0
    %2994 = vmatprep.subr.mxu0 0.0
    %2995 = vmatpush2.msra.mxu0 0.0
    %2996 = vmatprep.subr.mxu0 0.0
    %2997 = vmatpush2.msra.mxu0 0.0
    %2998 = vmatprep.subr.mxu0 0.0
    %2999 = vmatpush2.msra.mxu0 0.0
    %3000 = vmatprep.subr.mxu0 0.0
    %3001 = vmatpush2.msra.mxu0 0.0
    %3002 = vmatprep.subr.mxu0 0.0
    %3003 = vmatpush2.msra.mxu0 0.0
    %3004 = vmatprep.subr.mxu0 0.0
    %3005 = vmatpush2.msra.mxu0 0.0
    %3006 = vmatprep.subr.mxu0 0.0
    %3007 = vmatpush2.msra.mxu0 0.0
    %3008 = vmatprep.subr.mxu0 0.0
    %3009 = vmatpush2.msra.mxu0 0.0
    %3010 = vmatprep.mubr.f32.mxu0 0.0
    %3011 = vmatmul.mubr.f32.gmra.mxu0 %v2668
    %v3012 = vpop.f32.mrf.mxu0
    %v3013 = vadd.f32 %v2650, %v3012
    %v3014 = vpop.f32.mrf.mxu0
    %v3015 = vadd.f32 %v2650, %v3014
    %3016 = vmatprep.mubr.f32.mxu0 0.0
    %3017 = vmatmul.mubr.f32.gmra.mxu0 %v2671
    %v3018 = vpop.f32.mrf.mxu0
    %v3019 = vadd.f32 %v2655, %v3018
    %v3020 = vpop.f32.mrf.mxu0
    %v3021 = vadd.f32 %v2655, %v3020
    %3022 = vmatprep.mubr.f32.mxu0 0.0
    %3023 = vmatmul.mubr.f32.gmra.mxu0 %v2674
    %v3024 = vpop.f32.mrf.mxu0
    %v3025 = vadd.f32 %v2660, %v3024
    %v3026 = vpop.f32.mrf.mxu0
    %v3027 = vadd.f32 %v2660, %v3026
    %3028 = vmatprep.mubr.f32.mxu0 0.0
    %3029 = vmatmul.mubr.f32.gmra.mxu0 %v2677
    %v3030 = vpop.f32.mrf.mxu0
    %v3031 = vadd.f32 %v2665, %v3030
    %v3032 = vpop.f32.mrf.mxu0
    %v3033 = vadd.f32 %v2665, %v3032
    %3034 = vdwg.mxu0
    %3035 = vmatprep.subr.mxu0 0.0
    %3036 = vmatpush1.msra.mxu0 0.0
    %3037 = vmatprep.subr.mxu0 0.0
    %3038 = vmatpush1.msra.mxu0 0.0
    %3039 = vmatprep.subr.mxu0 0.0
    %3040 = vmatpush1.msra.mxu0 0.0
    %3041 = vmatprep.subr.mxu0 0.0
    %3042 = vmatpush1.msra.mxu0 0.0
    %3043 = vmatprep.subr.mxu0 0.0
    %3044 = vmatpush1.msra.mxu0 0.0
    %3045 = vmatprep.subr.mxu0 0.0
    %3046 = vmatpush1.msra.mxu0 0.0
    %3047 = vmatprep.subr.mxu0 0.0
    %3048 = vmatpush1.msra.mxu0 0.0
    %3049 = vmatprep.subr.mxu0 0.0
    %3050 = vmatpush1.msra.mxu0 0.0
    %3051 = vmatprep.subr.mxu0 0.0
    %3052 = vmatpush1.msra.mxu0 0.0
    %3053 = vmatprep.subr.mxu0 0.0
    %3054 = vmatpush1.msra.mxu0 0.0
    %3055 = vmatprep.subr.mxu0 0.0
    %3056 = vmatpush1.msra.mxu0 0.0
    %3057 = vmatprep.subr.mxu0 0.0
    %3058 = vmatpush1.msra.mxu0 0.0
    %3059 = vmatprep.subr.mxu0 %v2630
    %3060 = vmatpush1.msra.mxu0 %v2629
    %3061 = vmatprep.subr.mxu0 %v2614
    %3062 = vmatpush1.msra.mxu0 %v2613
    %3063 = vmatprep.subr.mxu0 %v2598
    %3064 = vmatpush1.msra.mxu0 %v2597
    %3065 = vmatprep.subr.mxu0 %v2582
    %3066 = vmatpush1.msra.mxu0 %v2581
    %3067 = vmatprep.subr.mxu0 0.0
    %3068 = vmatpush2.msra.mxu0 0.0
    %3069 = vmatprep.subr.mxu0 0.0
    %3070 = vmatpush2.msra.mxu0 0.0
    %3071 = vmatprep.subr.mxu0 0.0
    %3072 = vmatpush2.msra.mxu0 0.0
    %3073 = vmatprep.subr.mxu0 0.0
    %3074 = vmatpush2.msra.mxu0 0.0
    %3075 = vmatprep.subr.mxu0 0.0
    %3076 = vmatpush2.msra.mxu0 0.0
    %3077 = vmatprep.subr.mxu0 0.0
    %3078 = vmatpush2.msra.mxu0 0.0
    %3079 = vmatprep.subr.mxu0 0.0
    %3080 = vmatpush2.msra.mxu0 0.0
    %3081 = vmatprep.subr.mxu0 0.0
    %3082 = vmatpush2.msra.mxu0 0.0
    %3083 = vmatprep.subr.mxu0 0.0
    %3084 = vmatpush2.msra.mxu0 0.0
    %3085 = vmatprep.subr.mxu0 0.0
    %3086 = vmatpush2.msra.mxu0 0.0
    %3087 = vmatprep.subr.mxu0 0.0
    %3088 = vmatpush2.msra.mxu0 0.0
    %3089 = vmatprep.subr.mxu0 0.0
    %3090 = vmatpush2.msra.mxu0 0.0
    %3091 = vmatprep.subr.mxu0 0.0
    %3092 = vmatpush2.msra.mxu0 0.0
    %3093 = vmatprep.subr.mxu0 0.0
    %3094 = vmatpush2.msra.mxu0 0.0
    %3095 = vmatprep.subr.mxu0 0.0
    %3096 = vmatpush2.msra.mxu0 0.0
    %3097 = vmatprep.subr.mxu0 0.0
    %3098 = vmatpush2.msra.mxu0 0.0
    %3099 = vmatprep.mubr.f32.mxu0 0.0
    %3100 = vmatmul.mubr.f32.gmra.mxu0 %v2668
    %v3101 = vpop.f32.mrf.mxu0
    %v3102 = vadd.f32 %v2650, %v3101
    %v3103 = vpop.f32.mrf.mxu0
    %v3104 = vadd.f32 %v2650, %v3103
    %3105 = vmatprep.mubr.f32.mxu0 0.0
    %3106 = vmatmul.mubr.f32.gmra.mxu0 %v2671
    %v3107 = vpop.f32.mrf.mxu0
    %v3108 = vadd.f32 %v2655, %v3107
    %v3109 = vpop.f32.mrf.mxu0
    %v3110 = vadd.f32 %v2655, %v3109
    %3111 = vmatprep.mubr.f32.mxu0 0.0
    %3112 = vmatmul.mubr.f32.gmra.mxu0 %v2674
    %v3113 = vpop.f32.mrf.mxu0
    %v3114 = vadd.f32 %v2660, %v3113
    %v3115 = vpop.f32.mrf.mxu0
    %v3116 = vadd.f32 %v2660, %v3115
    %3117 = vmatprep.mubr.f32.mxu0 0.0
    %3118 = vmatmul.mubr.f32.gmra.mxu0 %v2677
    %v3119 = vpop.f32.mrf.mxu0
    %v3120 = vadd.f32 %v2665, %v3119
    %v3121 = vpop.f32.mrf.mxu0
    %v3122 = vadd.f32 %v2665, %v3121
    %3123 = vdwg.mxu0
    %3124 = vmatprep.subr.mxu0 0.0
    %3125 = vmatpush1.msra.mxu0 0.0
    %3126 = vmatprep.subr.mxu0 0.0
    %3127 = vmatpush1.msra.mxu0 0.0
    %3128 = vmatprep.subr.mxu0 0.0
    %3129 = vmatpush1.msra.mxu0 0.0
    %3130 = vmatprep.subr.mxu0 0.0
    %3131 = vmatpush1.msra.mxu0 0.0
    %3132 = vmatprep.subr.mxu0 0.0
    %3133 = vmatpush1.msra.mxu0 0.0
    %3134 = vmatprep.subr.mxu0 0.0
    %3135 = vmatpush1.msra.mxu0 0.0
    %3136 = vmatprep.subr.mxu0 0.0
    %3137 = vmatpush1.msra.mxu0 0.0
    %3138 = vmatprep.subr.mxu0 0.0
    %3139 = vmatpush1.msra.mxu0 0.0
    %3140 = vmatprep.subr.mxu0 0.0
    %3141 = vmatpush1.msra.mxu0 0.0
    %3142 = vmatprep.subr.mxu0 0.0
    %3143 = vmatpush1.msra.mxu0 0.0
    %3144 = vmatprep.subr.mxu0 0.0
    %3145 = vmatpush1.msra.mxu0 0.0
    %3146 = vmatprep.subr.mxu0 0.0
    %3147 = vmatpush1.msra.mxu0 0.0
    %3148 = vmatprep.subr.mxu0 %v2632
    %3149 = vmatpush1.msra.mxu0 %v2631
    %3150 = vmatprep.subr.mxu0 %v2616
    %3151 = vmatpush1.msra.mxu0 %v2615
    %3152 = vmatprep.subr.mxu0 %v2600
    %3153 = vmatpush1.msra.mxu0 %v2599
    %3154 = vmatprep.subr.mxu0 %v2584
    %3155 = vmatpush1.msra.mxu0 %v2583
    %3156 = vmatprep.subr.mxu0 0.0
    %3157 = vmatpush2.msra.mxu0 0.0
    %3158 = vmatprep.subr.mxu0 0.0
    %3159 = vmatpush2.msra.mxu0 0.0
    %3160 = vmatprep.subr.mxu0 0.0
    %3161 = vmatpush2.msra.mxu0 0.0
    %3162 = vmatprep.subr.mxu0 0.0
    %3163 = vmatpush2.msra.mxu0 0.0
    %3164 = vmatprep.subr.mxu0 0.0
    %3165 = vmatpush2.msra.mxu0 0.0
    %3166 = vmatprep.subr.mxu0 0.0
    %3167 = vmatpush2.msra.mxu0 0.0
    %3168 = vmatprep.subr.mxu0 0.0
    %3169 = vmatpush2.msra.mxu0 0.0
    %3170 = vmatprep.subr.mxu0 0.0
    %3171 = vmatpush2.msra.mxu0 0.0
    %3172 = vmatprep.subr.mxu0 0.0
    %3173 = vmatpush2.msra.mxu0 0.0
    %3174 = vmatprep.subr.mxu0 0.0
    %3175 = vmatpush2.msra.mxu0 0.0
    %3176 = vmatprep.subr.mxu0 0.0
    %3177 = vmatpush2.msra.mxu0 0.0
    %3178 = vmatprep.subr.mxu0 0.0
    %3179 = vmatpush2.msra.mxu0 0.0
    %3180 = vmatprep.subr.mxu0 0.0
    %3181 = vmatpush2.msra.mxu0 0.0
    %3182 = vmatprep.subr.mxu0 0.0
    %3183 = vmatpush2.msra.mxu0 0.0
    %3184 = vmatprep.subr.mxu0 0.0
    %3185 = vmatpush2.msra.mxu0 0.0
    %3186 = vmatprep.subr.mxu0 0.0
    %3187 = vmatpush2.msra.mxu0 0.0
    %3188 = vmatprep.mubr.f32.mxu0 0.0
    %3189 = vmatmul.mubr.f32.gmra.mxu0 %v2668
    %v3190 = vpop.f32.mrf.mxu0
    %v3191 = vadd.f32 %v2650, %v3190
    %v3192 = vpop.f32.mrf.mxu0
    %v3193 = vadd.f32 %v2650, %v3192
    %3194 = vmatprep.mubr.f32.mxu0 0.0
    %3195 = vmatmul.mubr.f32.gmra.mxu0 %v2671
    %v3196 = vpop.f32.mrf.mxu0
    %v3197 = vadd.f32 %v2655, %v3196
    %v3198 = vpop.f32.mrf.mxu0
    %v3199 = vadd.f32 %v2655, %v3198
    %3200 = vmatprep.mubr.f32.mxu0 0.0
    %3201 = vmatmul.mubr.f32.gmra.mxu0 %v2674
    %v3202 = vpop.f32.mrf.mxu0
    %v3203 = vadd.f32 %v2660, %v3202
    %v3204 = vpop.f32.mrf.mxu0
    %v3205 = vadd.f32 %v2660, %v3204
    %3206 = vmatprep.mubr.f32.mxu0 0.0
    %3207 = vmatmul.mubr.f32.gmra.mxu0 %v2677
    %v3208 = vpop.f32.mrf.mxu0
    %v3209 = vadd.f32 %v2665, %v3208
    %v3210 = vpop.f32.mrf.mxu0
    %v3211 = vadd.f32 %v2665, %v3210
    %3212 = vdwg.mxu0
    %3213 = vmatprep.subr.mxu0 0.0
    %3214 = vmatpush1.msra.mxu0 0.0
    %3215 = vmatprep.subr.mxu0 0.0
    %3216 = vmatpush1.msra.mxu0 0.0
    %3217 = vmatprep.subr.mxu0 0.0
    %3218 = vmatpush1.msra.mxu0 0.0
    %3219 = vmatprep.subr.mxu0 0.0
    %3220 = vmatpush1.msra.mxu0 0.0
    %3221 = vmatprep.subr.mxu0 0.0
    %3222 = vmatpush1.msra.mxu0 0.0
    %3223 = vmatprep.subr.mxu0 0.0
    %3224 = vmatpush1.msra.mxu0 0.0
    %3225 = vmatprep.subr.mxu0 0.0
    %3226 = vmatpush1.msra.mxu0 0.0
    %3227 = vmatprep.subr.mxu0 0.0
    %3228 = vmatpush1.msra.mxu0 0.0
    %3229 = vmatprep.subr.mxu0 0.0
    %3230 = vmatpush1.msra.mxu0 0.0
    %3231 = vmatprep.subr.mxu0 0.0
    %3232 = vmatpush1.msra.mxu0 0.0
    %3233 = vmatprep.subr.mxu0 0.0
    %3234 = vmatpush1.msra.mxu0 0.0
    %3235 = vmatprep.subr.mxu0 0.0
    %3236 = vmatpush1.msra.mxu0 0.0
    %3237 = vmatprep.subr.mxu0 %v2634
    %3238 = vmatpush1.msra.mxu0 %v2633
    %3239 = vmatprep.subr.mxu0 %v2618
    %3240 = vmatpush1.msra.mxu0 %v2617
    %3241 = vmatprep.subr.mxu0 %v2602
    %3242 = vmatpush1.msra.mxu0 %v2601
    %3243 = vmatprep.subr.mxu0 %v2586
    %3244 = vmatpush1.msra.mxu0 %v2585
    %3245 = vmatprep.subr.mxu0 0.0
    %3246 = vmatpush2.msra.mxu0 0.0
    %3247 = vmatprep.subr.mxu0 0.0
    %3248 = vmatpush2.msra.mxu0 0.0
    %3249 = vmatprep.subr.mxu0 0.0
    %3250 = vmatpush2.msra.mxu0 0.0
    %3251 = vmatprep.subr.mxu0 0.0
    %3252 = vmatpush2.msra.mxu0 0.0
    %3253 = vmatprep.subr.mxu0 0.0
    %3254 = vmatpush2.msra.mxu0 0.0
    %3255 = vmatprep.subr.mxu0 0.0
    %3256 = vmatpush2.msra.mxu0 0.0
    %3257 = vmatprep.subr.mxu0 0.0
    %3258 = vmatpush2.msra.mxu0 0.0
    %3259 = vmatprep.subr.mxu0 0.0
    %3260 = vmatpush2.msra.mxu0 0.0
    %3261 = vmatprep.subr.mxu0 0.0
    %3262 = vmatpush2.msra.mxu0 0.0
    %3263 = vmatprep.subr.mxu0 0.0
    %3264 = vmatpush2.msra.mxu0 0.0
    %3265 = vmatprep.subr.mxu0 0.0
    %3266 = vmatpush2.msra.mxu0 0.0
    %3267 = vmatprep.subr.mxu0 0.0
    %3268 = vmatpush2.msra.mxu0 0.0
    %3269 = vmatprep.subr.mxu0 0.0
    %3270 = vmatpush2.msra.mxu0 0.0
    %3271 = vmatprep.subr.mxu0 0.0
    %3272 = vmatpush2.msra.mxu0 0.0
    %3273 = vmatprep.subr.mxu0 0.0
    %3274 = vmatpush2.msra.mxu0 0.0
    %3275 = vmatprep.subr.mxu0 0.0
    %3276 = vmatpush2.msra.mxu0 0.0
    %3277 = vmatprep.mubr.f32.mxu0 0.0
    %3278 = vmatmul.mubr.f32.gmra.mxu0 %v2668
    %v3279 = vpop.f32.mrf.mxu0
    %v3280 = vadd.f32 %v2650, %v3279
    %v3281 = vpop.f32.mrf.mxu0
    %v3282 = vadd.f32 %v2650, %v3281
    %3283 = vmatprep.mubr.f32.mxu0 0.0
    %3284 = vmatmul.mubr.f32.gmra.mxu0 %v2671
    %v3285 = vpop.f32.mrf.mxu0
    %v3286 = vadd.f32 %v2655, %v3285
    %v3287 = vpop.f32.mrf.mxu0
    %v3288 = vadd.f32 %v2655, %v3287
    %3289 = vmatprep.mubr.f32.mxu0 0.0
    %3290 = vmatmul.mubr.f32.gmra.mxu0 %v2674
    %v3291 = vpop.f32.mrf.mxu0
    %v3292 = vadd.f32 %v2660, %v3291
    %v3293 = vpop.f32.mrf.mxu0
    %v3294 = vadd.f32 %v2660, %v3293
    %3295 = vmatprep.mubr.f32.mxu0 0.0
    %3296 = vmatmul.mubr.f32.gmra.mxu0 %v2677
    %v3297 = vpop.f32.mrf.mxu0
    %v3298 = vadd.f32 %v2665, %v3297
    %v3299 = vpop.f32.mrf.mxu0
    %v3300 = vadd.f32 %v2665, %v3299
    %3301 = vdwg.mxu0
    %3302 = vmatprep.subr.mxu0 0.0
    %3303 = vmatpush1.msra.mxu0 0.0
    %3304 = vmatprep.subr.mxu0 0.0
    %3305 = vmatpush1.msra.mxu0 0.0
    %3306 = vmatprep.subr.mxu0 0.0
    %3307 = vmatpush1.msra.mxu0 0.0
    %3308 = vmatprep.subr.mxu0 0.0
    %3309 = vmatpush1.msra.mxu0 0.0
    %3310 = vmatprep.subr.mxu0 0.0
    %3311 = vmatpush1.msra.mxu0 0.0
    %3312 = vmatprep.subr.mxu0 0.0
    %3313 = vmatpush1.msra.mxu0 0.0
    %3314 = vmatprep.subr.mxu0 0.0
    %3315 = vmatpush1.msra.mxu0 0.0
    %3316 = vmatprep.subr.mxu0 0.0
    %3317 = vmatpush1.msra.mxu0 0.0
    %3318 = vmatprep.subr.mxu0 0.0
    %3319 = vmatpush1.msra.mxu0 0.0
    %3320 = vmatprep.subr.mxu0 0.0
    %3321 = vmatpush1.msra.mxu0 0.0
    %3322 = vmatprep.subr.mxu0 0.0
    %3323 = vmatpush1.msra.mxu0 0.0
    %3324 = vmatprep.subr.mxu0 0.0
    %3325 = vmatpush1.msra.mxu0 0.0
    %3326 = vmatprep.subr.mxu0 %v2636
    %3327 = vmatpush1.msra.mxu0 %v2635
    %3328 = vmatprep.subr.mxu0 %v2620
    %3329 = vmatpush1.msra.mxu0 %v2619
    %3330 = vmatprep.subr.mxu0 %v2604
    %3331 = vmatpush1.msra.mxu0 %v2603
    %3332 = vmatprep.subr.mxu0 %v2588
    %3333 = vmatpush1.msra.mxu0 %v2587
    %3334 = vmatprep.subr.mxu0 0.0
    %3335 = vmatpush2.msra.mxu0 0.0
    %3336 = vmatprep.subr.mxu0 0.0
    %3337 = vmatpush2.msra.mxu0 0.0
    %3338 = vmatprep.subr.mxu0 0.0
    %3339 = vmatpush2.msra.mxu0 0.0
    %3340 = vmatprep.subr.mxu0 0.0
    %3341 = vmatpush2.msra.mxu0 0.0
    %3342 = vmatprep.subr.mxu0 0.0
    %3343 = vmatpush2.msra.mxu0 0.0
    %3344 = vmatprep.subr.mxu0 0.0
    %3345 = vmatpush2.msra.mxu0 0.0
    %3346 = vmatprep.subr.mxu0 0.0
    %3347 = vmatpush2.msra.mxu0 0.0
    %3348 = vmatprep.subr.mxu0 0.0
    %3349 = vmatpush2.msra.mxu0 0.0
    %3350 = vmatprep.subr.mxu0 0.0
    %3351 = vmatpush2.msra.mxu0 0.0
    %3352 = vmatprep.subr.mxu0 0.0
    %3353 = vmatpush2.msra.mxu0 0.0
    %3354 = vmatprep.subr.mxu0 0.0
    %3355 = vmatpush2.msra.mxu0 0.0
    %3356 = vmatprep.subr.mxu0 0.0
    %3357 = vmatpush2.msra.mxu0 0.0
    %3358 = vmatprep.subr.mxu0 0.0
    %3359 = vmatpush2.msra.mxu0 0.0
    %3360 = vmatprep.subr.mxu0 0.0
    %3361 = vmatpush2.msra.mxu0 0.0
    %3362 = vmatprep.subr.mxu0 0.0
    %3363 = vmatpush2.msra.mxu0 0.0
    %3364 = vmatprep.subr.mxu0 0.0
    %3365 = vmatpush2.msra.mxu0 0.0
    %3366 = vmatprep.mubr.f32.mxu0 0.0
    %3367 = vmatmul.mubr.f32.gmra.mxu0 %v2668
    %v3368 = vpop.f32.mrf.mxu0
    %v3369 = vadd.f32 %v2650, %v3368
    %v3370 = vpop.f32.mrf.mxu0
    %v3371 = vadd.f32 %v2650, %v3370
    %3372 = vmatprep.mubr.f32.mxu0 0.0
    %3373 = vmatmul.mubr.f32.gmra.mxu0 %v2671
    %v3374 = vpop.f32.mrf.mxu0
    %v3375 = vadd.f32 %v2655, %v3374
    %v3376 = vpop.f32.mrf.mxu0
    %v3377 = vadd.f32 %v2655, %v3376
    %3378 = vmatprep.mubr.f32.mxu0 0.0
    %3379 = vmatmul.mubr.f32.gmra.mxu0 %v2674
    %v3380 = vpop.f32.mrf.mxu0
    %v3381 = vadd.f32 %v2660, %v3380
    %v3382 = vpop.f32.mrf.mxu0
    %v3383 = vadd.f32 %v2660, %v3382
    %3384 = vmatprep.mubr.f32.mxu0 0.0
    %3385 = vmatmul.mubr.f32.gmra.mxu0 %v2677
    %v3386 = vpop.f32.mrf.mxu0
    %v3387 = vadd.f32 %v2665, %v3386
    %v3388 = vpop.f32.mrf.mxu0
    %v3389 = vadd.f32 %v2665, %v3388
    %3390 = vdwg.mxu0
    %v3391 = vmax.f32 %v2746, 0.0
    %v3392 = vmax.f32 %v2748, 0.0
    %v3393 = vmax.f32 %v2835, 0.0
    %v3394 = vmax.f32 %v2837, 0.0
    %v3395 = vmax.f32 %v2924, 0.0
    %v3396 = vmax.f32 %v2926, 0.0
    %v3397 = vmax.f32 %v3013, 0.0
    %v3398 = vmax.f32 %v3015, 0.0
    %v3399 = vmax.f32 %v3102, 0.0
    %v3400 = vmax.f32 %v3104, 0.0
    %v3401 = vmax.f32 %v3191, 0.0
    %v3402 = vmax.f32 %v3193, 0.0
    %v3403 = vmax.f32 %v3280, 0.0
    %v3404 = vmax.f32 %v3282, 0.0
    %v3405 = vmax.f32 %v3369, 0.0
    %v3406 = vmax.f32 %v3371, 0.0
    %v3407 = vmax.f32 %v2752, 0.0
    %v3408 = vmax.f32 %v2754, 0.0
    %v3409 = vmax.f32 %v2841, 0.0
    %v3410 = vmax.f32 %v2843, 0.0
    %v3411 = vmax.f32 %v2930, 0.0
    %v3412 = vmax.f32 %v2932, 0.0
    %v3413 = vmax.f32 %v3019, 0.0
    %v3414 = vmax.f32 %v3021, 0.0
    %v3415 = vmax.f32 %v3108, 0.0
    %v3416 = vmax.f32 %v3110, 0.0
    %v3417 = vmax.f32 %v3197, 0.0
    %v3418 = vmax.f32 %v3199, 0.0
    %v3419 = vmax.f32 %v3286, 0.0
    %v3420 = vmax.f32 %v3288, 0.0
    %v3421 = vmax.f32 %v3375, 0.0
    %v3422 = vmax.f32 %v3377, 0.0
    %v3423 = vmax.f32 %v2758, 0.0
    %v3424 = vmax.f32 %v2760, 0.0
    %v3425 = vmax.f32 %v2847, 0.0
    %v3426 = vmax.f32 %v2849, 0.0
    %v3427 = vmax.f32 %v2936, 0.0
    %v3428 = vmax.f32 %v2938, 0.0
    %v3429 = vmax.f32 %v3025, 0.0
    %v3430 = vmax.f32 %v3027, 0.0
    %v3431 = vmax.f32 %v3114, 0.0
    %v3432 = vmax.f32 %v3116, 0.0
    %v3433 = vmax.f32 %v3203, 0.0
    %v3434 = vmax.f32 %v3205, 0.0
    %v3435 = vmax.f32 %v3292, 0.0
    %v3436 = vmax.f32 %v3294, 0.0
    %v3437 = vmax.f32 %v3381, 0.0
    %v3438 = vmax.f32 %v3383, 0.0
    %v3439 = vmax.f32 %v2764, 0.0
    %v3440 = vmax.f32 %v2766, 0.0
    %v3441 = vmax.f32 %v2853, 0.0
    %v3442 = vmax.f32 %v2855, 0.0
    %v3443 = vmax.f32 %v2942, 0.0
    %v3444 = vmax.f32 %v2944, 0.0
    %v3445 = vmax.f32 %v3031, 0.0
    %v3446 = vmax.f32 %v3033, 0.0
    %v3447 = vmax.f32 %v3120, 0.0
    %v3448 = vmax.f32 %v3122, 0.0
    %v3449 = vmax.f32 %v3209, 0.0
    %v3450 = vmax.f32 %v3211, 0.0
    %v3451 = vmax.f32 %v3298, 0.0
    %v3452 = vmax.f32 %v3300, 0.0
    %v3453 = vmax.f32 %v3387, 0.0
    %v3454 = vmax.f32 %v3389, 0.0
    %v3455 = vadd.f32 %v2573, %v3391
    %v3456 = vadd.f32 %v2574, %v3392
    %v3457 = vadd.f32 %v2575, %v3393
    %v3458 = vadd.f32 %v2576, %v3394
    %v3459 = vadd.f32 %v2577, %v3395
    %v3460 = vadd.f32 %v2578, %v3396
    %v3461 = vadd.f32 %v2579, %v3397
    %v3462 = vadd.f32 %v2580, %v3398
    %v3463 = vadd.f32 %v2581, %v3399
    %v3464 = vadd.f32 %v2582, %v3400
    %v3465 = vadd.f32 %v2583, %v3401
    %v3466 = vadd.f32 %v2584, %v3402
    %v3467 = vadd.f32 %v2585, %v3403
    %v3468 = vadd.f32 %v2586, %v3404
    %v3469 = vadd.f32 %v2587, %v3405
    %v3470 = vadd.f32 %v2588, %v3406
    %v3471 = vadd.f32 %v2589, %v3407
    %v3472 = vadd.f32 %v2590, %v3408
    %v3473 = vadd.f32 %v2591, %v3409
    %v3474 = vadd.f32 %v2592, %v3410
    %v3475 = vadd.f32 %v2593, %v3411
    %v3476 = vadd.f32 %v2594, %v3412
    %v3477 = vadd.f32 %v2595, %v3413
    %v3478 = vadd.f32 %v2596, %v3414
    %v3479 = vadd.f32 %v2597, %v3415
    %v3480 = vadd.f32 %v2598, %v3416
    %v3481 = vadd.f32 %v2599, %v3417
    %v3482 = vadd.f32 %v2600, %v3418
    %v3483 = vadd.f32 %v2601, %v3419
    %v3484 = vadd.f32 %v2602, %v3420
    %v3485 = vadd.f32 %v2603, %v3421
    %v3486 = vadd.f32 %v2604, %v3422
    %v3487 = vadd.f32 %v2605, %v3423
    %v3488 = vadd.f32 %v2606, %v3424
    %v3489 = vadd.f32 %v2607, %v3425
    %v3490 = vadd.f32 %v2608, %v3426
    %v3491 = vadd.f32 %v2609, %v3427
    %v3492 = vadd.f32 %v2610, %v3428
    %v3493 = vadd.f32 %v2611, %v3429
    %v3494 = vadd.f32 %v2612, %v3430
    %v3495 = vadd.f32 %v2613, %v3431
    %v3496 = vadd.f32 %v2614, %v3432
    %v3497 = vadd.f32 %v2615, %v3433
    %v3498 = vadd.f32 %v2616, %v3434
    %v3499 = vadd.f32 %v2617, %v3435
    %v3500 = vadd.f32 %v2618, %v3436
    %v3501 = vadd.f32 %v2619, %v3437
    %v3502 = vadd.f32 %v2620, %v3438
    %v3503 = vadd.f32 %v2621, %v3439
    %v3504 = vadd.f32 %v2622, %v3440
    %v3505 = vadd.f32 %v2623, %v3441
    %v3506 = vadd.f32 %v2624, %v3442
    %v3507 = vadd.f32 %v2625, %v3443
    %v3508 = vadd.f32 %v2626, %v3444
    %v3509 = vadd.f32 %v2627, %v3445
    %v3510 = vadd.f32 %v2628, %v3446
    %v3511 = vadd.f32 %v2629, %v3447
    %v3512 = vadd.f32 %v2630, %v3448
    %v3513 = vadd.f32 %v2631, %v3449
    %v3514 = vadd.f32 %v2632, %v3450
    %v3515 = vadd.f32 %v2633, %v3451
    %v3516 = vadd.f32 %v2634, %v3452
    %v3517 = vadd.f32 %v2635, %v3453
    %v3518 = vadd.f32 %v2636, %v3454
    %v3519 = vld [vmem:[%s5] sm:$0xf]
    %v3520 = vld [vmem:[%s6] sm:$0xf]
    %3522 = vset.pattern.permute.xlu0 0
    %3523 = vperm.xlu0 %3522, %v3520
    %v3524 = vpop.permute.xlu0 %3523
    %v3527 = vsel %vm902, %v3519, 0
    %3529 = vmatprep.subr.mxu0 0.0
    %3530 = vmatpush1.msra.mxu0 0.0
    %3531 = vmatprep.subr.mxu0 0.0
    %3532 = vmatpush1.msra.mxu0 0.0
    %3533 = vmatprep.subr.mxu0 0.0
    %3534 = vmatpush1.msra.mxu0 0.0
    %3535 = vmatprep.subr.mxu0 0.0
    %3536 = vmatpush1.msra.mxu0 0.0
    %3537 = vmatprep.subr.mxu0 0.0
    %3538 = vmatpush1.msra.mxu0 0.0
    %3539 = vmatprep.subr.mxu0 0.0
    %3540 = vmatpush1.msra.mxu0 0.0
    %3541 = vmatprep.subr.mxu0 0.0
    %3542 = vmatpush1.msra.mxu0 0.0
    %3543 = vmatprep.subr.mxu0 0.0
    %3544 = vmatpush1.msra.mxu0 0.0
    %3545 = vmatprep.subr.mxu0 0.0
    %3546 = vmatpush1.msra.mxu0 0.0
    %3547 = vmatprep.subr.mxu0 0.0
    %3548 = vmatpush1.msra.mxu0 0.0
    %3549 = vmatprep.subr.mxu0 0.0
    %3550 = vmatpush1.msra.mxu0 0.0
    %3551 = vmatprep.subr.mxu0 0.0
    %3552 = vmatpush1.msra.mxu0 0.0
    %3553 = vmatprep.subr.mxu0 %v3504
    %3554 = vmatpush1.msra.mxu0 %v3503
    %3555 = vmatprep.subr.mxu0 %v3488
    %3556 = vmatpush1.msra.mxu0 %v3487
    %3557 = vmatprep.subr.mxu0 %v3472
    %3558 = vmatpush1.msra.mxu0 %v3471
    %3559 = vmatprep.subr.mxu0 %v3456
    %3560 = vmatpush1.msra.mxu0 %v3455
    %3561 = vmatprep.subr.mxu0 0.0
    %3562 = vmatpush2.msra.mxu0 0.0
    %3563 = vmatprep.subr.mxu0 0.0
    %3564 = vmatpush2.msra.mxu0 0.0
    %3565 = vmatprep.subr.mxu0 0.0
    %3566 = vmatpush2.msra.mxu0 0.0
    %3567 = vmatprep.subr.mxu0 0.0
    %3568 = vmatpush2.msra.mxu0 0.0
    %3569 = vmatprep.subr.mxu0 0.0
    %3570 = vmatpush2.msra.mxu0 0.0
    %3571 = vmatprep.subr.mxu0 0.0
    %3572 = vmatpush2.msra.mxu0 0.0
    %3573 = vmatprep.subr.mxu0 0.0
    %3574 = vmatpush2.msra.mxu0 0.0
    %3575 = vmatprep.subr.mxu0 0.0
    %3576 = vmatpush2.msra.mxu0 0.0
    %3577 = vmatprep.subr.mxu0 0.0
    %3578 = vmatpush2.msra.mxu0 0.0
    %3579 = vmatprep.subr.mxu0 0.0
    %3580 = vmatpush2.msra.mxu0 0.0
    %3581 = vmatprep.subr.mxu0 0.0
    %3582 = vmatpush2.msra.mxu0 0.0
    %3583 = vmatprep.subr.mxu0 0.0
    %3584 = vmatpush2.msra.mxu0 0.0
    %3585 = vmatprep.subr.mxu0 0.0
    %3586 = vmatpush2.msra.mxu0 0.0
    %3587 = vmatprep.subr.mxu0 0.0
    %3588 = vmatpush2.msra.mxu0 0.0
    %3589 = vmatprep.subr.mxu0 0.0
    %3590 = vmatpush2.msra.mxu0 0.0
    %3591 = vmatprep.subr.mxu0 0.0
    %3592 = vmatpush2.msra.mxu0 0.0
    %3593 = vmatprep.mubr.f32.mxu0 0.0
    %3594 = vmatmul.mubr.f32.gmra.mxu0 %v3527
    %v3595 = vpop.f32.mrf.mxu0
    %v3596 = vadd.f32 %v3524, %v3595
    %v3597 = vpop.f32.mrf.mxu0
    %v3598 = vadd.f32 %v3524, %v3597
    %3599 = vdwg.mxu0
    %3600 = vmatprep.subr.mxu0 0.0
    %3601 = vmatpush1.msra.mxu0 0.0
    %3602 = vmatprep.subr.mxu0 0.0
    %3603 = vmatpush1.msra.mxu0 0.0
    %3604 = vmatprep.subr.mxu0 0.0
    %3605 = vmatpush1.msra.mxu0 0.0
    %3606 = vmatprep.subr.mxu0 0.0
    %3607 = vmatpush1.msra.mxu0 0.0
    %3608 = vmatprep.subr.mxu0 0.0
    %3609 = vmatpush1.msra.mxu0 0.0
    %3610 = vmatprep.subr.mxu0 0.0
    %3611 = vmatpush1.msra.mxu0 0.0
    %3612 = vmatprep.subr.mxu0 0.0
    %3613 = vmatpush1.msra.mxu0 0.0
    %3614 = vmatprep.subr.mxu0 0.0
    %3615 = vmatpush1.msra.mxu0 0.0
    %3616 = vmatprep.subr.mxu0 0.0
    %3617 = vmatpush1.msra.mxu0 0.0
    %3618 = vmatprep.subr.mxu0 0.0
    %3619 = vmatpush1.msra.mxu0 0.0
    %3620 = vmatprep.subr.mxu0 0.0
    %3621 = vmatpush1.msra.mxu0 0.0
    %3622 = vmatprep.subr.mxu0 0.0
    %3623 = vmatpush1.msra.mxu0 0.0
    %3624 = vmatprep.subr.mxu0 %v3506
    %3625 = vmatpush1.msra.mxu0 %v3505
    %3626 = vmatprep.subr.mxu0 %v3490
    %3627 = vmatpush1.msra.mxu0 %v3489
    %3628 = vmatprep.subr.mxu0 %v3474
    %3629 = vmatpush1.msra.mxu0 %v3473
    %3630 = vmatprep.subr.mxu0 %v3458
    %3631 = vmatpush1.msra.mxu0 %v3457
    %3632 = vmatprep.subr.mxu0 0.0
    %3633 = vmatpush2.msra.mxu0 0.0
    %3634 = vmatprep.subr.mxu0 0.0
    %3635 = vmatpush2.msra.mxu0 0.0
    %3636 = vmatprep.subr.mxu0 0.0
    %3637 = vmatpush2.msra.mxu0 0.0
    %3638 = vmatprep.subr.mxu0 0.0
    %3639 = vmatpush2.msra.mxu0 0.0
    %3640 = vmatprep.subr.mxu0 0.0
    %3641 = vmatpush2.msra.mxu0 0.0
    %3642 = vmatprep.subr.mxu0 0.0
    %3643 = vmatpush2.msra.mxu0 0.0
    %3644 = vmatprep.subr.mxu0 0.0
    %3645 = vmatpush2.msra.mxu0 0.0
    %3646 = vmatprep.subr.mxu0 0.0
    %3647 = vmatpush2.msra.mxu0 0.0
    %3648 = vmatprep.subr.mxu0 0.0
    %3649 = vmatpush2.msra.mxu0 0.0
    %3650 = vmatprep.subr.mxu0 0.0
    %3651 = vmatpush2.msra.mxu0 0.0
    %3652 = vmatprep.subr.mxu0 0.0
    %3653 = vmatpush2.msra.mxu0 0.0
    %3654 = vmatprep.subr.mxu0 0.0
    %3655 = vmatpush2.msra.mxu0 0.0
    %3656 = vmatprep.subr.mxu0 0.0
    %3657 = vmatpush2.msra.mxu0 0.0
    %3658 = vmatprep.subr.mxu0 0.0
    %3659 = vmatpush2.msra.mxu0 0.0
    %3660 = vmatprep.subr.mxu0 0.0
    %3661 = vmatpush2.msra.mxu0 0.0
    %3662 = vmatprep.subr.mxu0 0.0
    %3663 = vmatpush2.msra.mxu0 0.0
    %3664 = vmatprep.mubr.f32.mxu0 0.0
    %3665 = vmatmul.mubr.f32.gmra.mxu0 %v3527
    %v3666 = vpop.f32.mrf.mxu0
    %v3667 = vadd.f32 %v3524, %v3666
    %v3668 = vpop.f32.mrf.mxu0
    %v3669 = vadd.f32 %v3524, %v3668
    %3670 = vdwg.mxu0
    %3671 = vmatprep.subr.mxu0 0.0
    %3672 = vmatpush1.msra.mxu0 0.0
    %3673 = vmatprep.subr.mxu0 0.0
    %3674 = vmatpush1.msra.mxu0 0.0
    %3675 = vmatprep.subr.mxu0 0.0
    %3676 = vmatpush1.msra.mxu0 0.0
    %3677 = vmatprep.subr.mxu0 0.0
    %3678 = vmatpush1.msra.mxu0 0.0
    %3679 = vmatprep.subr.mxu0 0.0
    %3680 = vmatpush1.msra.mxu0 0.0
    %3681 = vmatprep.subr.mxu0 0.0
    %3682 = vmatpush1.msra.mxu0 0.0
    %3683 = vmatprep.subr.mxu0 0.0
    %3684 = vmatpush1.msra.mxu0 0.0
    %3685 = vmatprep.subr.mxu0 0.0
    %3686 = vmatpush1.msra.mxu0 0.0
    %3687 = vmatprep.subr.mxu0 0.0
    %3688 = vmatpush1.msra.mxu0 0.0
    %3689 = vmatprep.subr.mxu0 0.0
    %3690 = vmatpush1.msra.mxu0 0.0
    %3691 = vmatprep.subr.mxu0 0.0
    %3692 = vmatpush1.msra.mxu0 0.0
    %3693 = vmatprep.subr.mxu0 0.0
    %3694 = vmatpush1.msra.mxu0 0.0
    %3695 = vmatprep.subr.mxu0 %v3508
    %3696 = vmatpush1.msra.mxu0 %v3507
    %3697 = vmatprep.subr.mxu0 %v3492
    %3698 = vmatpush1.msra.mxu0 %v3491
    %3699 = vmatprep.subr.mxu0 %v3476
    %3700 = vmatpush1.msra.mxu0 %v3475
    %3701 = vmatprep.subr.mxu0 %v3460
    %3702 = vmatpush1.msra.mxu0 %v3459
    %3703 = vmatprep.subr.mxu0 0.0
    %3704 = vmatpush2.msra.mxu0 0.0
    %3705 = vmatprep.subr.mxu0 0.0
    %3706 = vmatpush2.msra.mxu0 0.0
    %3707 = vmatprep.subr.mxu0 0.0
    %3708 = vmatpush2.msra.mxu0 0.0
    %3709 = vmatprep.subr.mxu0 0.0
    %3710 = vmatpush2.msra.mxu0 0.0
    %3711 = vmatprep.subr.mxu0 0.0
    %3712 = vmatpush2.msra.mxu0 0.0
    %3713 = vmatprep.subr.mxu0 0.0
    %3714 = vmatpush2.msra.mxu0 0.0
    %3715 = vmatprep.subr.mxu0 0.0
    %3716 = vmatpush2.msra.mxu0 0.0
    %3717 = vmatprep.subr.mxu0 0.0
    %3718 = vmatpush2.msra.mxu0 0.0
    %3719 = vmatprep.subr.mxu0 0.0
    %3720 = vmatpush2.msra.mxu0 0.0
    %3721 = vmatprep.subr.mxu0 0.0
    %3722 = vmatpush2.msra.mxu0 0.0
    %3723 = vmatprep.subr.mxu0 0.0
    %3724 = vmatpush2.msra.mxu0 0.0
    %3725 = vmatprep.subr.mxu0 0.0
    %3726 = vmatpush2.msra.mxu0 0.0
    %3727 = vmatprep.subr.mxu0 0.0
    %3728 = vmatpush2.msra.mxu0 0.0
    %3729 = vmatprep.subr.mxu0 0.0
    %3730 = vmatpush2.msra.mxu0 0.0
    %3731 = vmatprep.subr.mxu0 0.0
    %3732 = vmatpush2.msra.mxu0 0.0
    %3733 = vmatprep.subr.mxu0 0.0
    %3734 = vmatpush2.msra.mxu0 0.0
    %3735 = vmatprep.mubr.f32.mxu0 0.0
    %3736 = vmatmul.mubr.f32.gmra.mxu0 %v3527
    %v3737 = vpop.f32.mrf.mxu0
    %v3738 = vadd.f32 %v3524, %v3737
    %v3739 = vpop.f32.mrf.mxu0
    %v3740 = vadd.f32 %v3524, %v3739
    %3741 = vdwg.mxu0
    %3742 = vmatprep.subr.mxu0 0.0
    %3743 = vmatpush1.msra.mxu0 0.0
    %3744 = vmatprep.subr.mxu0 0.0
    %3745 = vmatpush1.msra.mxu0 0.0
    %3746 = vmatprep.subr.mxu0 0.0
    %3747 = vmatpush1.msra.mxu0 0.0
    %3748 = vmatprep.subr.mxu0 0.0
    %3749 = vmatpush1.msra.mxu0 0.0
    %3750 = vmatprep.subr.mxu0 0.0
    %3751 = vmatpush1.msra.mxu0 0.0
    %3752 = vmatprep.subr.mxu0 0.0
    %3753 = vmatpush1.msra.mxu0 0.0
    %3754 = vmatprep.subr.mxu0 0.0
    %3755 = vmatpush1.msra.mxu0 0.0
    %3756 = vmatprep.subr.mxu0 0.0
    %3757 = vmatpush1.msra.mxu0 0.0
    %3758 = vmatprep.subr.mxu0 0.0
    %3759 = vmatpush1.msra.mxu0 0.0
    %3760 = vmatprep.subr.mxu0 0.0
    %3761 = vmatpush1.msra.mxu0 0.0
    %3762 = vmatprep.subr.mxu0 0.0
    %3763 = vmatpush1.msra.mxu0 0.0
    %3764 = vmatprep.subr.mxu0 0.0
    %3765 = vmatpush1.msra.mxu0 0.0
    %3766 = vmatprep.subr.mxu0 %v3510
    %3767 = vmatpush1.msra.mxu0 %v3509
    %3768 = vmatprep.subr.mxu0 %v3494
    %3769 = vmatpush1.msra.mxu0 %v3493
    %3770 = vmatprep.subr.mxu0 %v3478
    %3771 = vmatpush1.msra.mxu0 %v3477
    %3772 = vmatprep.subr.mxu0 %v3462
    %3773 = vmatpush1.msra.mxu0 %v3461
    %3774 = vmatprep.subr.mxu0 0.0
    %3775 = vmatpush2.msra.mxu0 0.0
    %3776 = vmatprep.subr.mxu0 0.0
    %3777 = vmatpush2.msra.mxu0 0.0
    %3778 = vmatprep.subr.mxu0 0.0
    %3779 = vmatpush2.msra.mxu0 0.0
    %3780 = vmatprep.subr.mxu0 0.0
    %3781 = vmatpush2.msra.mxu0 0.0
    %3782 = vmatprep.subr.mxu0 0.0
    %3783 = vmatpush2.msra.mxu0 0.0
    %3784 = vmatprep.subr.mxu0 0.0
    %3785 = vmatpush2.msra.mxu0 0.0
    %3786 = vmatprep.subr.mxu0 0.0
    %3787 = vmatpush2.msra.mxu0 0.0
    %3788 = vmatprep.subr.mxu0 0.0
    %3789 = vmatpush2.msra.mxu0 0.0
    %3790 = vmatprep.subr.mxu0 0.0
    %3791 = vmatpush2.msra.mxu0 0.0
    %3792 = vmatprep.subr.mxu0 0.0
    %3793 = vmatpush2.msra.mxu0 0.0
    %3794 = vmatprep.subr.mxu0 0.0
    %3795 = vmatpush2.msra.mxu0 0.0
    %3796 = vmatprep.subr.mxu0 0.0
    %3797 = vmatpush2.msra.mxu0 0.0
    %3798 = vmatprep.subr.mxu0 0.0
    %3799 = vmatpush2.msra.mxu0 0.0
    %3800 = vmatprep.subr.mxu0 0.0
    %3801 = vmatpush2.msra.mxu0 0.0
    %3802 = vmatprep.subr.mxu0 0.0
    %3803 = vmatpush2.msra.mxu0 0.0
    %3804 = vmatprep.subr.mxu0 0.0
    %3805 = vmatpush2.msra.mxu0 0.0
    %3806 = vmatprep.mubr.f32.mxu0 0.0
    %3807 = vmatmul.mubr.f32.gmra.mxu0 %v3527
    %v3808 = vpop.f32.mrf.mxu0
    %v3809 = vadd.f32 %v3524, %v3808
    %v3810 = vpop.f32.mrf.mxu0
    %v3811 = vadd.f32 %v3524, %v3810
    %3812 = vdwg.mxu0
    %3813 = vmatprep.subr.mxu0 0.0
    %3814 = vmatpush1.msra.mxu0 0.0
    %3815 = vmatprep.subr.mxu0 0.0
    %3816 = vmatpush1.msra.mxu0 0.0
    %3817 = vmatprep.subr.mxu0 0.0
    %3818 = vmatpush1.msra.mxu0 0.0
    %3819 = vmatprep.subr.mxu0 0.0
    %3820 = vmatpush1.msra.mxu0 0.0
    %3821 = vmatprep.subr.mxu0 0.0
    %3822 = vmatpush1.msra.mxu0 0.0
    %3823 = vmatprep.subr.mxu0 0.0
    %3824 = vmatpush1.msra.mxu0 0.0
    %3825 = vmatprep.subr.mxu0 0.0
    %3826 = vmatpush1.msra.mxu0 0.0
    %3827 = vmatprep.subr.mxu0 0.0
    %3828 = vmatpush1.msra.mxu0 0.0
    %3829 = vmatprep.subr.mxu0 0.0
    %3830 = vmatpush1.msra.mxu0 0.0
    %3831 = vmatprep.subr.mxu0 0.0
    %3832 = vmatpush1.msra.mxu0 0.0
    %3833 = vmatprep.subr.mxu0 0.0
    %3834 = vmatpush1.msra.mxu0 0.0
    %3835 = vmatprep.subr.mxu0 0.0
    %3836 = vmatpush1.msra.mxu0 0.0
    %3837 = vmatprep.subr.mxu0 %v3512
    %3838 = vmatpush1.msra.mxu0 %v3511
    %3839 = vmatprep.subr.mxu0 %v3496
    %3840 = vmatpush1.msra.mxu0 %v3495
    %3841 = vmatprep.subr.mxu0 %v3480
    %3842 = vmatpush1.msra.mxu0 %v3479
    %3843 = vmatprep.subr.mxu0 %v3464
    %3844 = vmatpush1.msra.mxu0 %v3463
    %3845 = vmatprep.subr.mxu0 0.0
    %3846 = vmatpush2.msra.mxu0 0.0
    %3847 = vmatprep.subr.mxu0 0.0
    %3848 = vmatpush2.msra.mxu0 0.0
    %3849 = vmatprep.subr.mxu0 0.0
    %3850 = vmatpush2.msra.mxu0 0.0
    %3851 = vmatprep.subr.mxu0 0.0
    %3852 = vmatpush2.msra.mxu0 0.0
    %3853 = vmatprep.subr.mxu0 0.0
    %3854 = vmatpush2.msra.mxu0 0.0
    %3855 = vmatprep.subr.mxu0 0.0
    %3856 = vmatpush2.msra.mxu0 0.0
    %3857 = vmatprep.subr.mxu0 0.0
    %3858 = vmatpush2.msra.mxu0 0.0
    %3859 = vmatprep.subr.mxu0 0.0
    %3860 = vmatpush2.msra.mxu0 0.0
    %3861 = vmatprep.subr.mxu0 0.0
    %3862 = vmatpush2.msra.mxu0 0.0
    %3863 = vmatprep.subr.mxu0 0.0
    %3864 = vmatpush2.msra.mxu0 0.0
    %3865 = vmatprep.subr.mxu0 0.0
    %3866 = vmatpush2.msra.mxu0 0.0
    %3867 = vmatprep.subr.mxu0 0.0
    %3868 = vmatpush2.msra.mxu0 0.0
    %3869 = vmatprep.subr.mxu0 0.0
    %3870 = vmatpush2.msra.mxu0 0.0
    %3871 = vmatprep.subr.mxu0 0.0
    %3872 = vmatpush2.msra.mxu0 0.0
    %3873 = vmatprep.subr.mxu0 0.0
    %3874 = vmatpush2.msra.mxu0 0.0
    %3875 = vmatprep.subr.mxu0 0.0
    %3876 = vmatpush2.msra.mxu0 0.0
    %3877 = vmatprep.mubr.f32.mxu0 0.0
    %3878 = vmatmul.mubr.f32.gmra.mxu0 %v3527
    %v3879 = vpop.f32.mrf.mxu0
    %v3880 = vadd.f32 %v3524, %v3879
    %v3881 = vpop.f32.mrf.mxu0
    %v3882 = vadd.f32 %v3524, %v3881
    %3883 = vdwg.mxu0
    %3884 = vmatprep.subr.mxu0 0.0
    %3885 = vmatpush1.msra.mxu0 0.0
    %3886 = vmatprep.subr.mxu0 0.0
    %3887 = vmatpush1.msra.mxu0 0.0
    %3888 = vmatprep.subr.mxu0 0.0
    %3889 = vmatpush1.msra.mxu0 0.0
    %3890 = vmatprep.subr.mxu0 0.0
    %3891 = vmatpush1.msra.mxu0 0.0
    %3892 = vmatprep.subr.mxu0 0.0
    %3893 = vmatpush1.msra.mxu0 0.0
    %3894 = vmatprep.subr.mxu0 0.0
    %3895 = vmatpush1.msra.mxu0 0.0
    %3896 = vmatprep.subr.mxu0 0.0
    %3897 = vmatpush1.msra.mxu0 0.0
    %3898 = vmatprep.subr.mxu0 0.0
    %3899 = vmatpush1.msra.mxu0 0.0
    %3900 = vmatprep.subr.mxu0 0.0
    %3901 = vmatpush1.msra.mxu0 0.0
    %3902 = vmatprep.subr.mxu0 0.0
    %3903 = vmatpush1.msra.mxu0 0.0
    %3904 = vmatprep.subr.mxu0 0.0
    %3905 = vmatpush1.msra.mxu0 0.0
    %3906 = vmatprep.subr.mxu0 0.0
    %3907 = vmatpush1.msra.mxu0 0.0
    %3908 = vmatprep.subr.mxu0 %v3514
    %3909 = vmatpush1.msra.mxu0 %v3513
    %3910 = vmatprep.subr.mxu0 %v3498
    %3911 = vmatpush1.msra.mxu0 %v3497
    %3912 = vmatprep.subr.mxu0 %v3482
    %3913 = vmatpush1.msra.mxu0 %v3481
    %3914 = vmatprep.subr.mxu0 %v3466
    %3915 = vmatpush1.msra.mxu0 %v3465
    %3916 = vmatprep.subr.mxu0 0.0
    %3917 = vmatpush2.msra.mxu0 0.0
    %3918 = vmatprep.subr.mxu0 0.0
    %3919 = vmatpush2.msra.mxu0 0.0
    %3920 = vmatprep.subr.mxu0 0.0
    %3921 = vmatpush2.msra.mxu0 0.0
    %3922 = vmatprep.subr.mxu0 0.0
    %3923 = vmatpush2.msra.mxu0 0.0
    %3924 = vmatprep.subr.mxu0 0.0
    %3925 = vmatpush2.msra.mxu0 0.0
    %3926 = vmatprep.subr.mxu0 0.0
    %3927 = vmatpush2.msra.mxu0 0.0
    %3928 = vmatprep.subr.mxu0 0.0
    %3929 = vmatpush2.msra.mxu0 0.0
    %3930 = vmatprep.subr.mxu0 0.0
    %3931 = vmatpush2.msra.mxu0 0.0
    %3932 = vmatprep.subr.mxu0 0.0
    %3933 = vmatpush2.msra.mxu0 0.0
    %3934 = vmatprep.subr.mxu0 0.0
    %3935 = vmatpush2.msra.mxu0 0.0
    %3936 = vmatprep.subr.mxu0 0.0
    %3937 = vmatpush2.msra.mxu0 0.0
    %3938 = vmatprep.subr.mxu0 0.0
    %3939 = vmatpush2.msra.mxu0 0.0
    %3940 = vmatprep.subr.mxu0 0.0
    %3941 = vmatpush2.msra.mxu0 0.0
    %3942 = vmatprep.subr.mxu0 0.0
    %3943 = vmatpush2.msra.mxu0 0.0
    %3944 = vmatprep.subr.mxu0 0.0
    %3945 = vmatpush2.msra.mxu0 0.0
    %3946 = vmatprep.subr.mxu0 0.0
    %3947 = vmatpush2.msra.mxu0 0.0
    %3948 = vmatprep.mubr.f32.mxu0 0.0
    %3949 = vmatmul.mubr.f32.gmra.mxu0 %v3527
    %v3950 = vpop.f32.mrf.mxu0
    %v3951 = vadd.f32 %v3524, %v3950
    %v3952 = vpop.f32.mrf.mxu0
    %v3953 = vadd.f32 %v3524, %v3952
    %3954 = vdwg.mxu0
    %3955 = vmatprep.subr.mxu0 0.0
    %3956 = vmatpush1.msra.mxu0 0.0
    %3957 = vmatprep.subr.mxu0 0.0
    %3958 = vmatpush1.msra.mxu0 0.0
    %3959 = vmatprep.subr.mxu0 0.0
    %3960 = vmatpush1.msra.mxu0 0.0
    %3961 = vmatprep.subr.mxu0 0.0
    %3962 = vmatpush1.msra.mxu0 0.0
    %3963 = vmatprep.subr.mxu0 0.0
    %3964 = vmatpush1.msra.mxu0 0.0
    %3965 = vmatprep.subr.mxu0 0.0
    %3966 = vmatpush1.msra.mxu0 0.0
    %3967 = vmatprep.subr.mxu0 0.0
    %3968 = vmatpush1.msra.mxu0 0.0
    %3969 = vmatprep.subr.mxu0 0.0
    %3970 = vmatpush1.msra.mxu0 0.0
    %3971 = vmatprep.subr.mxu0 0.0
    %3972 = vmatpush1.msra.mxu0 0.0
    %3973 = vmatprep.subr.mxu0 0.0
    %3974 = vmatpush1.msra.mxu0 0.0
    %3975 = vmatprep.subr.mxu0 0.0
    %3976 = vmatpush1.msra.mxu0 0.0
    %3977 = vmatprep.subr.mxu0 0.0
    %3978 = vmatpush1.msra.mxu0 0.0
    %3979 = vmatprep.subr.mxu0 %v3516
    %3980 = vmatpush1.msra.mxu0 %v3515
    %3981 = vmatprep.subr.mxu0 %v3500
    %3982 = vmatpush1.msra.mxu0 %v3499
    %3983 = vmatprep.subr.mxu0 %v3484
    %3984 = vmatpush1.msra.mxu0 %v3483
    %3985 = vmatprep.subr.mxu0 %v3468
    %3986 = vmatpush1.msra.mxu0 %v3467
    %3987 = vmatprep.subr.mxu0 0.0
    %3988 = vmatpush2.msra.mxu0 0.0
    %3989 = vmatprep.subr.mxu0 0.0
    %3990 = vmatpush2.msra.mxu0 0.0
    %3991 = vmatprep.subr.mxu0 0.0
    %3992 = vmatpush2.msra.mxu0 0.0
    %3993 = vmatprep.subr.mxu0 0.0
    %3994 = vmatpush2.msra.mxu0 0.0
    %3995 = vmatprep.subr.mxu0 0.0
    %3996 = vmatpush2.msra.mxu0 0.0
    %3997 = vmatprep.subr.mxu0 0.0
    %3998 = vmatpush2.msra.mxu0 0.0
    %3999 = vmatprep.subr.mxu0 0.0
    %4000 = vmatpush2.msra.mxu0 0.0
    %4001 = vmatprep.subr.mxu0 0.0
    %4002 = vmatpush2.msra.mxu0 0.0
    %4003 = vmatprep.subr.mxu0 0.0
    %4004 = vmatpush2.msra.mxu0 0.0
    %4005 = vmatprep.subr.mxu0 0.0
    %4006 = vmatpush2.msra.mxu0 0.0
    %4007 = vmatprep.subr.mxu0 0.0
    %4008 = vmatpush2.msra.mxu0 0.0
    %4009 = vmatprep.subr.mxu0 0.0
    %4010 = vmatpush2.msra.mxu0 0.0
    %4011 = vmatprep.subr.mxu0 0.0
    %4012 = vmatpush2.msra.mxu0 0.0
    %4013 = vmatprep.subr.mxu0 0.0
    %4014 = vmatpush2.msra.mxu0 0.0
    %4015 = vmatprep.subr.mxu0 0.0
    %4016 = vmatpush2.msra.mxu0 0.0
    %4017 = vmatprep.subr.mxu0 0.0
    %4018 = vmatpush2.msra.mxu0 0.0
    %4019 = vmatprep.mubr.f32.mxu0 0.0
    %4020 = vmatmul.mubr.f32.gmra.mxu0 %v3527
    %v4021 = vpop.f32.mrf.mxu0
    %v4022 = vadd.f32 %v3524, %v4021
    %v4023 = vpop.f32.mrf.mxu0
    %v4024 = vadd.f32 %v3524, %v4023
    %4025 = vdwg.mxu0
    %4026 = vmatprep.subr.mxu0 0.0
    %4027 = vmatpush1.msra.mxu0 0.0
    %4028 = vmatprep.subr.mxu0 0.0
    %4029 = vmatpush1.msra.mxu0 0.0
    %4030 = vmatprep.subr.mxu0 0.0
    %4031 = vmatpush1.msra.mxu0 0.0
    %4032 = vmatprep.subr.mxu0 0.0
    %4033 = vmatpush1.msra.mxu0 0.0
    %4034 = vmatprep.subr.mxu0 0.0
    %4035 = vmatpush1.msra.mxu0 0.0
    %4036 = vmatprep.subr.mxu0 0.0
    %4037 = vmatpush1.msra.mxu0 0.0
    %4038 = vmatprep.subr.mxu0 0.0
    %4039 = vmatpush1.msra.mxu0 0.0
    %4040 = vmatprep.subr.mxu0 0.0
    %4041 = vmatpush1.msra.mxu0 0.0
    %4042 = vmatprep.subr.mxu0 0.0
    %4043 = vmatpush1.msra.mxu0 0.0
    %4044 = vmatprep.subr.mxu0 0.0
    %4045 = vmatpush1.msra.mxu0 0.0
    %4046 = vmatprep.subr.mxu0 0.0
    %4047 = vmatpush1.msra.mxu0 0.0
    %4048 = vmatprep.subr.mxu0 0.0
    %4049 = vmatpush1.msra.mxu0 0.0
    %4050 = vmatprep.subr.mxu0 %v3518
    %4051 = vmatpush1.msra.mxu0 %v3517
    %4052 = vmatprep.subr.mxu0 %v3502
    %4053 = vmatpush1.msra.mxu0 %v3501
    %4054 = vmatprep.subr.mxu0 %v3486
    %4055 = vmatpush1.msra.mxu0 %v3485
    %4056 = vmatprep.subr.mxu0 %v3470
    %4057 = vmatpush1.msra.mxu0 %v3469
    %4058 = vmatprep.subr.mxu0 0.0
    %4059 = vmatpush2.msra.mxu0 0.0
    %4060 = vmatprep.subr.mxu0 0.0
    %4061 = vmatpush2.msra.mxu0 0.0
    %4062 = vmatprep.subr.mxu0 0.0
    %4063 = vmatpush2.msra.mxu0 0.0
    %4064 = vmatprep.subr.mxu0 0.0
    %4065 = vmatpush2.msra.mxu0 0.0
    %4066 = vmatprep.subr.mxu0 0.0
    %4067 = vmatpush2.msra.mxu0 0.0
    %4068 = vmatprep.subr.mxu0 0.0
    %4069 = vmatpush2.msra.mxu0 0.0
    %4070 = vmatprep.subr.mxu0 0.0
    %4071 = vmatpush2.msra.mxu0 0.0
    %4072 = vmatprep.subr.mxu0 0.0
    %4073 = vmatpush2.msra.mxu0 0.0
    %4074 = vmatprep.subr.mxu0 0.0
    %4075 = vmatpush2.msra.mxu0 0.0
    %4076 = vmatprep.subr.mxu0 0.0
    %4077 = vmatpush2.msra.mxu0 0.0
    %4078 = vmatprep.subr.mxu0 0.0
    %4079 = vmatpush2.msra.mxu0 0.0
    %4080 = vmatprep.subr.mxu0 0.0
    %4081 = vmatpush2.msra.mxu0 0.0
    %4082 = vmatprep.subr.mxu0 0.0
    %4083 = vmatpush2.msra.mxu0 0.0
    %4084 = vmatprep.subr.mxu0 0.0
    %4085 = vmatpush2.msra.mxu0 0.0
    %4086 = vmatprep.subr.mxu0 0.0
    %4087 = vmatpush2.msra.mxu0 0.0
    %4088 = vmatprep.subr.mxu0 0.0
    %4089 = vmatpush2.msra.mxu0 0.0
    %4090 = vmatprep.mubr.f32.mxu0 0.0
    %4091 = vmatmul.mubr.f32.gmra.mxu0 %v3527
    %v4092 = vpop.f32.mrf.mxu0
    %v4093 = vadd.f32 %v3524, %v4092
    %v4094 = vpop.f32.mrf.mxu0
    %v4095 = vadd.f32 %v3524, %v4094
    %4096 = vdwg.mxu0
    %v4113 = vcombine.low %v3596, %v3598
    %v4114 = vcombine.low %v3667, %v3669
    %v4115 = vcombine.low %v3738, %v3740
    %v4116 = vcombine.low %v3809, %v3811
    %v4117 = vcombine.low %v3880, %v3882
    %v4118 = vcombine.low %v3951, %v3953
    %v4119 = vcombine.low %v4022, %v4024
    %v4120 = vcombine.low %v4093, %v4095
    %4129 = vst [vmem:[#allocation5] sm:$0xff] %v4113
    %4130 = vst [vmem:[#allocation5 + $0x8] sm:$0xff] %v4114
    %4131 = vst [vmem:[#allocation5 + $0x10] sm:$0xff] %v4115
    %4132 = vst [vmem:[#allocation5 + $0x18] sm:$0xff] %v4116
    %4133 = vst [vmem:[#allocation5 + $0x20] sm:$0xff] %v4117
    %4134 = vst [vmem:[#allocation5 + $0x28] sm:$0xff] %v4118
    %4135 = vst [vmem:[#allocation5 + $0x30] sm:$0xff] %v4119
    %4136 = vst [vmem:[#allocation5 + $0x38] sm:$0xff] %v4120
    // Predicated region
    $region34: #{tpu_custom_call.1} parent=1 // pred_check
      _
    $region35: #{tpu_custom_call.1} parent=1 // pred_check_branch
      %4138 = sbr.rel (0) target = $region37
    $region36: #{tpu_custom_call.1} parent=1 // pred_region
      %s4140 = ssub.s32 1024, 1024
      %4141 = vsyncadd [#allocation4], %s4140
      %s4143 = sshll.u32 [#allocation5], 4
      %s4144 = int_to_ptr.vmem [resolvable:$true] %s4143
      %4146 = dma.vmem_to_hbm [thread:$0]  %s4144, 1024, %s7, [#allocation4]
    $region37: #{tpu_custom_call.1} parent=1 // pred_fallthru
      _
    // Predicated region
    $region38: #{tpu_custom_call.1} parent=1 // pred_check
      _
    $region39: #{tpu_custom_call.1} parent=1 // pred_check_branch
      %4148 = sbr.rel (0) target = $region41
    $region40: #{tpu_custom_call.1} parent=1 // pred_region
      %4149 = dma.done [#allocation4], 1024
    $region41: #{tpu_custom_call.1} parent=1 // pred_fallthru
      _
    %4150 = vsyncpa [#allocation3], 1
    %4151 = vsyncpa [#allocation4], 1

</llo_original>
